<compile_context>
chip_gen: v6e
topology: v6e:2x2x1
jax: 0.10.0
libtpu: 0.0.40
codegen_flags: <defaults>
</compile_context>

<pallas_src>
import functools

import jax
import jax.numpy as jnp
from jax.experimental import pallas as pl
from jax.experimental.pallas import tpu as pltpu


def _round_up(x, m):
    return (x + m - 1) // m * m


def _device_caps():
    """Per-generation tuning knobs (conservative if the chip is unknown)."""
    try:
        kind = jax.devices()[0].device_kind.lower()
    except Exception:
        kind = ""
    if "v7" in kind:
        # 64 MiB physical VMEM per TensorCore, 2 TCs/chip: small explicit
        # budget so Mosaic internal scratch (matmul intermediates, casts)
        # keeps headroom; small resident-weight threshold.
        return dict(is_v7x=True, vmem_limit=32 << 20, resident_limit=8 << 20)
    if "v4" in kind or "v5" in kind or "v6" in kind:
        # 128 MiB physical VMEM generations.
        return dict(is_v7x=False, vmem_limit=64 << 20, resident_limit=16 << 20)
    # Unknown chip: be conservative.
    return dict(is_v7x=False, vmem_limit=32 << 20, resident_limit=8 << 20)


# ----------------------------------------------------------------------------
# Kernels
# ----------------------------------------------------------------------------
def _ffn_resident_kernel(x_ref, w1_ref, b1_ref, w2_ref, b2_ref, o_ref,
                         *, tile_h, n_h, compute_dtype):
    """Weights fully VMEM-resident (constant index_map -> one HBM pass).

    Loops over static hidden chunks so the activated intermediate is only
    (tile_m, tile_h).  The first chunk's partial product seeds the
    accumulator directly -- no zero-init pass, no scratch buffer.
    """
    x = x_ref[...]
    acc = None
    for k in range(n_h):
        sl = slice(k * tile_h, (k + 1) * tile_h)      # static, aligned slice
        h = jnp.dot(x, w1_ref[:, sl], preferred_element_type=jnp.float32)
        h = jnp.maximum(h + b1_ref[:, sl], 0.0)       # bias + ReLU (f32 VPU)
        p = jnp.dot(h.astype(compute_dtype), w2_ref[sl, :],
                    preferred_element_type=jnp.float32)
        acc = p if acc is None else acc + p
    # Dropout(p=0.2) in eval mode == identity.
    o_ref[...] = (acc + b2_ref[...]).astype(o_ref.dtype)


def _ffn_stream_kernel_acc(x_ref, w1_ref, b1_ref, w2_ref, b2_ref, o_ref,
                           acc_ref):
    """Streaming weights, generic output dtype, f32 accumulator scratch."""
    k = pl.program_id(1)
    h = jnp.dot(x_ref[...], w1_ref[...], preferred_element_type=jnp.float32)
    h = jnp.maximum(h + b1_ref[...], 0.0)
    p = jnp.dot(h.astype(w2_ref.dtype), w2_ref[...],
                preferred_element_type=jnp.float32)

    @pl.when(k == 0)
    def _seed():
        acc_ref[...] = p            # write-through: no zero-init + "+=" pass

    @pl.when(k > 0)
    def _accum():
        acc_ref[...] += p

    @pl.when(k == pl.num_programs(1) - 1)
    def _finalize():
        o_ref[...] = (acc_ref[...] + b2_ref[...]).astype(o_ref.dtype)


def _ffn_stream_kernel_f32(x_ref, w1_ref, b1_ref, w2_ref, b2_ref, o_ref):
    """Streaming weights, float32 output: accumulate into the resident output
    block (constant block index across k) -- no scratch, no finalize copy."""
    k = pl.program_id(1)
    h = jnp.dot(x_ref[...], w1_ref[...], preferred_element_type=jnp.float32)
    h = jnp.maximum(h + b1_ref[...], 0.0)
    p = jnp.dot(h.astype(w2_ref.dtype), w2_ref[...],
                preferred_element_type=jnp.float32)

    @pl.when(k == 0)
    def _seed():
        o_ref[...] = p + b2_ref[...]

    @pl.when(k > 0)
    def _accum():
        o_ref[...] += p


# ----------------------------------------------------------------------------
# Wrapper
# ----------------------------------------------------------------------------
def make_feed_forward(w1, b1, w2, b2, *, tile_m=None, tile_h=None,
                      compute_dtype=jnp.bfloat16):
    """Prepare weights once (cast + pad, hoisted out of the per-call path) and
    return an `apply(x)` callable implementing
    Linear(D->H) -> ReLU -> Linear(H->D) -> Dropout(eval).

    w1: [D, H], b1: [H], w2: [H, D], b2: [D].
    """
    D, H = w1.shape
    caps = _device_caps()

    # Hidden chunks: 256-aligned (fills the 256-wide MXU on v6e/v7x, multiple
    # of 128 for v5e's 4x128^2 MXU).
    if tile_h is None:
        tile_h = min(512, _round_up(H, 256))
    H_pad = _round_up(H, tile_h)
    n_h = H_pad // tile_h

    # One-time weight preparation (cast to MXU dtype + zero-pad hidden dim).
    w1c = jnp.pad(w1.astype(compute_dtype), ((0, 0), (0, H_pad - H)))
    w2c = jnp.pad(w2.astype(compute_dtype), ((0, H_pad - H), (0, 0)))
    b1f = jnp.pad(b1.astype(jnp.float32), ((0, H_pad - H),)).reshape(1, H_pad)
    b2f = b2.astype(jnp.float32).reshape(1, D)

    itm = jnp.dtype(compute_dtype).itemsize
    weight_bytes = (w1c.size + w2c.size) * itm
    # Resident-weight fast path whenever both (double-buffered) weight
    # allocations comfortably fit the per-generation VMEM budget.
    resident = weight_bytes <= caps["resident_limit"]

    def apply(x):
        B, S, Dx = x.shape
        assert Dx == D, f"expected last dim {D}, got {Dx}"
        M = B * S
        out_dtype = x.dtype

        # ---- row tile selection (per generation) --------------------------
        tm = tile_m
        if tm is None:
            if resident:
                tm = min(512, _round_up(M, 16))
            else:
                # Streaming weights: tile_m sets arithmetic intensity on the
                # weight stream (~tile_m FLOP/byte).  v6e's roofline knee is
                # ~650 FLOP/B -> use 1024; v5e/v7x are compute-bound at 512.
                tm = min(512 if caps["is_v7x"] else 1024, _round_up(M, 16))
            if caps["is_v7x"] and M >= 256:
                # Guarantee >=2 "parallel" row steps so both TensorCores work.
                tm = min(tm, max(128, _round_up(-(-M // 2), 16)))
        M_pad = _round_up(M, tm)
        n_rows = M_pad // tm

        x2 = x.reshape(M, D).astype(compute_dtype)
        if M_pad != M:
            x2 = jnp.pad(x2, ((0, M_pad - M), (0, 0)))

        # Advisory cost estimate: weight traffic = one pass if resident,
        # one pass per row tile if streamed.
        weight_passes = 1 if resident else n_rows
        cost = pl.CostEstimate(
            flops=4 * M_pad * D * H_pad,
            transcendentals=0,
            bytes_accessed=(M_pad * D * itm                                  # x
                            + M_pad * D * jnp.dtype(out_dtype).itemsize      # out
                            + weight_passes * 2 * D * H_pad * itm            # W1+W2
                            + (H_pad + D) * 4),                              # biases
        )

        if resident:
            kern = functools.partial(_ffn_resident_kernel, tile_h=tile_h,
                                     n_h=n_h, compute_dtype=compute_dtype)
            out = pl.pallas_call(
                kern,
                out_shape=jax.ShapeDtypeStruct((M_pad, D), out_dtype),
                grid_spec=pltpu.PrefetchScalarGridSpec(
                    num_scalar_prefetch=0,
                    grid=(n_rows,),
                    in_specs=[
                        pl.BlockSpec((tm, D), lambda i: (i, 0)),      # x tile
                        pl.BlockSpec((D, H_pad), lambda i: (0, 0)),   # W1 resident
                        pl.BlockSpec((1, H_pad), lambda i: (0, 0)),   # b1 resident
                        pl.BlockSpec((H_pad, D), lambda i: (0, 0)),   # W2 resident
                        pl.BlockSpec((1, D), lambda i: (0, 0)),       # b2 resident
                    ],
                    out_specs=pl.BlockSpec((tm, D), lambda i: (i, 0)),
                ),
                compiler_params=pltpu.CompilerParams(
                    dimension_semantics=("parallel",),
                    vmem_limit_bytes=caps["vmem_limit"],
                ),
                cost_estimate=cost,
            )(x2, w1c, b1f, w2c, b2f)
        else:
            if jnp.dtype(out_dtype) == jnp.dtype(jnp.float32):
                kern = _ffn_stream_kernel_f32
                scratch = []
            else:
                kern = _ffn_stream_kernel_acc
                scratch = [pltpu.VMEM((tm, D), jnp.float32)]
            out = pl.pallas_call(
                kern,
                out_shape=jax.ShapeDtypeStruct((M_pad, D), out_dtype),
                grid_spec=pltpu.PrefetchScalarGridSpec(
                    num_scalar_prefetch=0,
                    grid=(n_rows, n_h),
                    in_specs=[
                        pl.BlockSpec((tm, D), lambda i, k: (i, 0)),       # x tile
                        pl.BlockSpec((D, tile_h), lambda i, k: (0, k)),   # W1 chunk
                        pl.BlockSpec((1, tile_h), lambda i, k: (0, k)),   # b1 chunk
                        pl.BlockSpec((tile_h, D), lambda i, k: (k, 0)),   # W2 chunk
                        pl.BlockSpec((1, D), lambda i, k: (0, 0)),        # b2
                    ],
                    out_specs=pl.BlockSpec((tm, D), lambda i, k: (i, 0)),
                    scratch_shapes=scratch,
                ),
                compiler_params=pltpu.CompilerParams(
                    dimension_semantics=("parallel", "arbitrary"),
                    vmem_limit_bytes=caps["vmem_limit"],
                ),
                cost_estimate=cost,
            )(x2, w1c, b1f, w2c, b2f)

        return out[:M].reshape(B, S, D)

    return apply


def feed_forward(x, w1, b1, w2, b2, **kwargs):
    """One-shot convenience wrapper (prefer make_feed_forward to hoist the
    per-call weight cast/pad when calling repeatedly)."""
    return make_feed_forward(w1, b1, w2, b2, **kwargs)(x)


def feed_forward_ref(x, w1, b1, w2, b2):
    h = jnp.maximum(x @ w1 + b1, 0.0)
    return h @ w2 + b2


if __name__ == "__main__":
    # Shapes consistent with the module: n_embd=384, hidden=4*384=1536.
    B, S, D = 2, 8, 384
    H = 4 * D

    key = jax.random.PRNGKey(0)
    kx, k1, k2, k3, k4 = jax.random.split(key, 5)

    x = jax.random.normal(kx, (B, S, D), dtype=jnp.float32)

    # Deterministic PyTorch-style init: U(-1/sqrt(fan_in), 1/sqrt(fan_in)).
    bound1 = 1.0 / jnp.sqrt(jnp.float32(D))
    w1 = jax.random.uniform(k1, (D, H), jnp.float32, -bound1, bound1)
    b1 = jax.random.uniform(k2, (H,), jnp.float32, -bound1, bound1)
    bound2 = 1.0 / jnp.sqrt(jnp.float32(H))
    w2 = jax.random.uniform(k3, (H, D), jnp.float32, -bound2, bound2)
    b2 = jax.random.uniform(k4, (D,), jnp.float32, -bound2, bound2)

    # Prepare weights once (cast/pad hoisted out of the per-call path).
    ffn = make_feed_forward(w1, b1, w2, b2)

    out = ffn(x)
    out = jax.block_until_ready(out)

    ref = feed_forward_ref(x, w1, b1, w2, b2)
    assert out.shape == (B, S, D)
    # bf16 MXU inputs with f32 accumulation: ~1e-2-level agreement vs f32 ref.
    assert jnp.allclose(out, ref, atol=2e-2, rtol=2e-2), "mismatch vs reference"

    print("KERNEL_OK")
</pallas_src>

<mosaic_0001>
module attributes {stable_mosaic.version = 11 : i64} {
  func.func @_ffn_resident_kernel(%arg0: i32, %arg1: memref<16x384xbf16, #tpu.memory_space<vmem>>, %arg2: memref<384x1536xbf16, #tpu.memory_space<vmem>>, %arg3: memref<1x1536xf32, #tpu.memory_space<vmem>>, %arg4: memref<1536x384xbf16, #tpu.memory_space<vmem>>, %arg5: memref<1x384xf32, #tpu.memory_space<vmem>>, %arg6: memref<16x384xf32, #tpu.memory_space<vmem>>) attributes {dimension_semantics = [#tpu.dimension_semantics<parallel>], iteration_bounds = array<i64: 1>, scalar_prefetch = 0 : i64, scratch_operands = 0 : i64, tpu.core_type = #tpu.core_type<tc>, window_params = [{transform_indices = @transform_0, window_bounds = array<i64: 16, 384>}, {pipeline_mode = #tpu.pipeline_mode<synchronous>, transform_indices = @transform_1, window_bounds = array<i64: 384, 1536>}, {pipeline_mode = #tpu.pipeline_mode<synchronous>, transform_indices = @transform_2, window_bounds = array<i64: 1, 1536>}, {pipeline_mode = #tpu.pipeline_mode<synchronous>, transform_indices = @transform_3, window_bounds = array<i64: 1536, 384>}, {pipeline_mode = #tpu.pipeline_mode<synchronous>, transform_indices = @transform_4, window_bounds = array<i64: 1, 384>}, {transform_indices = @transform_5, window_bounds = array<i64: 16, 384>}]} {
    %c0 = arith.constant 0 : index
    %c0_0 = arith.constant 0 : index
    %0 = vector.load %arg1[%c0, %c0_0] : memref<16x384xbf16, #tpu.memory_space<vmem>>, vector<16x384xbf16>
    %c0_1 = arith.constant 0 : index
    %c0_2 = arith.constant 0 : index
    %1 = vector.load %arg2[%c0_1, %c0_2] : memref<384x1536xbf16, #tpu.memory_space<vmem>>, vector<384x512xbf16>
    %cst = arith.constant dense<0.000000e+00> : vector<16x512xf32>
    %2 = tpu.matmul %0, %1, %cst {dimension_numbers = #tpu.dot_dimension_numbers<[1], [0], [0], [1], [0, 0, 1, 1], [], []>} : vector<16x384xbf16>, vector<384x512xbf16>, vector<16x512xf32> -> vector<16x512xf32>
    %c0_3 = arith.constant 0 : index
    %c0_4 = arith.constant 0 : index
    %3 = vector.load %arg3[%c0_3, %c0_4] : memref<1x1536xf32, #tpu.memory_space<vmem>>, vector<1x512xf32>
    %4 = vector.broadcast %3 : vector<1x512xf32> to vector<16x512xf32>
    %5 = arith.addf %2, %4 : vector<16x512xf32>
    %cst_5 = arith.constant 0.000000e+00 : f32
    %6 = vector.broadcast %cst_5 : f32 to vector<16x512xf32>
    %7 = arith.maximumf %5, %6 : vector<16x512xf32>
    %8 = arith.truncf %7 : vector<16x512xf32> to vector<16x512xbf16>
    %c0_6 = arith.constant 0 : index
    %c0_7 = arith.constant 0 : index
    %9 = vector.load %arg4[%c0_6, %c0_7] : memref<1536x384xbf16, #tpu.memory_space<vmem>>, vector<512x384xbf16>
    %cst_8 = arith.constant dense<0.000000e+00> : vector<16x384xf32>
    %10 = tpu.matmul %8, %9, %cst_8 {dimension_numbers = #tpu.dot_dimension_numbers<[1], [0], [0], [1], [0, 0, 1, 1], [], []>} : vector<16x512xbf16>, vector<512x384xbf16>, vector<16x384xf32> -> vector<16x384xf32>
    %c0_9 = arith.constant 0 : index
    %c512 = arith.constant 512 : index
    %11 = vector.load %arg2[%c0_9, %c512] : memref<384x1536xbf16, #tpu.memory_space<vmem>>, vector<384x512xbf16>
    %cst_10 = arith.constant dense<0.000000e+00> : vector<16x512xf32>
    %12 = tpu.matmul %0, %11, %cst_10 {dimension_numbers = #tpu.dot_dimension_numbers<[1], [0], [0], [1], [0, 0, 1, 1], [], []>} : vector<16x384xbf16>, vector<384x512xbf16>, vector<16x512xf32> -> vector<16x512xf32>
    %c0_11 = arith.constant 0 : index
    %c512_12 = arith.constant 512 : index
    %13 = vector.load %arg3[%c0_11, %c512_12] : memref<1x1536xf32, #tpu.memory_space<vmem>>, vector<1x512xf32>
    %14 = vector.broadcast %13 : vector<1x512xf32> to vector<16x512xf32>
    %15 = arith.addf %12, %14 : vector<16x512xf32>
    %cst_13 = arith.constant 0.000000e+00 : f32
    %16 = vector.broadcast %cst_13 : f32 to vector<16x512xf32>
    %17 = arith.maximumf %15, %16 : vector<16x512xf32>
    %18 = arith.truncf %17 : vector<16x512xf32> to vector<16x512xbf16>
    %c512_14 = arith.constant 512 : index
    %c0_15 = arith.constant 0 : index
    %19 = vector.load %arg4[%c512_14, %c0_15] : memref<1536x384xbf16, #tpu.memory_space<vmem>>, vector<512x384xbf16>
    %cst_16 = arith.constant dense<0.000000e+00> : vector<16x384xf32>
    %20 = tpu.matmul %18, %19, %cst_16 {dimension_numbers = #tpu.dot_dimension_numbers<[1], [0], [0], [1], [0, 0, 1, 1], [], []>} : vector<16x512xbf16>, vector<512x384xbf16>, vector<16x384xf32> -> vector<16x384xf32>
    %21 = arith.addf %10, %20 : vector<16x384xf32>
    %c0_17 = arith.constant 0 : index
    %c1024 = arith.constant 1024 : index
    %22 = vector.load %arg2[%c0_17, %c1024] : memref<384x1536xbf16, #tpu.memory_space<vmem>>, vector<384x512xbf16>
    %cst_18 = arith.constant dense<0.000000e+00> : vector<16x512xf32>
    %23 = tpu.matmul %0, %22, %cst_18 {dimension_numbers = #tpu.dot_dimension_numbers<[1], [0], [0], [1], [0, 0, 1, 1], [], []>} : vector<16x384xbf16>, vector<384x512xbf16>, vector<16x512xf32> -> vector<16x512xf32>
    %c0_19 = arith.constant 0 : index
    %c1024_20 = arith.constant 1024 : index
    %24 = vector.load %arg3[%c0_19, %c1024_20] : memref<1x1536xf32, #tpu.memory_space<vmem>>, vector<1x512xf32>
    %25 = vector.broadcast %24 : vector<1x512xf32> to vector<16x512xf32>
    %26 = arith.addf %23, %25 : vector<16x512xf32>
    %cst_21 = arith.constant 0.000000e+00 : f32
    %27 = vector.broadcast %cst_21 : f32 to vector<16x512xf32>
    %28 = arith.maximumf %26, %27 : vector<16x512xf32>
    %29 = arith.truncf %28 : vector<16x512xf32> to vector<16x512xbf16>
    %c1024_22 = arith.constant 1024 : index
    %c0_23 = arith.constant 0 : index
    %30 = vector.load %arg4[%c1024_22, %c0_23] : memref<1536x384xbf16, #tpu.memory_space<vmem>>, vector<512x384xbf16>
    %cst_24 = arith.constant dense<0.000000e+00> : vector<16x384xf32>
    %31 = tpu.matmul %29, %30, %cst_24 {dimension_numbers = #tpu.dot_dimension_numbers<[1], [0], [0], [1], [0, 0, 1, 1], [], []>} : vector<16x512xbf16>, vector<512x384xbf16>, vector<16x384xf32> -> vector<16x384xf32>
    %32 = arith.addf %21, %31 : vector<16x384xf32>
    %c0_25 = arith.constant 0 : index
    %c0_26 = arith.constant 0 : index
    %33 = vector.load %arg5[%c0_25, %c0_26] : memref<1x384xf32, #tpu.memory_space<vmem>>, vector<1x384xf32>
    %34 = vector.broadcast %33 : vector<1x384xf32> to vector<16x384xf32>
    %35 = arith.addf %32, %34 : vector<16x384xf32>
    %c0_27 = arith.constant 0 : index
    %c0_28 = arith.constant 0 : index
    %36 = vector.load %arg6[%c0_27, %c0_28] : memref<16x384xf32, #tpu.memory_space<vmem>>, vector<16x384xf32>
    tpu.vector_store %arg6[%c0_27, %c0_28], %35 {strides = array<i32>} : memref<16x384xf32, #tpu.memory_space<vmem>>, vector<16x384xf32>,
    return
  }
  func.func @transform_0(%arg0: i32) -> (i32, i32) {
    %c0_i32 = arith.constant 0 : i32
    %c0_i32_0 = arith.constant 0 : i32
    return %arg0, %c0_i32 : i32, i32
  }
  func.func @transform_1(%arg0: i32) -> (i32, i32) {
    %c0_i32 = arith.constant 0 : i32
    %c0_i32_0 = arith.constant 0 : i32
    %c0_i32_1 = arith.constant 0 : i32
    return %c0_i32, %c0_i32_0 : i32, i32
  }
  func.func @transform_2(%arg0: i32) -> (i32, i32) {
    %c0_i32 = arith.constant 0 : i32
    %c0_i32_0 = arith.constant 0 : i32
    %c0_i32_1 = arith.constant 0 : i32
    return %c0_i32, %c0_i32_0 : i32, i32
  }
  func.func @transform_3(%arg0: i32) -> (i32, i32) {
    %c0_i32 = arith.constant 0 : i32
    %c0_i32_0 = arith.constant 0 : i32
    %c0_i32_1 = arith.constant 0 : i32
    return %c0_i32, %c0_i32_0 : i32, i32
  }
  func.func @transform_4(%arg0: i32) -> (i32, i32) {
    %c0_i32 = arith.constant 0 : i32
    %c0_i32_0 = arith.constant 0 : i32
    %c0_i32_1 = arith.constant 0 : i32
    return %c0_i32, %c0_i32_0 : i32, i32
  }
  func.func @transform_5(%arg0: i32) -> (i32, i32) {
    %c0_i32 = arith.constant 0 : i32
    %c0_i32_0 = arith.constant 0 : i32
    return %arg0, %c0_i32 : i32, i32
  }
}

</mosaic_0001>

<llo_original>
// kernel: tpu_custom_call.1
$region0: #{tpu_custom_call.1}
  #allocation0 [shape = 'u32[]', space=smem, size = 0x4, offset = 0x4, fixed_abs, tag = 'smem constant byte address 0x4 - core index']
  #allocation1 [shape = 'u32[144,128]{1,0:T(1,128)}', space=vmem, size = 0x12000, scoped, tag = 'internal scratch']
  %s0 = inlined_call_operand.hbm [shape: bf16[16,384], index: 0, kind: input, shape index: {}]
  %s1 = inlined_call_operand.hbm [shape: bf16[384,1536], index: 1, kind: input, shape index: {}]
  %s2 = inlined_call_operand.hbm [shape: f32[1,1536], index: 2, kind: input, shape index: {}]
  %s3 = inlined_call_operand.hbm [shape: bf16[1536,384], index: 3, kind: input, shape index: {}]
  %s4 = inlined_call_operand.hbm [shape: f32[1,384], index: 4, kind: input, shape index: {}]
  %s5 = inlined_call_operand.hbm [shape: f32[16,384], index: 5, kind: output, shape index: {}]
  %s6 = sld [smem:[#allocation0]]
  $region50: #{tpu_custom_call.1} parent=0
    _
  %s8 = ssub.s32 1, %s6
  %s9 = scalar_select 0, %s8, %s6
  $region1: #{tpu_custom_call.1} parent=0
    #allocation2 [shape = 'u8[12288]{0}', space=vmem, size = 0x3000, scoped, tag = 'input window, operand 0, single buffered']
    #allocation3 [shape = 's32[1]{0}', space=sflag, size = 0x4, scoped, tag = 'scoped memory for tpu_custom_call.1']
    #allocation4 [shape = 's32[1]{0}', space=sflag, size = 0x4, scoped, tag = 'scoped memory for tpu_custom_call.1']
    #allocation5 [shape = 'u8[1179648]{0}', space=vmem, size = 0x120000, scoped, tag = 'input window, operand 1, single buffered']
    #allocation6 [shape = 's32[1]{0}', space=sflag, size = 0x4, scoped, tag = 'scoped memory for tpu_custom_call.1']
    #allocation7 [shape = 'u8[6144]{0}', space=vmem, size = 0x1800, scoped, tag = 'input window, operand 2, single buffered']
    #allocation8 [shape = 'u8[1179648]{0}', space=vmem, size = 0x120000, scoped, tag = 'input window, operand 3, single buffered']
    #allocation9 [shape = 's32[1]{0}', space=sflag, size = 0x4, scoped, tag = 'scoped memory for tpu_custom_call.1']
    #allocation10 [shape = 'u8[1536]{0}', space=vmem, size = 0x800, scoped, tag = 'input window, operand 4, single buffered']
    #allocation11 [shape = 'u8[24576]{0}', space=vmem, size = 0x6000, scoped, tag = 'output window, operand 0, single buffered']
    %10 = vsyncpa [#allocation3], 0
    %11 = vsyncpa [#allocation6], 0
    %12 = vsyncpa [#allocation9], 0
    %13 = vsyncpa [#allocation4], 0
    // Predicated region
    $region2: #{tpu_custom_call.1} parent=1 // pred_check
      _
    $region3: #{tpu_custom_call.1} parent=1 // pred_check_branch
      %15 = sbr.rel (0) target = $region5
    $region4: #{tpu_custom_call.1} parent=1 // pred_region
      %s17 = ssub.s32 384, 384
      %18 = vsyncadd [#allocation3], %s17
      %s19 = sshll.u32 [#allocation2], 4
      %s20 = int_to_ptr.vmem [resolvable:$true] %s19
      %25 = dma.hbm_to_vmem [thread:$0]  %s0, 384, %s20, [#allocation3], 192, 192, 12
    $region5: #{tpu_custom_call.1} parent=1 // pred_fallthru
      _
    // Predicated region
    $region6: #{tpu_custom_call.1} parent=1 // pred_check
      _
    $region7: #{tpu_custom_call.1} parent=1 // pred_check_branch
      %27 = sbr.rel (0) target = $region9
    $region8: #{tpu_custom_call.1} parent=1 // pred_region
      %s29 = ssub.s32 36864, 36864
      %30 = vsyncadd [#allocation6], %s29
      %s31 = sshll.u32 [#allocation5], 4
      %s32 = int_to_ptr.vmem [resolvable:$true] %s31
      %37 = dma.hbm_to_vmem [thread:$0]  %s1, 36864, %s32, [#allocation6], 768, 768, 48
    $region9: #{tpu_custom_call.1} parent=1 // pred_fallthru
      _
    // Predicated region
    $region10: #{tpu_custom_call.1} parent=1 // pred_check
      _
    $region11: #{tpu_custom_call.1} parent=1 // pred_check_branch
      %39 = sbr.rel (0) target = $region13
    $region12: #{tpu_custom_call.1} parent=1 // pred_region
      %s41 = ssub.s32 192, 192
      %42 = vsyncadd [#allocation6], %s41
      %s44 = sshll.u32 [#allocation7], 4
      %s45 = int_to_ptr.vmem [resolvable:$true] %s44
      %47 = dma.hbm_to_vmem [thread:$0]  %s2, 192, %s45, [#allocation6]
    $region13: #{tpu_custom_call.1} parent=1 // pred_fallthru
      _
    // Predicated region
    $region14: #{tpu_custom_call.1} parent=1 // pred_check
      _
    $region15: #{tpu_custom_call.1} parent=1 // pred_check_branch
      %49 = sbr.rel (0) target = $region17
    $region16: #{tpu_custom_call.1} parent=1 // pred_region
      %s51 = ssub.s32 36864, 36864
      %52 = vsyncadd [#allocation9], %s51
      %s53 = sshll.u32 [#allocation8], 4
      %s54 = int_to_ptr.vmem [resolvable:$true] %s53
      %59 = dma.hbm_to_vmem [thread:$0]  %s3, 36864, %s54, [#allocation9], 192, 192, 12
    $region17: #{tpu_custom_call.1} parent=1 // pred_fallthru
      _
    // Predicated region
    $region18: #{tpu_custom_call.1} parent=1 // pred_check
      _
    $region19: #{tpu_custom_call.1} parent=1 // pred_check_branch
      %61 = sbr.rel (0) target = $region21
    $region20: #{tpu_custom_call.1} parent=1 // pred_region
      %s63 = ssub.s32 48, 48
      %64 = vsyncadd [#allocation9], %s63
      %s66 = sshll.u32 [#allocation10], 4
      %s67 = int_to_ptr.vmem [resolvable:$true] %s66
      %69 = dma.hbm_to_vmem [thread:$0]  %s4, 48, %s67, [#allocation9]
    $region21: #{tpu_custom_call.1} parent=1 // pred_fallthru
      _
    // Predicated region
    $region22: #{tpu_custom_call.1} parent=1 // pred_check
      _
    $region23: #{tpu_custom_call.1} parent=1 // pred_check_branch
      %71 = sbr.rel (0) target = $region25
    $region24: #{tpu_custom_call.1} parent=1 // pred_region
      %72 = dma.done [#allocation3], 384
    $region25: #{tpu_custom_call.1} parent=1 // pred_fallthru
      _
    // Predicated region
    $region26: #{tpu_custom_call.1} parent=1 // pred_check
      _
    $region27: #{tpu_custom_call.1} parent=1 // pred_check_branch
      %74 = sbr.rel (0) target = $region29
    $region28: #{tpu_custom_call.1} parent=1 // pred_region
      %75 = dma.done [#allocation6], 36864
    $region29: #{tpu_custom_call.1} parent=1 // pred_fallthru
      _
    // Predicated region
    $region30: #{tpu_custom_call.1} parent=1 // pred_check
      _
    $region31: #{tpu_custom_call.1} parent=1 // pred_check_branch
      %77 = sbr.rel (0) target = $region33
    $region32: #{tpu_custom_call.1} parent=1 // pred_region
      %78 = dma.done [#allocation6], 192
    $region33: #{tpu_custom_call.1} parent=1 // pred_fallthru
      _
    // Predicated region
    $region34: #{tpu_custom_call.1} parent=1 // pred_check
      _
    $region35: #{tpu_custom_call.1} parent=1 // pred_check_branch
      %80 = sbr.rel (0) target = $region37
    $region36: #{tpu_custom_call.1} parent=1 // pred_region
      %81 = dma.done [#allocation9], 36864
    $region37: #{tpu_custom_call.1} parent=1 // pred_fallthru
      _
    // Predicated region
    $region38: #{tpu_custom_call.1} parent=1 // pred_check
      _
    $region39: #{tpu_custom_call.1} parent=1 // pred_check_branch
      %83 = sbr.rel (0) target = $region41
    $region40: #{tpu_custom_call.1} parent=1 // pred_region
      %84 = dma.done [#allocation9], 48
    $region41: #{tpu_custom_call.1} parent=1 // pred_fallthru
      _
    %v86 = vld [vmem:[#allocation2] sm:$0xff]
    %v87 = vld [vmem:[#allocation2 + $0x8] sm:$0xf]
    %v88 = vld [vmem:[#allocation2 + $0xc] sm:$0xff]
    %v89 = vld [vmem:[#allocation2 + $0x14] sm:$0xf]
    %v90 = vld [vmem:[#allocation5] sm:$0xff]
    %v91 = vld [vmem:[#allocation5 + $0x8] sm:$0xff]
    %v92 = vld [vmem:[#allocation5 + $0x30] sm:$0xff]
    %v93 = vld [vmem:[#allocation5 + $0x38] sm:$0xff]
    %v94 = vld [vmem:[#allocation5 + $0x60] sm:$0xff]
    %v95 = vld [vmem:[#allocation5 + $0x68] sm:$0xff]
    %v96 = vld [vmem:[#allocation5 + $0x90] sm:$0xff]
    %v97 = vld [vmem:[#allocation5 + $0x98] sm:$0xff]
    %v98 = vld [vmem:[#allocation5 + $0xc0] sm:$0xff]
    %v99 = vld [vmem:[#allocation5 + $0xc8] sm:$0xff]
    %v100 = vld [vmem:[#allocation5 + $0xf0] sm:$0xff]
    %v101 = vld [vmem:[#allocation5 + $0xf8] sm:$0xff]
    %v102 = vld [vmem:[#allocation5 + $0x120] sm:$0xff]
    %v103 = vld [vmem:[#allocation5 + $0x128] sm:$0xff]
    %v104 = vld [vmem:[#allocation5 + $0x150] sm:$0xff]
    %v105 = vld [vmem:[#allocation5 + $0x158] sm:$0xff]
    %v106 = vld [vmem:[#allocation5 + $0x180] sm:$0xff]
    %v107 = vld [vmem:[#allocation5 + $0x188] sm:$0xff]
    %v108 = vld [vmem:[#allocation5 + $0x1b0] sm:$0xff]
    %v109 = vld [vmem:[#allocation5 + $0x1b8] sm:$0xff]
    %v110 = vld [vmem:[#allocation5 + $0x1e0] sm:$0xff]
    %v111 = vld [vmem:[#allocation5 + $0x1e8] sm:$0xff]
    %v112 = vld [vmem:[#allocation5 + $0x210] sm:$0xff]
    %v113 = vld [vmem:[#allocation5 + $0x218] sm:$0xff]
    %v114 = vld [vmem:[#allocation5 + $0x240] sm:$0xff]
    %v115 = vld [vmem:[#allocation5 + $0x248] sm:$0xff]
    %v116 = vld [vmem:[#allocation5 + $0x270] sm:$0xff]
    %v117 = vld [vmem:[#allocation5 + $0x278] sm:$0xff]
    %v118 = vld [vmem:[#allocation5 + $0x2a0] sm:$0xff]
    %v119 = vld [vmem:[#allocation5 + $0x2a8] sm:$0xff]
    %v120 = vld [vmem:[#allocation5 + $0x2d0] sm:$0xff]
    %v121 = vld [vmem:[#allocation5 + $0x2d8] sm:$0xff]
    %v122 = vld [vmem:[#allocation5 + $0x300] sm:$0xff]
    %v123 = vld [vmem:[#allocation5 + $0x308] sm:$0xff]
    %v124 = vld [vmem:[#allocation5 + $0x330] sm:$0xff]
    %v125 = vld [vmem:[#allocation5 + $0x338] sm:$0xff]
    %v126 = vld [vmem:[#allocation5 + $0x360] sm:$0xff]
    %v127 = vld [vmem:[#allocation5 + $0x368] sm:$0xff]
    %v128 = vld [vmem:[#allocation5 + $0x390] sm:$0xff]
    %v129 = vld [vmem:[#allocation5 + $0x398] sm:$0xff]
    %v130 = vld [vmem:[#allocation5 + $0x3c0] sm:$0xff]
    %v131 = vld [vmem:[#allocation5 + $0x3c8] sm:$0xff]
    %v132 = vld [vmem:[#allocation5 + $0x3f0] sm:$0xff]
    %v133 = vld [vmem:[#allocation5 + $0x3f8] sm:$0xff]
    %v134 = vld [vmem:[#allocation5 + $0x420] sm:$0xff]
    %v135 = vld [vmem:[#allocation5 + $0x428] sm:$0xff]
    %v136 = vld [vmem:[#allocation5 + $0x450] sm:$0xff]
    %v137 = vld [vmem:[#allocation5 + $0x458] sm:$0xff]
    %v138 = vld [vmem:[#allocation5 + $0x480] sm:$0xff]
    %v139 = vld [vmem:[#allocation5 + $0x488] sm:$0xff]
    %v140 = vld [vmem:[#allocation5 + $0x4b0] sm:$0xff]
    %v141 = vld [vmem:[#allocation5 + $0x4b8] sm:$0xff]
    %v142 = vld [vmem:[#allocation5 + $0x4e0] sm:$0xff]
    %v143 = vld [vmem:[#allocation5 + $0x4e8] sm:$0xff]
    %v144 = vld [vmem:[#allocation5 + $0x510] sm:$0xff]
    %v145 = vld [vmem:[#allocation5 + $0x518] sm:$0xff]
    %v146 = vld [vmem:[#allocation5 + $0x540] sm:$0xff]
    %v147 = vld [vmem:[#allocation5 + $0x548] sm:$0xff]
    %v148 = vld [vmem:[#allocation5 + $0x570] sm:$0xff]
    %v149 = vld [vmem:[#allocation5 + $0x578] sm:$0xff]
    %v150 = vld [vmem:[#allocation5 + $0x5a0] sm:$0xff]
    %v151 = vld [vmem:[#allocation5 + $0x5a8] sm:$0xff]
    %v152 = vld [vmem:[#allocation5 + $0x5d0] sm:$0xff]
    %v153 = vld [vmem:[#allocation5 + $0x5d8] sm:$0xff]
    %v154 = vld [vmem:[#allocation5 + $0x600] sm:$0xff]
    %v155 = vld [vmem:[#allocation5 + $0x608] sm:$0xff]
    %v156 = vld [vmem:[#allocation5 + $0x630] sm:$0xff]
    %v157 = vld [vmem:[#allocation5 + $0x638] sm:$0xff]
    %v158 = vld [vmem:[#allocation5 + $0x660] sm:$0xff]
    %v159 = vld [vmem:[#allocation5 + $0x668] sm:$0xff]
    %v160 = vld [vmem:[#allocation5 + $0x690] sm:$0xff]
    %v161 = vld [vmem:[#allocation5 + $0x698] sm:$0xff]
    %v162 = vld [vmem:[#allocation5 + $0x6c0] sm:$0xff]
    %v163 = vld [vmem:[#allocation5 + $0x6c8] sm:$0xff]
    %v164 = vld [vmem:[#allocation5 + $0x6f0] sm:$0xff]
    %v165 = vld [vmem:[#allocation5 + $0x6f8] sm:$0xff]
    %v166 = vld [vmem:[#allocation5 + $0x720] sm:$0xff]
    %v167 = vld [vmem:[#allocation5 + $0x728] sm:$0xff]
    %v168 = vld [vmem:[#allocation5 + $0x750] sm:$0xff]
    %v169 = vld [vmem:[#allocation5 + $0x758] sm:$0xff]
    %v170 = vld [vmem:[#allocation5 + $0x780] sm:$0xff]
    %v171 = vld [vmem:[#allocation5 + $0x788] sm:$0xff]
    %v172 = vld [vmem:[#allocation5 + $0x7b0] sm:$0xff]
    %v173 = vld [vmem:[#allocation5 + $0x7b8] sm:$0xff]
    %v174 = vld [vmem:[#allocation5 + $0x7e0] sm:$0xff]
    %v175 = vld [vmem:[#allocation5 + $0x7e8] sm:$0xff]
    %v176 = vld [vmem:[#allocation5 + $0x810] sm:$0xff]
    %v177 = vld [vmem:[#allocation5 + $0x818] sm:$0xff]
    %v178 = vld [vmem:[#allocation5 + $0x840] sm:$0xff]
    %v179 = vld [vmem:[#allocation5 + $0x848] sm:$0xff]
    %v180 = vld [vmem:[#allocation5 + $0x870] sm:$0xff]
    %v181 = vld [vmem:[#allocation5 + $0x878] sm:$0xff]
    %v182 = vld [vmem:[#allocation5 + $0x8a0] sm:$0xff]
    %v183 = vld [vmem:[#allocation5 + $0x8a8] sm:$0xff]
    %v184 = vld [vmem:[#allocation5 + $0x8d0] sm:$0xff]
    %v185 = vld [vmem:[#allocation5 + $0x8d8] sm:$0xff]
    %v186 = vld [vmem:[#allocation7] sm:$0xf]
    %v188 = vlaneseq
    %v189 = vshrl.u32 %v188, 7
    %v190 = vsub.s32 0, %v189
    %v191 = vrot.slane %v186, %v190
    %v192 = vlaneseq
    %v193 = vshrl.u32 %v192, 7
    %v194 = vsub.s32 1, %v193
    %v195 = vrot.slane %v186, %v194
    %v196 = vlaneseq
    %v197 = vshrl.u32 %v196, 7
    %v198 = vsub.s32 2, %v197
    %v199 = vrot.slane %v186, %v198
    %v200 = vlaneseq
    %v201 = vshrl.u32 %v200, 7
    %v202 = vsub.s32 3, %v201
    %v203 = vrot.slane %v186, %v202
    %v212 = vunpack.c.l.b16 %v86
    %v213 = vunpack.c.h.b16 %v86
    %v214 = vunpack.c.l.b16 %v87
    %v215 = vunpack.c.l.b16 %v88
    %v216 = vunpack.c.h.b16 %v88
    %v217 = vunpack.c.l.b16 %v89
    %v218 = vpack.c.b16 %v215, %v212
    %v219 = vpack.c.b16 %v216, %v213
    %v220 = vpack.c.b16 %v217, %v214
    %v320 = vunpack.c.l.b16 %v90
    %v321 = vunpack.c.h.b16 %v90
    %v322 = vunpack.c.l.b16 %v91
    %v323 = vunpack.c.h.b16 %v91
    %v324 = vunpack.c.l.b16 %v92
    %v325 = vunpack.c.h.b16 %v92
    %v326 = vunpack.c.l.b16 %v93
    %v327 = vunpack.c.h.b16 %v93
    %v328 = vunpack.c.l.b16 %v94
    %v329 = vunpack.c.h.b16 %v94
    %v330 = vunpack.c.l.b16 %v95
    %v331 = vunpack.c.h.b16 %v95
    %v332 = vunpack.c.l.b16 %v96
    %v333 = vunpack.c.h.b16 %v96
    %v334 = vunpack.c.l.b16 %v97
    %v335 = vunpack.c.h.b16 %v97
    %v336 = vunpack.c.l.b16 %v98
    %v337 = vunpack.c.h.b16 %v98
    %v338 = vunpack.c.l.b16 %v99
    %v339 = vunpack.c.h.b16 %v99
    %v340 = vunpack.c.l.b16 %v100
    %v341 = vunpack.c.h.b16 %v100
    %v342 = vunpack.c.l.b16 %v101
    %v343 = vunpack.c.h.b16 %v101
    %v344 = vunpack.c.l.b16 %v102
    %v345 = vunpack.c.h.b16 %v102
    %v346 = vunpack.c.l.b16 %v103
    %v347 = vunpack.c.h.b16 %v103
    %v348 = vunpack.c.l.b16 %v104
    %v349 = vunpack.c.h.b16 %v104
    %v350 = vunpack.c.l.b16 %v105
    %v351 = vunpack.c.h.b16 %v105
    %v352 = vunpack.c.l.b16 %v106
    %v353 = vunpack.c.h.b16 %v106
    %v354 = vunpack.c.l.b16 %v107
    %v355 = vunpack.c.h.b16 %v107
    %v356 = vunpack.c.l.b16 %v108
    %v357 = vunpack.c.h.b16 %v108
    %v358 = vunpack.c.l.b16 %v109
    %v359 = vunpack.c.h.b16 %v109
    %v360 = vunpack.c.l.b16 %v110
    %v361 = vunpack.c.h.b16 %v110
    %v362 = vunpack.c.l.b16 %v111
    %v363 = vunpack.c.h.b16 %v111
    %v364 = vunpack.c.l.b16 %v112
    %v365 = vunpack.c.h.b16 %v112
    %v366 = vunpack.c.l.b16 %v113
    %v367 = vunpack.c.h.b16 %v113
    %v368 = vunpack.c.l.b16 %v114
    %v369 = vunpack.c.h.b16 %v114
    %v370 = vunpack.c.l.b16 %v115
    %v371 = vunpack.c.h.b16 %v115
    %v372 = vunpack.c.l.b16 %v116
    %v373 = vunpack.c.h.b16 %v116
    %v374 = vunpack.c.l.b16 %v117
    %v375 = vunpack.c.h.b16 %v117
    %v376 = vunpack.c.l.b16 %v118
    %v377 = vunpack.c.h.b16 %v118
    %v378 = vunpack.c.l.b16 %v119
    %v379 = vunpack.c.h.b16 %v119
    %v380 = vunpack.c.l.b16 %v120
    %v381 = vunpack.c.h.b16 %v120
    %v382 = vunpack.c.l.b16 %v121
    %v383 = vunpack.c.h.b16 %v121
    %v384 = vunpack.c.l.b16 %v122
    %v385 = vunpack.c.h.b16 %v122
    %v386 = vunpack.c.l.b16 %v123
    %v387 = vunpack.c.h.b16 %v123
    %v388 = vunpack.c.l.b16 %v124
    %v389 = vunpack.c.h.b16 %v124
    %v390 = vunpack.c.l.b16 %v125
    %v391 = vunpack.c.h.b16 %v125
    %v392 = vunpack.c.l.b16 %v126
    %v393 = vunpack.c.h.b16 %v126
    %v394 = vunpack.c.l.b16 %v127
    %v395 = vunpack.c.h.b16 %v127
    %v396 = vunpack.c.l.b16 %v128
    %v397 = vunpack.c.h.b16 %v128
    %v398 = vunpack.c.l.b16 %v129
    %v399 = vunpack.c.h.b16 %v129
    %v400 = vunpack.c.l.b16 %v130
    %v401 = vunpack.c.h.b16 %v130
    %v402 = vunpack.c.l.b16 %v131
    %v403 = vunpack.c.h.b16 %v131
    %v404 = vunpack.c.l.b16 %v132
    %v405 = vunpack.c.h.b16 %v132
    %v406 = vunpack.c.l.b16 %v133
    %v407 = vunpack.c.h.b16 %v133
    %v408 = vunpack.c.l.b16 %v134
    %v409 = vunpack.c.h.b16 %v134
    %v410 = vunpack.c.l.b16 %v135
    %v411 = vunpack.c.h.b16 %v135
    %v412 = vunpack.c.l.b16 %v136
    %v413 = vunpack.c.h.b16 %v136
    %v414 = vunpack.c.l.b16 %v137
    %v415 = vunpack.c.h.b16 %v137
    %v416 = vunpack.c.l.b16 %v138
    %v417 = vunpack.c.h.b16 %v138
    %v418 = vunpack.c.l.b16 %v139
    %v419 = vunpack.c.h.b16 %v139
    %v420 = vunpack.c.l.b16 %v140
    %v421 = vunpack.c.h.b16 %v140
    %v422 = vunpack.c.l.b16 %v141
    %v423 = vunpack.c.h.b16 %v141
    %v424 = vunpack.c.l.b16 %v142
    %v425 = vunpack.c.h.b16 %v142
    %v426 = vunpack.c.l.b16 %v143
    %v427 = vunpack.c.h.b16 %v143
    %v428 = vunpack.c.l.b16 %v144
    %v429 = vunpack.c.h.b16 %v144
    %v430 = vunpack.c.l.b16 %v145
    %v431 = vunpack.c.h.b16 %v145
    %v432 = vunpack.c.l.b16 %v146
    %v433 = vunpack.c.h.b16 %v146
    %v434 = vunpack.c.l.b16 %v147
    %v435 = vunpack.c.h.b16 %v147
    %v436 = vunpack.c.l.b16 %v148
    %v437 = vunpack.c.h.b16 %v148
    %v438 = vunpack.c.l.b16 %v149
    %v439 = vunpack.c.h.b16 %v149
    %v440 = vunpack.c.l.b16 %v150
    %v441 = vunpack.c.h.b16 %v150
    %v442 = vunpack.c.l.b16 %v151
    %v443 = vunpack.c.h.b16 %v151
    %v444 = vunpack.c.l.b16 %v152
    %v445 = vunpack.c.h.b16 %v152
    %v446 = vunpack.c.l.b16 %v153
    %v447 = vunpack.c.h.b16 %v153
    %v448 = vunpack.c.l.b16 %v154
    %v449 = vunpack.c.h.b16 %v154
    %v450 = vunpack.c.l.b16 %v155
    %v451 = vunpack.c.h.b16 %v155
    %v452 = vunpack.c.l.b16 %v156
    %v453 = vunpack.c.h.b16 %v156
    %v454 = vunpack.c.l.b16 %v157
    %v455 = vunpack.c.h.b16 %v157
    %v456 = vunpack.c.l.b16 %v158
    %v457 = vunpack.c.h.b16 %v158
    %v458 = vunpack.c.l.b16 %v159
    %v459 = vunpack.c.h.b16 %v159
    %v460 = vunpack.c.l.b16 %v160
    %v461 = vunpack.c.h.b16 %v160
    %v462 = vunpack.c.l.b16 %v161
    %v463 = vunpack.c.h.b16 %v161
    %v464 = vunpack.c.l.b16 %v162
    %v465 = vunpack.c.h.b16 %v162
    %v466 = vunpack.c.l.b16 %v163
    %v467 = vunpack.c.h.b16 %v163
    %v468 = vunpack.c.l.b16 %v164
    %v469 = vunpack.c.h.b16 %v164
    %v470 = vunpack.c.l.b16 %v165
    %v471 = vunpack.c.h.b16 %v165
    %v472 = vunpack.c.l.b16 %v166
    %v473 = vunpack.c.h.b16 %v166
    %v474 = vunpack.c.l.b16 %v167
    %v475 = vunpack.c.h.b16 %v167
    %v476 = vunpack.c.l.b16 %v168
    %v477 = vunpack.c.h.b16 %v168
    %v478 = vunpack.c.l.b16 %v169
    %v479 = vunpack.c.h.b16 %v169
    %v480 = vunpack.c.l.b16 %v170
    %v481 = vunpack.c.h.b16 %v170
    %v482 = vunpack.c.l.b16 %v171
    %v483 = vunpack.c.h.b16 %v171
    %v484 = vunpack.c.l.b16 %v172
    %v485 = vunpack.c.h.b16 %v172
    %v486 = vunpack.c.l.b16 %v173
    %v487 = vunpack.c.h.b16 %v173
    %v488 = vunpack.c.l.b16 %v174
    %v489 = vunpack.c.h.b16 %v174
    %v490 = vunpack.c.l.b16 %v175
    %v491 = vunpack.c.h.b16 %v175
    %v492 = vunpack.c.l.b16 %v176
    %v493 = vunpack.c.h.b16 %v176
    %v494 = vunpack.c.l.b16 %v177
    %v495 = vunpack.c.h.b16 %v177
    %v496 = vunpack.c.l.b16 %v178
    %v497 = vunpack.c.h.b16 %v178
    %v498 = vunpack.c.l.b16 %v179
    %v499 = vunpack.c.h.b16 %v179
    %v500 = vunpack.c.l.b16 %v180
    %v501 = vunpack.c.h.b16 %v180
    %v502 = vunpack.c.l.b16 %v181
    %v503 = vunpack.c.h.b16 %v181
    %v504 = vunpack.c.l.b16 %v182
    %v505 = vunpack.c.h.b16 %v182
    %v506 = vunpack.c.l.b16 %v183
    %v507 = vunpack.c.h.b16 %v183
    %v508 = vunpack.c.l.b16 %v184
    %v509 = vunpack.c.h.b16 %v184
    %v510 = vunpack.c.l.b16 %v185
    %v511 = vunpack.c.h.b16 %v185
    %v512 = vpack.c.b16 %v324, %v320
    %v513 = vpack.c.b16 %v325, %v321
    %v514 = vpack.c.b16 %v326, %v322
    %v515 = vpack.c.b16 %v327, %v323
    %v516 = vpack.c.b16 %v332, %v328
    %v517 = vpack.c.b16 %v333, %v329
    %v518 = vpack.c.b16 %v334, %v330
    %v519 = vpack.c.b16 %v335, %v331
    %v520 = vpack.c.b16 %v340, %v336
    %v521 = vpack.c.b16 %v341, %v337
    %v522 = vpack.c.b16 %v342, %v338
    %v523 = vpack.c.b16 %v343, %v339
    %v524 = vpack.c.b16 %v348, %v344
    %v525 = vpack.c.b16 %v349, %v345
    %v526 = vpack.c.b16 %v350, %v346
    %v527 = vpack.c.b16 %v351, %v347
    %v528 = vpack.c.b16 %v356, %v352
    %v529 = vpack.c.b16 %v357, %v353
    %v530 = vpack.c.b16 %v358, %v354
    %v531 = vpack.c.b16 %v359, %v355
    %v532 = vpack.c.b16 %v364, %v360
    %v533 = vpack.c.b16 %v365, %v361
    %v534 = vpack.c.b16 %v366, %v362
    %v535 = vpack.c.b16 %v367, %v363
    %v536 = vpack.c.b16 %v372, %v368
    %v537 = vpack.c.b16 %v373, %v369
    %v538 = vpack.c.b16 %v374, %v370
    %v539 = vpack.c.b16 %v375, %v371
    %v540 = vpack.c.b16 %v380, %v376
    %v541 = vpack.c.b16 %v381, %v377
    %v542 = vpack.c.b16 %v382, %v378
    %v543 = vpack.c.b16 %v383, %v379
    %v544 = vpack.c.b16 %v388, %v384
    %v545 = vpack.c.b16 %v389, %v385
    %v546 = vpack.c.b16 %v390, %v386
    %v547 = vpack.c.b16 %v391, %v387
    %v548 = vpack.c.b16 %v396, %v392
    %v549 = vpack.c.b16 %v397, %v393
    %v550 = vpack.c.b16 %v398, %v394
    %v551 = vpack.c.b16 %v399, %v395
    %v552 = vpack.c.b16 %v404, %v400
    %v553 = vpack.c.b16 %v405, %v401
    %v554 = vpack.c.b16 %v406, %v402
    %v555 = vpack.c.b16 %v407, %v403
    %v556 = vpack.c.b16 %v412, %v408
    %v557 = vpack.c.b16 %v413, %v409
    %v558 = vpack.c.b16 %v414, %v410
    %v559 = vpack.c.b16 %v415, %v411
    %v560 = vpack.c.b16 %v420, %v416
    %v561 = vpack.c.b16 %v421, %v417
    %v562 = vpack.c.b16 %v422, %v418
    %v563 = vpack.c.b16 %v423, %v419
    %v564 = vpack.c.b16 %v428, %v424
    %v565 = vpack.c.b16 %v429, %v425
    %v566 = vpack.c.b16 %v430, %v426
    %v567 = vpack.c.b16 %v431, %v427
    %v568 = vpack.c.b16 %v436, %v432
    %v569 = vpack.c.b16 %v437, %v433
    %v570 = vpack.c.b16 %v438, %v434
    %v571 = vpack.c.b16 %v439, %v435
    %v572 = vpack.c.b16 %v444, %v440
    %v573 = vpack.c.b16 %v445, %v441
    %v574 = vpack.c.b16 %v446, %v442
    %v575 = vpack.c.b16 %v447, %v443
    %v576 = vpack.c.b16 %v452, %v448
    %v577 = vpack.c.b16 %v453, %v449
    %v578 = vpack.c.b16 %v454, %v450
    %v579 = vpack.c.b16 %v455, %v451
    %v580 = vpack.c.b16 %v460, %v456
    %v581 = vpack.c.b16 %v461, %v457
    %v582 = vpack.c.b16 %v462, %v458
    %v583 = vpack.c.b16 %v463, %v459
    %v584 = vpack.c.b16 %v468, %v464
    %v585 = vpack.c.b16 %v469, %v465
    %v586 = vpack.c.b16 %v470, %v466
    %v587 = vpack.c.b16 %v471, %v467
    %v588 = vpack.c.b16 %v476, %v472
    %v589 = vpack.c.b16 %v477, %v473
    %v590 = vpack.c.b16 %v478, %v474
    %v591 = vpack.c.b16 %v479, %v475
    %v592 = vpack.c.b16 %v484, %v480
    %v593 = vpack.c.b16 %v485, %v481
    %v594 = vpack.c.b16 %v486, %v482
    %v595 = vpack.c.b16 %v487, %v483
    %v596 = vpack.c.b16 %v492, %v488
    %v597 = vpack.c.b16 %v493, %v489
    %v598 = vpack.c.b16 %v494, %v490
    %v599 = vpack.c.b16 %v495, %v491
    %v600 = vpack.c.b16 %v500, %v496
    %v601 = vpack.c.b16 %v501, %v497
    %v602 = vpack.c.b16 %v502, %v498
    %v603 = vpack.c.b16 %v503, %v499
    %v604 = vpack.c.b16 %v508, %v504
    %v605 = vpack.c.b16 %v509, %v505
    %v606 = vpack.c.b16 %v510, %v506
    %v607 = vpack.c.b16 %v511, %v507
    %704 = vmatprep.subr.bf16.mxu0 %v541
    %705 = vmatpush1.bf16.msra.mxu0 %v540
    %706 = vmatprep.subr.bf16.mxu0 %v537
    %707 = vmatpush1.bf16.msra.mxu0 %v536
    %708 = vmatprep.subr.bf16.mxu0 %v533
    %709 = vmatpush1.bf16.msra.mxu0 %v532
    %710 = vmatprep.subr.bf16.mxu0 %v529
    %711 = vmatpush1.bf16.msra.mxu0 %v528
    %712 = vmatprep.subr.bf16.mxu0 %v525
    %713 = vmatpush1.bf16.msra.mxu0 %v524
    %714 = vmatprep.subr.bf16.mxu0 %v521
    %715 = vmatpush1.bf16.msra.mxu0 %v520
    %716 = vmatprep.subr.bf16.mxu0 %v517
    %717 = vmatpush1.bf16.msra.mxu0 %v516
    %718 = vmatprep.subr.bf16.mxu0 %v513
    %719 = vmatpush1.bf16.msra.mxu0 %v512
    %720 = vmatprep.subr.bf16.mxu0 %v573
    %721 = vmatpush2.bf16.msra.mxu0 %v572
    %722 = vmatprep.subr.bf16.mxu0 %v569
    %723 = vmatpush2.bf16.msra.mxu0 %v568
    %724 = vmatprep.subr.bf16.mxu0 %v565
    %725 = vmatpush2.bf16.msra.mxu0 %v564
    %726 = vmatprep.subr.bf16.mxu0 %v561
    %727 = vmatpush2.bf16.msra.mxu0 %v560
    %728 = vmatprep.subr.bf16.mxu0 %v557
    %729 = vmatpush2.bf16.msra.mxu0 %v556
    %730 = vmatprep.subr.bf16.mxu0 %v553
    %731 = vmatpush2.bf16.msra.mxu0 %v552
    %732 = vmatprep.subr.bf16.mxu0 %v549
    %733 = vmatpush2.bf16.msra.mxu0 %v548
    %734 = vmatprep.subr.bf16.mxu0 %v545
    %735 = vmatpush2.bf16.msra.mxu0 %v544
    %736 = vmatprep.mubr.bf16.mxu0 %v219
    %737 = vmatmul.mubr.bf16.gmra.mxu0 %v218
    %v738 = vpop.f32.mrf.mxu0
    %v739 = vadd.f32 %v191, %v738
    %v740 = vpop.f32.mrf.mxu0
    %v741 = vadd.f32 %v195, %v740
    %v742 = vpop.f32.mrf.mxu0
    %v743 = vadd.f32 %v191, %v742
    %v744 = vpop.f32.mrf.mxu0
    %v745 = vadd.f32 %v195, %v744
    %746 = vdwg.mxu0
    %747 = vmatprep.subr.bf16.mxu0 %v605
    %748 = vmatpush1.bf16.msra.mxu0 %v604
    %749 = vmatprep.subr.bf16.mxu0 %v601
    %750 = vmatpush1.bf16.msra.mxu0 %v600
    %751 = vmatprep.subr.bf16.mxu0 %v597
    %752 = vmatpush1.bf16.msra.mxu0 %v596
    %753 = vmatprep.subr.bf16.mxu0 %v593
    %754 = vmatpush1.bf16.msra.mxu0 %v592
    %755 = vmatprep.subr.bf16.mxu0 %v589
    %756 = vmatpush1.bf16.msra.mxu0 %v588
    %757 = vmatprep.subr.bf16.mxu0 %v585
    %758 = vmatpush1.bf16.msra.mxu0 %v584
    %759 = vmatprep.subr.bf16.mxu0 %v581
    %760 = vmatpush1.bf16.msra.mxu0 %v580
    %761 = vmatprep.subr.bf16.mxu0 %v577
    %762 = vmatpush1.bf16.msra.mxu0 %v576
    %763 = vmatprep.subr.bf16.mxu0 0
    %764 = vmatpush2.bf16.msra.mxu0 0
    %765 = vmatprep.subr.bf16.mxu0 0
    %766 = vmatpush2.bf16.msra.mxu0 0
    %767 = vmatprep.subr.bf16.mxu0 0
    %768 = vmatpush2.bf16.msra.mxu0 0
    %769 = vmatprep.subr.bf16.mxu0 0
    %770 = vmatpush2.bf16.msra.mxu0 0
    %771 = vmatprep.subr.bf16.mxu0 0
    %772 = vmatpush2.bf16.msra.mxu0 0
    %773 = vmatprep.subr.bf16.mxu0 0
    %774 = vmatpush2.bf16.msra.mxu0 0
    %775 = vmatprep.subr.bf16.mxu0 0
    %776 = vmatpush2.bf16.msra.mxu0 0
    %777 = vmatprep.subr.bf16.mxu0 0
    %778 = vmatpush2.bf16.msra.mxu0 0
    %779 = vmatprep.mubr.bf16.mxu0 0
    %780 = vmatmul.mubr.bf16.gmra.mxu0 %v220
    %v781 = vpop.f32.mrf.mxu0
    %v782 = vadd.f32 %v739, %v781
    %v783 = vpop.f32.mrf.mxu0
    %v784 = vadd.f32 %v741, %v783
    %v785 = vpop.f32.mrf.mxu0
    %v786 = vadd.f32 %v743, %v785
    %v787 = vpop.f32.mrf.mxu0
    %v788 = vadd.f32 %v745, %v787
    %789 = vdwg.mxu0
    %790 = vmatprep.subr.bf16.mxu0 %v543
    %791 = vmatpush1.bf16.msra.mxu0 %v542
    %792 = vmatprep.subr.bf16.mxu0 %v539
    %793 = vmatpush1.bf16.msra.mxu0 %v538
    %794 = vmatprep.subr.bf16.mxu0 %v535
    %795 = vmatpush1.bf16.msra.mxu0 %v534
    %796 = vmatprep.subr.bf16.mxu0 %v531
    %797 = vmatpush1.bf16.msra.mxu0 %v530
    %798 = vmatprep.subr.bf16.mxu0 %v527
    %799 = vmatpush1.bf16.msra.mxu0 %v526
    %800 = vmatprep.subr.bf16.mxu0 %v523
    %801 = vmatpush1.bf16.msra.mxu0 %v522
    %802 = vmatprep.subr.bf16.mxu0 %v519
    %803 = vmatpush1.bf16.msra.mxu0 %v518
    %804 = vmatprep.subr.bf16.mxu0 %v515
    %805 = vmatpush1.bf16.msra.mxu0 %v514
    %806 = vmatprep.subr.bf16.mxu0 %v575
    %807 = vmatpush2.bf16.msra.mxu0 %v574
    %808 = vmatprep.subr.bf16.mxu0 %v571
    %809 = vmatpush2.bf16.msra.mxu0 %v570
    %810 = vmatprep.subr.bf16.mxu0 %v567
    %811 = vmatpush2.bf16.msra.mxu0 %v566
    %812 = vmatprep.subr.bf16.mxu0 %v563
    %813 = vmatpush2.bf16.msra.mxu0 %v562
    %814 = vmatprep.subr.bf16.mxu0 %v559
    %815 = vmatpush2.bf16.msra.mxu0 %v558
    %816 = vmatprep.subr.bf16.mxu0 %v555
    %817 = vmatpush2.bf16.msra.mxu0 %v554
    %818 = vmatprep.subr.bf16.mxu0 %v551
    %819 = vmatpush2.bf16.msra.mxu0 %v550
    %820 = vmatprep.subr.bf16.mxu0 %v547
    %821 = vmatpush2.bf16.msra.mxu0 %v546
    %822 = vmatprep.mubr.bf16.mxu0 %v219
    %823 = vmatmul.mubr.bf16.gmra.mxu0 %v218
    %v824 = vpop.f32.mrf.mxu0
    %v825 = vadd.f32 %v199, %v824
    %v826 = vpop.f32.mrf.mxu0
    %v827 = vadd.f32 %v203, %v826
    %v828 = vpop.f32.mrf.mxu0
    %v829 = vadd.f32 %v199, %v828
    %v830 = vpop.f32.mrf.mxu0
    %v831 = vadd.f32 %v203, %v830
    %832 = vdwg.mxu0
    %833 = vmatprep.subr.bf16.mxu0 %v607
    %834 = vmatpush1.bf16.msra.mxu0 %v606
    %835 = vmatprep.subr.bf16.mxu0 %v603
    %836 = vmatpush1.bf16.msra.mxu0 %v602
    %837 = vmatprep.subr.bf16.mxu0 %v599
    %838 = vmatpush1.bf16.msra.mxu0 %v598
    %839 = vmatprep.subr.bf16.mxu0 %v595
    %840 = vmatpush1.bf16.msra.mxu0 %v594
    %841 = vmatprep.subr.bf16.mxu0 %v591
    %842 = vmatpush1.bf16.msra.mxu0 %v590
    %843 = vmatprep.subr.bf16.mxu0 %v587
    %844 = vmatpush1.bf16.msra.mxu0 %v586
    %845 = vmatprep.subr.bf16.mxu0 %v583
    %846 = vmatpush1.bf16.msra.mxu0 %v582
    %847 = vmatprep.subr.bf16.mxu0 %v579
    %848 = vmatpush1.bf16.msra.mxu0 %v578
    %849 = vmatprep.subr.bf16.mxu0 0
    %850 = vmatpush2.bf16.msra.mxu0 0
    %851 = vmatprep.subr.bf16.mxu0 0
    %852 = vmatpush2.bf16.msra.mxu0 0
    %853 = vmatprep.subr.bf16.mxu0 0
    %854 = vmatpush2.bf16.msra.mxu0 0
    %855 = vmatprep.subr.bf16.mxu0 0
    %856 = vmatpush2.bf16.msra.mxu0 0
    %857 = vmatprep.subr.bf16.mxu0 0
    %858 = vmatpush2.bf16.msra.mxu0 0
    %859 = vmatprep.subr.bf16.mxu0 0
    %860 = vmatpush2.bf16.msra.mxu0 0
    %861 = vmatprep.subr.bf16.mxu0 0
    %862 = vmatpush2.bf16.msra.mxu0 0
    %863 = vmatprep.subr.bf16.mxu0 0
    %864 = vmatpush2.bf16.msra.mxu0 0
    %865 = vmatprep.mubr.bf16.mxu0 0
    %866 = vmatmul.mubr.bf16.gmra.mxu0 %v220
    %v867 = vpop.f32.mrf.mxu0
    %v868 = vadd.f32 %v825, %v867
    %v869 = vpop.f32.mrf.mxu0
    %v870 = vadd.f32 %v827, %v869
    %v871 = vpop.f32.mrf.mxu0
    %v872 = vadd.f32 %v829, %v871
    %v873 = vpop.f32.mrf.mxu0
    %v874 = vadd.f32 %v831, %v873
    %875 = vdwg.mxu0
    %v876 = vmax.f32 %v782, 0.0
    %v877 = vmax.f32 %v784, 0.0
    %v878 = vmax.f32 %v868, 0.0
    %v879 = vmax.f32 %v870, 0.0
    %v880 = vmax.f32 %v786, 0.0
    %v881 = vmax.f32 %v788, 0.0
    %v882 = vmax.f32 %v872, 0.0
    %v883 = vmax.f32 %v874, 0.0
    %v884 = vpack.c.bf16 %v880, %v876
    %v885 = vpack.c.bf16 %v881, %v877
    %v886 = vpack.c.bf16 %v882, %v878
    %v887 = vpack.c.bf16 %v883, %v879
    %v888 = vld [vmem:[#allocation8] sm:$0xff]
    %v889 = vld [vmem:[#allocation8 + $0x8] sm:$0xf]
    %v890 = vld [vmem:[#allocation8 + $0xc] sm:$0xff]
    %v891 = vld [vmem:[#allocation8 + $0x14] sm:$0xf]
    %v892 = vld [vmem:[#allocation8 + $0x18] sm:$0xff]
    %v893 = vld [vmem:[#allocation8 + $0x20] sm:$0xf]
    %v894 = vld [vmem:[#allocation8 + $0x24] sm:$0xff]
    %v895 = vld [vmem:[#allocation8 + $0x2c] sm:$0xf]
    %v896 = vld [vmem:[#allocation8 + $0x30] sm:$0xff]
    %v897 = vld [vmem:[#allocation8 + $0x38] sm:$0xf]
    %v898 = vld [vmem:[#allocation8 + $0x3c] sm:$0xff]
    %v899 = vld [vmem:[#allocation8 + $0x44] sm:$0xf]
    %v900 = vld [vmem:[#allocation8 + $0x48] sm:$0xff]
    %v901 = vld [vmem:[#allocation8 + $0x50] sm:$0xf]
    %v902 = vld [vmem:[#allocation8 + $0x54] sm:$0xff]
    %v903 = vld [vmem:[#allocation8 + $0x5c] sm:$0xf]
    %v904 = vld [vmem:[#allocation8 + $0x60] sm:$0xff]
    %v905 = vld [vmem:[#allocation8 + $0x68] sm:$0xf]
    %v906 = vld [vmem:[#allocation8 + $0x6c] sm:$0xff]
    %v907 = vld [vmem:[#allocation8 + $0x74] sm:$0xf]
    %v908 = vld [vmem:[#allocation8 + $0x78] sm:$0xff]
    %v909 = vld [vmem:[#allocation8 + $0x80] sm:$0xf]
    %v910 = vld [vmem:[#allocation8 + $0x84] sm:$0xff]
    %v911 = vld [vmem:[#allocation8 + $0x8c] sm:$0xf]
    %v912 = vld [vmem:[#allocation8 + $0x90] sm:$0xff]
    %v913 = vld [vmem:[#allocation8 + $0x98] sm:$0xf]
    %v914 = vld [vmem:[#allocation8 + $0x9c] sm:$0xff]
    %v915 = vld [vmem:[#allocation8 + $0xa4] sm:$0xf]
    %v916 = vld [vmem:[#allocation8 + $0xa8] sm:$0xff]
    %v917 = vld [vmem:[#allocation8 + $0xb0] sm:$0xf]
    %v918 = vld [vmem:[#allocation8 + $0xb4] sm:$0xff]
    %v919 = vld [vmem:[#allocation8 + $0xbc] sm:$0xf]
    %v920 = vld [vmem:[#allocation8 + $0xc0] sm:$0xff]
    %v921 = vld [vmem:[#allocation8 + $0xc8] sm:$0xf]
    %v922 = vld [vmem:[#allocation8 + $0xcc] sm:$0xff]
    %v923 = vld [vmem:[#allocation8 + $0xd4] sm:$0xf]
    %v924 = vld [vmem:[#allocation8 + $0xd8] sm:$0xff]
    %v925 = vld [vmem:[#allocation8 + $0xe0] sm:$0xf]
    %v926 = vld [vmem:[#allocation8 + $0xe4] sm:$0xff]
    %v927 = vld [vmem:[#allocation8 + $0xec] sm:$0xf]
    %v928 = vld [vmem:[#allocation8 + $0xf0] sm:$0xff]
    %v929 = vld [vmem:[#allocation8 + $0xf8] sm:$0xf]
    %v930 = vld [vmem:[#allocation8 + $0xfc] sm:$0xff]
    %v931 = vld [vmem:[#allocation8 + $0x104] sm:$0xf]
    %v932 = vld [vmem:[#allocation8 + $0x108] sm:$0xff]
    %v933 = vld [vmem:[#allocation8 + $0x110] sm:$0xf]
    %v934 = vld [vmem:[#allocation8 + $0x114] sm:$0xff]
    %v935 = vld [vmem:[#allocation8 + $0x11c] sm:$0xf]
    %v936 = vld [vmem:[#allocation8 + $0x120] sm:$0xff]
    %v937 = vld [vmem:[#allocation8 + $0x128] sm:$0xf]
    %v938 = vld [vmem:[#allocation8 + $0x12c] sm:$0xff]
    %v939 = vld [vmem:[#allocation8 + $0x134] sm:$0xf]
    %v940 = vld [vmem:[#allocation8 + $0x138] sm:$0xff]
    %v941 = vld [vmem:[#allocation8 + $0x140] sm:$0xf]
    %v942 = vld [vmem:[#allocation8 + $0x144] sm:$0xff]
    %v943 = vld [vmem:[#allocation8 + $0x14c] sm:$0xf]
    %v944 = vld [vmem:[#allocation8 + $0x150] sm:$0xff]
    %v945 = vld [vmem:[#allocation8 + $0x158] sm:$0xf]
    %v946 = vld [vmem:[#allocation8 + $0x15c] sm:$0xff]
    %v947 = vld [vmem:[#allocation8 + $0x164] sm:$0xf]
    %v948 = vld [vmem:[#allocation8 + $0x168] sm:$0xff]
    %v949 = vld [vmem:[#allocation8 + $0x170] sm:$0xf]
    %v950 = vld [vmem:[#allocation8 + $0x174] sm:$0xff]
    %v951 = vld [vmem:[#allocation8 + $0x17c] sm:$0xf]
    %v952 = vld [vmem:[#allocation8 + $0x180] sm:$0xff]
    %v953 = vld [vmem:[#allocation8 + $0x188] sm:$0xf]
    %v954 = vld [vmem:[#allocation8 + $0x18c] sm:$0xff]
    %v955 = vld [vmem:[#allocation8 + $0x194] sm:$0xf]
    %v956 = vld [vmem:[#allocation8 + $0x198] sm:$0xff]
    %v957 = vld [vmem:[#allocation8 + $0x1a0] sm:$0xf]
    %v958 = vld [vmem:[#allocation8 + $0x1a4] sm:$0xff]
    %v959 = vld [vmem:[#allocation8 + $0x1ac] sm:$0xf]
    %v960 = vld [vmem:[#allocation8 + $0x1b0] sm:$0xff]
    %v961 = vld [vmem:[#allocation8 + $0x1b8] sm:$0xf]
    %v962 = vld [vmem:[#allocation8 + $0x1bc] sm:$0xff]
    %v963 = vld [vmem:[#allocation8 + $0x1c4] sm:$0xf]
    %v964 = vld [vmem:[#allocation8 + $0x1c8] sm:$0xff]
    %v965 = vld [vmem:[#allocation8 + $0x1d0] sm:$0xf]
    %v966 = vld [vmem:[#allocation8 + $0x1d4] sm:$0xff]
    %v967 = vld [vmem:[#allocation8 + $0x1dc] sm:$0xf]
    %v968 = vld [vmem:[#allocation8 + $0x1e0] sm:$0xff]
    %v969 = vld [vmem:[#allocation8 + $0x1e8] sm:$0xf]
    %v970 = vld [vmem:[#allocation8 + $0x1ec] sm:$0xff]
    %v971 = vld [vmem:[#allocation8 + $0x1f4] sm:$0xf]
    %v972 = vld [vmem:[#allocation8 + $0x1f8] sm:$0xff]
    %v973 = vld [vmem:[#allocation8 + $0x200] sm:$0xf]
    %v974 = vld [vmem:[#allocation8 + $0x204] sm:$0xff]
    %v975 = vld [vmem:[#allocation8 + $0x20c] sm:$0xf]
    %v976 = vld [vmem:[#allocation8 + $0x210] sm:$0xff]
    %v977 = vld [vmem:[#allocation8 + $0x218] sm:$0xf]
    %v978 = vld [vmem:[#allocation8 + $0x21c] sm:$0xff]
    %v979 = vld [vmem:[#allocation8 + $0x224] sm:$0xf]
    %v980 = vld [vmem:[#allocation8 + $0x228] sm:$0xff]
    %v981 = vld [vmem:[#allocation8 + $0x230] sm:$0xf]
    %v982 = vld [vmem:[#allocation8 + $0x234] sm:$0xff]
    %v983 = vld [vmem:[#allocation8 + $0x23c] sm:$0xf]
    %v984 = vld [vmem:[#allocation8 + $0x240] sm:$0xff]
    %v985 = vld [vmem:[#allocation8 + $0x248] sm:$0xf]
    %v986 = vld [vmem:[#allocation8 + $0x24c] sm:$0xff]
    %v987 = vld [vmem:[#allocation8 + $0x254] sm:$0xf]
    %v988 = vld [vmem:[#allocation8 + $0x258] sm:$0xff]
    %v989 = vld [vmem:[#allocation8 + $0x260] sm:$0xf]
    %v990 = vld [vmem:[#allocation8 + $0x264] sm:$0xff]
    %v991 = vld [vmem:[#allocation8 + $0x26c] sm:$0xf]
    %v992 = vld [vmem:[#allocation8 + $0x270] sm:$0xff]
    %v993 = vld [vmem:[#allocation8 + $0x278] sm:$0xf]
    %v994 = vld [vmem:[#allocation8 + $0x27c] sm:$0xff]
    %v995 = vld [vmem:[#allocation8 + $0x284] sm:$0xf]
    %v996 = vld [vmem:[#allocation8 + $0x288] sm:$0xff]
    %v997 = vld [vmem:[#allocation8 + $0x290] sm:$0xf]
    %v998 = vld [vmem:[#allocation8 + $0x294] sm:$0xff]
    %v999 = vld [vmem:[#allocation8 + $0x29c] sm:$0xf]
    %v1000 = vld [vmem:[#allocation8 + $0x2a0] sm:$0xff]
    %v1001 = vld [vmem:[#allocation8 + $0x2a8] sm:$0xf]
    %v1002 = vld [vmem:[#allocation8 + $0x2ac] sm:$0xff]
    %v1003 = vld [vmem:[#allocation8 + $0x2b4] sm:$0xf]
    %v1004 = vld [vmem:[#allocation8 + $0x2b8] sm:$0xff]
    %v1005 = vld [vmem:[#allocation8 + $0x2c0] sm:$0xf]
    %v1006 = vld [vmem:[#allocation8 + $0x2c4] sm:$0xff]
    %v1007 = vld [vmem:[#allocation8 + $0x2cc] sm:$0xf]
    %v1008 = vld [vmem:[#allocation8 + $0x2d0] sm:$0xff]
    %v1009 = vld [vmem:[#allocation8 + $0x2d8] sm:$0xf]
    %v1010 = vld [vmem:[#allocation8 + $0x2dc] sm:$0xff]
    %v1011 = vld [vmem:[#allocation8 + $0x2e4] sm:$0xf]
    %v1012 = vld [vmem:[#allocation8 + $0x2e8] sm:$0xff]
    %v1013 = vld [vmem:[#allocation8 + $0x2f0] sm:$0xf]
    %v1014 = vld [vmem:[#allocation8 + $0x2f4] sm:$0xff]
    %v1015 = vld [vmem:[#allocation8 + $0x2fc] sm:$0xf]
    %v1016 = vld [vmem:[#allocation5 + $0x10] sm:$0xff]
    %v1017 = vld [vmem:[#allocation5 + $0x18] sm:$0xff]
    %v1018 = vld [vmem:[#allocation5 + $0x40] sm:$0xff]
    %v1019 = vld [vmem:[#allocation5 + $0x48] sm:$0xff]
    %v1020 = vld [vmem:[#allocation5 + $0x70] sm:$0xff]
    %v1021 = vld [vmem:[#allocation5 + $0x78] sm:$0xff]
    %v1022 = vld [vmem:[#allocation5 + $0xa0] sm:$0xff]
    %v1023 = vld [vmem:[#allocation5 + $0xa8] sm:$0xff]
    %v1024 = vld [vmem:[#allocation5 + $0xd0] sm:$0xff]
    %v1025 = vld [vmem:[#allocation5 + $0xd8] sm:$0xff]
    %v1026 = vld [vmem:[#allocation5 + $0x100] sm:$0xff]
    %v1027 = vld [vmem:[#allocation5 + $0x108] sm:$0xff]
    %v1028 = vld [vmem:[#allocation5 + $0x130] sm:$0xff]
    %v1029 = vld [vmem:[#allocation5 + $0x138] sm:$0xff]
    %v1030 = vld [vmem:[#allocation5 + $0x160] sm:$0xff]
    %v1031 = vld [vmem:[#allocation5 + $0x168] sm:$0xff]
    %v1032 = vld [vmem:[#allocation5 + $0x190] sm:$0xff]
    %v1033 = vld [vmem:[#allocation5 + $0x198] sm:$0xff]
    %v1034 = vld [vmem:[#allocation5 + $0x1c0] sm:$0xff]
    %v1035 = vld [vmem:[#allocation5 + $0x1c8] sm:$0xff]
    %v1036 = vld [vmem:[#allocation5 + $0x1f0] sm:$0xff]
    %v1037 = vld [vmem:[#allocation5 + $0x1f8] sm:$0xff]
    %v1038 = vld [vmem:[#allocation5 + $0x220] sm:$0xff]
    %v1039 = vld [vmem:[#allocation5 + $0x228] sm:$0xff]
    %v1040 = vld [vmem:[#allocation5 + $0x250] sm:$0xff]
    %v1041 = vld [vmem:[#allocation5 + $0x258] sm:$0xff]
    %v1042 = vld [vmem:[#allocation5 + $0x280] sm:$0xff]
    %v1043 = vld [vmem:[#allocation5 + $0x288] sm:$0xff]
    %v1044 = vld [vmem:[#allocation5 + $0x2b0] sm:$0xff]
    %v1045 = vld [vmem:[#allocation5 + $0x2b8] sm:$0xff]
    %v1046 = vld [vmem:[#allocation5 + $0x2e0] sm:$0xff]
    %v1047 = vld [vmem:[#allocation5 + $0x2e8] sm:$0xff]
    %v1048 = vld [vmem:[#allocation5 + $0x310] sm:$0xff]
    %v1049 = vld [vmem:[#allocation5 + $0x318] sm:$0xff]
    %v1050 = vld [vmem:[#allocation5 + $0x340] sm:$0xff]
    %v1051 = vld [vmem:[#allocation5 + $0x348] sm:$0xff]
    %v1052 = vld [vmem:[#allocation5 + $0x370] sm:$0xff]
    %v1053 = vld [vmem:[#allocation5 + $0x378] sm:$0xff]
    %v1054 = vld [vmem:[#allocation5 + $0x3a0] sm:$0xff]
    %v1055 = vld [vmem:[#allocation5 + $0x3a8] sm:$0xff]
    %v1056 = vld [vmem:[#allocation5 + $0x3d0] sm:$0xff]
    %v1057 = vld [vmem:[#allocation5 + $0x3d8] sm:$0xff]
    %v1058 = vld [vmem:[#allocation5 + $0x400] sm:$0xff]
    %v1059 = vld [vmem:[#allocation5 + $0x408] sm:$0xff]
    %v1060 = vld [vmem:[#allocation5 + $0x430] sm:$0xff]
    %v1061 = vld [vmem:[#allocation5 + $0x438] sm:$0xff]
    %v1062 = vld [vmem:[#allocation5 + $0x460] sm:$0xff]
    %v1063 = vld [vmem:[#allocation5 + $0x468] sm:$0xff]
    %v1064 = vld [vmem:[#allocation5 + $0x490] sm:$0xff]
    %v1065 = vld [vmem:[#allocation5 + $0x498] sm:$0xff]
    %v1066 = vld [vmem:[#allocation5 + $0x4c0] sm:$0xff]
    %v1067 = vld [vmem:[#allocation5 + $0x4c8] sm:$0xff]
    %v1068 = vld [vmem:[#allocation5 + $0x4f0] sm:$0xff]
    %v1069 = vld [vmem:[#allocation5 + $0x4f8] sm:$0xff]
    %v1070 = vld [vmem:[#allocation5 + $0x520] sm:$0xff]
    %v1071 = vld [vmem:[#allocation5 + $0x528] sm:$0xff]
    %v1072 = vld [vmem:[#allocation5 + $0x550] sm:$0xff]
    %v1073 = vld [vmem:[#allocation5 + $0x558] sm:$0xff]
    %v1074 = vld [vmem:[#allocation5 + $0x580] sm:$0xff]
    %v1075 = vld [vmem:[#allocation5 + $0x588] sm:$0xff]
    %v1076 = vld [vmem:[#allocation5 + $0x5b0] sm:$0xff]
    %v1077 = vld [vmem:[#allocation5 + $0x5b8] sm:$0xff]
    %v1078 = vld [vmem:[#allocation5 + $0x5e0] sm:$0xff]
    %v1079 = vld [vmem:[#allocation5 + $0x5e8] sm:$0xff]
    %v1080 = vld [vmem:[#allocation5 + $0x610] sm:$0xff]
    %v1081 = vld [vmem:[#allocation5 + $0x618] sm:$0xff]
    %v1082 = vld [vmem:[#allocation5 + $0x640] sm:$0xff]
    %v1083 = vld [vmem:[#allocation5 + $0x648] sm:$0xff]
    %v1084 = vld [vmem:[#allocation5 + $0x670] sm:$0xff]
    %v1085 = vld [vmem:[#allocation5 + $0x678] sm:$0xff]
    %v1086 = vld [vmem:[#allocation5 + $0x6a0] sm:$0xff]
    %v1087 = vld [vmem:[#allocation5 + $0x6a8] sm:$0xff]
    %v1088 = vld [vmem:[#allocation5 + $0x6d0] sm:$0xff]
    %v1089 = vld [vmem:[#allocation5 + $0x6d8] sm:$0xff]
    %v1090 = vld [vmem:[#allocation5 + $0x700] sm:$0xff]
    %v1091 = vld [vmem:[#allocation5 + $0x708] sm:$0xff]
    %v1092 = vld [vmem:[#allocation5 + $0x730] sm:$0xff]
    %v1093 = vld [vmem:[#allocation5 + $0x738] sm:$0xff]
    %v1094 = vld [vmem:[#allocation5 + $0x760] sm:$0xff]
    %v1095 = vld [vmem:[#allocation5 + $0x768] sm:$0xff]
    %v1096 = vld [vmem:[#allocation5 + $0x790] sm:$0xff]
    %v1097 = vld [vmem:[#allocation5 + $0x798] sm:$0xff]
    %v1098 = vld [vmem:[#allocation5 + $0x7c0] sm:$0xff]
    %v1099 = vld [vmem:[#allocation5 + $0x7c8] sm:$0xff]
    %v1100 = vld [vmem:[#allocation5 + $0x7f0] sm:$0xff]
    %v1101 = vld [vmem:[#allocation5 + $0x7f8] sm:$0xff]
    %v1102 = vld [vmem:[#allocation5 + $0x820] sm:$0xff]
    %v1103 = vld [vmem:[#allocation5 + $0x828] sm:$0xff]
    %v1104 = vld [vmem:[#allocation5 + $0x850] sm:$0xff]
    %v1105 = vld [vmem:[#allocation5 + $0x858] sm:$0xff]
    %v1106 = vld [vmem:[#allocation5 + $0x880] sm:$0xff]
    %v1107 = vld [vmem:[#allocation5 + $0x888] sm:$0xff]
    %v1108 = vld [vmem:[#allocation5 + $0x8b0] sm:$0xff]
    %v1109 = vld [vmem:[#allocation5 + $0x8b8] sm:$0xff]
    %v1110 = vld [vmem:[#allocation5 + $0x8e0] sm:$0xff]
    %v1111 = vld [vmem:[#allocation5 + $0x8e8] sm:$0xff]
    %v1112 = vld [vmem:[#allocation7 + $0x4] sm:$0xf]
    %v1114 = vlaneseq
    %v1115 = vshrl.u32 %v1114, 7
    %v1116 = vsub.s32 0, %v1115
    %v1117 = vrot.slane %v1112, %v1116
    %v1118 = vlaneseq
    %v1119 = vshrl.u32 %v1118, 7
    %v1120 = vsub.s32 1, %v1119
    %v1121 = vrot.slane %v1112, %v1120
    %v1122 = vlaneseq
    %v1123 = vshrl.u32 %v1122, 7
    %v1124 = vsub.s32 2, %v1123
    %v1125 = vrot.slane %v1112, %v1124
    %v1126 = vlaneseq
    %v1127 = vshrl.u32 %v1126, 7
    %v1128 = vsub.s32 3, %v1127
    %v1129 = vrot.slane %v1112, %v1128
    %v1230 = vunpack.c.l.b16 %v1016
    %v1231 = vunpack.c.h.b16 %v1016
    %v1232 = vunpack.c.l.b16 %v1017
    %v1233 = vunpack.c.h.b16 %v1017
    %v1234 = vunpack.c.l.b16 %v1018
    %v1235 = vunpack.c.h.b16 %v1018
    %v1236 = vunpack.c.l.b16 %v1019
    %v1237 = vunpack.c.h.b16 %v1019
    %v1238 = vunpack.c.l.b16 %v1020
    %v1239 = vunpack.c.h.b16 %v1020
    %v1240 = vunpack.c.l.b16 %v1021
    %v1241 = vunpack.c.h.b16 %v1021
    %v1242 = vunpack.c.l.b16 %v1022
    %v1243 = vunpack.c.h.b16 %v1022
    %v1244 = vunpack.c.l.b16 %v1023
    %v1245 = vunpack.c.h.b16 %v1023
    %v1246 = vunpack.c.l.b16 %v1024
    %v1247 = vunpack.c.h.b16 %v1024
    %v1248 = vunpack.c.l.b16 %v1025
    %v1249 = vunpack.c.h.b16 %v1025
    %v1250 = vunpack.c.l.b16 %v1026
    %v1251 = vunpack.c.h.b16 %v1026
    %v1252 = vunpack.c.l.b16 %v1027
    %v1253 = vunpack.c.h.b16 %v1027
    %v1254 = vunpack.c.l.b16 %v1028
    %v1255 = vunpack.c.h.b16 %v1028
    %v1256 = vunpack.c.l.b16 %v1029
    %v1257 = vunpack.c.h.b16 %v1029
    %v1258 = vunpack.c.l.b16 %v1030
    %v1259 = vunpack.c.h.b16 %v1030
    %v1260 = vunpack.c.l.b16 %v1031
    %v1261 = vunpack.c.h.b16 %v1031
    %v1262 = vunpack.c.l.b16 %v1032
    %v1263 = vunpack.c.h.b16 %v1032
    %v1264 = vunpack.c.l.b16 %v1033
    %v1265 = vunpack.c.h.b16 %v1033
    %v1266 = vunpack.c.l.b16 %v1034
    %v1267 = vunpack.c.h.b16 %v1034
    %v1268 = vunpack.c.l.b16 %v1035
    %v1269 = vunpack.c.h.b16 %v1035
    %v1270 = vunpack.c.l.b16 %v1036
    %v1271 = vunpack.c.h.b16 %v1036
    %v1272 = vunpack.c.l.b16 %v1037
    %v1273 = vunpack.c.h.b16 %v1037
    %v1274 = vunpack.c.l.b16 %v1038
    %v1275 = vunpack.c.h.b16 %v1038
    %v1276 = vunpack.c.l.b16 %v1039
    %v1277 = vunpack.c.h.b16 %v1039
    %v1278 = vunpack.c.l.b16 %v1040
    %v1279 = vunpack.c.h.b16 %v1040
    %v1280 = vunpack.c.l.b16 %v1041
    %v1281 = vunpack.c.h.b16 %v1041
    %v1282 = vunpack.c.l.b16 %v1042
    %v1283 = vunpack.c.h.b16 %v1042
    %v1284 = vunpack.c.l.b16 %v1043
    %v1285 = vunpack.c.h.b16 %v1043
    %v1286 = vunpack.c.l.b16 %v1044
    %v1287 = vunpack.c.h.b16 %v1044
    %v1288 = vunpack.c.l.b16 %v1045
    %v1289 = vunpack.c.h.b16 %v1045
    %v1290 = vunpack.c.l.b16 %v1046
    %v1291 = vunpack.c.h.b16 %v1046
    %v1292 = vunpack.c.l.b16 %v1047
    %v1293 = vunpack.c.h.b16 %v1047
    %v1294 = vunpack.c.l.b16 %v1048
    %v1295 = vunpack.c.h.b16 %v1048
    %v1296 = vunpack.c.l.b16 %v1049
    %v1297 = vunpack.c.h.b16 %v1049
    %v1298 = vunpack.c.l.b16 %v1050
    %v1299 = vunpack.c.h.b16 %v1050
    %v1300 = vunpack.c.l.b16 %v1051
    %v1301 = vunpack.c.h.b16 %v1051
    %v1302 = vunpack.c.l.b16 %v1052
    %v1303 = vunpack.c.h.b16 %v1052
    %v1304 = vunpack.c.l.b16 %v1053
    %v1305 = vunpack.c.h.b16 %v1053
    %v1306 = vunpack.c.l.b16 %v1054
    %v1307 = vunpack.c.h.b16 %v1054
    %v1308 = vunpack.c.l.b16 %v1055
    %v1309 = vunpack.c.h.b16 %v1055
    %v1310 = vunpack.c.l.b16 %v1056
    %v1311 = vunpack.c.h.b16 %v1056
    %v1312 = vunpack.c.l.b16 %v1057
    %v1313 = vunpack.c.h.b16 %v1057
    %v1314 = vunpack.c.l.b16 %v1058
    %v1315 = vunpack.c.h.b16 %v1058
    %v1316 = vunpack.c.l.b16 %v1059
    %v1317 = vunpack.c.h.b16 %v1059
    %v1318 = vunpack.c.l.b16 %v1060
    %v1319 = vunpack.c.h.b16 %v1060
    %v1320 = vunpack.c.l.b16 %v1061
    %v1321 = vunpack.c.h.b16 %v1061
    %v1322 = vunpack.c.l.b16 %v1062
    %v1323 = vunpack.c.h.b16 %v1062
    %v1324 = vunpack.c.l.b16 %v1063
    %v1325 = vunpack.c.h.b16 %v1063
    %v1326 = vunpack.c.l.b16 %v1064
    %v1327 = vunpack.c.h.b16 %v1064
    %v1328 = vunpack.c.l.b16 %v1065
    %v1329 = vunpack.c.h.b16 %v1065
    %v1330 = vunpack.c.l.b16 %v1066
    %v1331 = vunpack.c.h.b16 %v1066
    %v1332 = vunpack.c.l.b16 %v1067
    %v1333 = vunpack.c.h.b16 %v1067
    %v1334 = vunpack.c.l.b16 %v1068
    %v1335 = vunpack.c.h.b16 %v1068
    %v1336 = vunpack.c.l.b16 %v1069
    %v1337 = vunpack.c.h.b16 %v1069
    %v1338 = vunpack.c.l.b16 %v1070
    %v1339 = vunpack.c.h.b16 %v1070
    %v1340 = vunpack.c.l.b16 %v1071
    %v1341 = vunpack.c.h.b16 %v1071
    %v1342 = vunpack.c.l.b16 %v1072
    %v1343 = vunpack.c.h.b16 %v1072
    %v1344 = vunpack.c.l.b16 %v1073
    %v1345 = vunpack.c.h.b16 %v1073
    %v1346 = vunpack.c.l.b16 %v1074
    %v1347 = vunpack.c.h.b16 %v1074
    %v1348 = vunpack.c.l.b16 %v1075
    %v1349 = vunpack.c.h.b16 %v1075
    %v1350 = vunpack.c.l.b16 %v1076
    %v1351 = vunpack.c.h.b16 %v1076
    %v1352 = vunpack.c.l.b16 %v1077
    %v1353 = vunpack.c.h.b16 %v1077
    %v1354 = vunpack.c.l.b16 %v1078
    %v1355 = vunpack.c.h.b16 %v1078
    %v1356 = vunpack.c.l.b16 %v1079
    %v1357 = vunpack.c.h.b16 %v1079
    %v1358 = vunpack.c.l.b16 %v1080
    %v1359 = vunpack.c.h.b16 %v1080
    %v1360 = vunpack.c.l.b16 %v1081
    %v1361 = vunpack.c.h.b16 %v1081
    %v1362 = vunpack.c.l.b16 %v1082
    %v1363 = vunpack.c.h.b16 %v1082
    %v1364 = vunpack.c.l.b16 %v1083
    %v1365 = vunpack.c.h.b16 %v1083
    %v1366 = vunpack.c.l.b16 %v1084
    %v1367 = vunpack.c.h.b16 %v1084
    %v1368 = vunpack.c.l.b16 %v1085
    %v1369 = vunpack.c.h.b16 %v1085
    %v1370 = vunpack.c.l.b16 %v1086
    %v1371 = vunpack.c.h.b16 %v1086
    %v1372 = vunpack.c.l.b16 %v1087
    %v1373 = vunpack.c.h.b16 %v1087
    %v1374 = vunpack.c.l.b16 %v1088
    %v1375 = vunpack.c.h.b16 %v1088
    %v1376 = vunpack.c.l.b16 %v1089
    %v1377 = vunpack.c.h.b16 %v1089
    %v1378 = vunpack.c.l.b16 %v1090
    %v1379 = vunpack.c.h.b16 %v1090
    %v1380 = vunpack.c.l.b16 %v1091
    %v1381 = vunpack.c.h.b16 %v1091
    %v1382 = vunpack.c.l.b16 %v1092
    %v1383 = vunpack.c.h.b16 %v1092
    %v1384 = vunpack.c.l.b16 %v1093
    %v1385 = vunpack.c.h.b16 %v1093
    %v1386 = vunpack.c.l.b16 %v1094
    %v1387 = vunpack.c.h.b16 %v1094
    %v1388 = vunpack.c.l.b16 %v1095
    %v1389 = vunpack.c.h.b16 %v1095
    %v1390 = vunpack.c.l.b16 %v1096
    %v1391 = vunpack.c.h.b16 %v1096
    %v1392 = vunpack.c.l.b16 %v1097
    %v1393 = vunpack.c.h.b16 %v1097
    %v1394 = vunpack.c.l.b16 %v1098
    %v1395 = vunpack.c.h.b16 %v1098
    %v1396 = vunpack.c.l.b16 %v1099
    %v1397 = vunpack.c.h.b16 %v1099
    %v1398 = vunpack.c.l.b16 %v1100
    %v1399 = vunpack.c.h.b16 %v1100
    %v1400 = vunpack.c.l.b16 %v1101
    %v1401 = vunpack.c.h.b16 %v1101
    %v1402 = vunpack.c.l.b16 %v1102
    %v1403 = vunpack.c.h.b16 %v1102
    %v1404 = vunpack.c.l.b16 %v1103
    %v1405 = vunpack.c.h.b16 %v1103
    %v1406 = vunpack.c.l.b16 %v1104
    %v1407 = vunpack.c.h.b16 %v1104
    %v1408 = vunpack.c.l.b16 %v1105
    %v1409 = vunpack.c.h.b16 %v1105
    %v1410 = vunpack.c.l.b16 %v1106
    %v1411 = vunpack.c.h.b16 %v1106
    %v1412 = vunpack.c.l.b16 %v1107
    %v1413 = vunpack.c.h.b16 %v1107
    %v1414 = vunpack.c.l.b16 %v1108
    %v1415 = vunpack.c.h.b16 %v1108
    %v1416 = vunpack.c.l.b16 %v1109
    %v1417 = vunpack.c.h.b16 %v1109
    %v1418 = vunpack.c.l.b16 %v1110
    %v1419 = vunpack.c.h.b16 %v1110
    %v1420 = vunpack.c.l.b16 %v1111
    %v1421 = vunpack.c.h.b16 %v1111
    %v1422 = vpack.c.b16 %v1234, %v1230
    %v1423 = vpack.c.b16 %v1235, %v1231
    %v1424 = vpack.c.b16 %v1236, %v1232
    %v1425 = vpack.c.b16 %v1237, %v1233
    %v1426 = vpack.c.b16 %v1242, %v1238
    %v1427 = vpack.c.b16 %v1243, %v1239
    %v1428 = vpack.c.b16 %v1244, %v1240
    %v1429 = vpack.c.b16 %v1245, %v1241
    %v1430 = vpack.c.b16 %v1250, %v1246
    %v1431 = vpack.c.b16 %v1251, %v1247
    %v1432 = vpack.c.b16 %v1252, %v1248
    %v1433 = vpack.c.b16 %v1253, %v1249
    %v1434 = vpack.c.b16 %v1258, %v1254
    %v1435 = vpack.c.b16 %v1259, %v1255
    %v1436 = vpack.c.b16 %v1260, %v1256
    %v1437 = vpack.c.b16 %v1261, %v1257
    %v1438 = vpack.c.b16 %v1266, %v1262
    %v1439 = vpack.c.b16 %v1267, %v1263
    %v1440 = vpack.c.b16 %v1268, %v1264
    %v1441 = vpack.c.b16 %v1269, %v1265
    %v1442 = vpack.c.b16 %v1274, %v1270
    %v1443 = vpack.c.b16 %v1275, %v1271
    %v1444 = vpack.c.b16 %v1276, %v1272
    %v1445 = vpack.c.b16 %v1277, %v1273
    %v1446 = vpack.c.b16 %v1282, %v1278
    %v1447 = vpack.c.b16 %v1283, %v1279
    %v1448 = vpack.c.b16 %v1284, %v1280
    %v1449 = vpack.c.b16 %v1285, %v1281
    %v1450 = vpack.c.b16 %v1290, %v1286
    %v1451 = vpack.c.b16 %v1291, %v1287
    %v1452 = vpack.c.b16 %v1292, %v1288
    %v1453 = vpack.c.b16 %v1293, %v1289
    %v1454 = vpack.c.b16 %v1298, %v1294
    %v1455 = vpack.c.b16 %v1299, %v1295
    %v1456 = vpack.c.b16 %v1300, %v1296
    %v1457 = vpack.c.b16 %v1301, %v1297
    %v1458 = vpack.c.b16 %v1306, %v1302
    %v1459 = vpack.c.b16 %v1307, %v1303
    %v1460 = vpack.c.b16 %v1308, %v1304
    %v1461 = vpack.c.b16 %v1309, %v1305
    %v1462 = vpack.c.b16 %v1314, %v1310
    %v1463 = vpack.c.b16 %v1315, %v1311
    %v1464 = vpack.c.b16 %v1316, %v1312
    %v1465 = vpack.c.b16 %v1317, %v1313
    %v1466 = vpack.c.b16 %v1322, %v1318
    %v1467 = vpack.c.b16 %v1323, %v1319
    %v1468 = vpack.c.b16 %v1324, %v1320
    %v1469 = vpack.c.b16 %v1325, %v1321
    %v1470 = vpack.c.b16 %v1330, %v1326
    %v1471 = vpack.c.b16 %v1331, %v1327
    %v1472 = vpack.c.b16 %v1332, %v1328
    %v1473 = vpack.c.b16 %v1333, %v1329
    %v1474 = vpack.c.b16 %v1338, %v1334
    %v1475 = vpack.c.b16 %v1339, %v1335
    %v1476 = vpack.c.b16 %v1340, %v1336
    %v1477 = vpack.c.b16 %v1341, %v1337
    %v1478 = vpack.c.b16 %v1346, %v1342
    %v1479 = vpack.c.b16 %v1347, %v1343
    %v1480 = vpack.c.b16 %v1348, %v1344
    %v1481 = vpack.c.b16 %v1349, %v1345
    %v1482 = vpack.c.b16 %v1354, %v1350
    %v1483 = vpack.c.b16 %v1355, %v1351
    %v1484 = vpack.c.b16 %v1356, %v1352
    %v1485 = vpack.c.b16 %v1357, %v1353
    %v1486 = vpack.c.b16 %v1362, %v1358
    %v1487 = vpack.c.b16 %v1363, %v1359
    %v1488 = vpack.c.b16 %v1364, %v1360
    %v1489 = vpack.c.b16 %v1365, %v1361
    %v1490 = vpack.c.b16 %v1370, %v1366
    %v1491 = vpack.c.b16 %v1371, %v1367
    %v1492 = vpack.c.b16 %v1372, %v1368
    %v1493 = vpack.c.b16 %v1373, %v1369
    %v1494 = vpack.c.b16 %v1378, %v1374
    %v1495 = vpack.c.b16 %v1379, %v1375
    %v1496 = vpack.c.b16 %v1380, %v1376
    %v1497 = vpack.c.b16 %v1381, %v1377
    %v1498 = vpack.c.b16 %v1386, %v1382
    %v1499 = vpack.c.b16 %v1387, %v1383
    %v1500 = vpack.c.b16 %v1388, %v1384
    %v1501 = vpack.c.b16 %v1389, %v1385
    %v1502 = vpack.c.b16 %v1394, %v1390
    %v1503 = vpack.c.b16 %v1395, %v1391
    %v1504 = vpack.c.b16 %v1396, %v1392
    %v1505 = vpack.c.b16 %v1397, %v1393
    %v1506 = vpack.c.b16 %v1402, %v1398
    %v1507 = vpack.c.b16 %v1403, %v1399
    %v1508 = vpack.c.b16 %v1404, %v1400
    %v1509 = vpack.c.b16 %v1405, %v1401
    %v1510 = vpack.c.b16 %v1410, %v1406
    %v1511 = vpack.c.b16 %v1411, %v1407
    %v1512 = vpack.c.b16 %v1412, %v1408
    %v1513 = vpack.c.b16 %v1413, %v1409
    %v1514 = vpack.c.b16 %v1418, %v1414
    %v1515 = vpack.c.b16 %v1419, %v1415
    %v1516 = vpack.c.b16 %v1420, %v1416
    %v1517 = vpack.c.b16 %v1421, %v1417
    %1614 = vmatprep.subr.bf16.mxu0 %v1451
    %1615 = vmatpush1.bf16.msra.mxu0 %v1450
    %1616 = vmatprep.subr.bf16.mxu0 %v1447
    %1617 = vmatpush1.bf16.msra.mxu0 %v1446
    %1618 = vmatprep.subr.bf16.mxu0 %v1443
    %1619 = vmatpush1.bf16.msra.mxu0 %v1442
    %1620 = vmatprep.subr.bf16.mxu0 %v1439
    %1621 = vmatpush1.bf16.msra.mxu0 %v1438
    %1622 = vmatprep.subr.bf16.mxu0 %v1435
    %1623 = vmatpush1.bf16.msra.mxu0 %v1434
    %1624 = vmatprep.subr.bf16.mxu0 %v1431
    %1625 = vmatpush1.bf16.msra.mxu0 %v1430
    %1626 = vmatprep.subr.bf16.mxu0 %v1427
    %1627 = vmatpush1.bf16.msra.mxu0 %v1426
    %1628 = vmatprep.subr.bf16.mxu0 %v1423
    %1629 = vmatpush1.bf16.msra.mxu0 %v1422
    %1630 = vmatprep.subr.bf16.mxu0 %v1483
    %1631 = vmatpush2.bf16.msra.mxu0 %v1482
    %1632 = vmatprep.subr.bf16.mxu0 %v1479
    %1633 = vmatpush2.bf16.msra.mxu0 %v1478
    %1634 = vmatprep.subr.bf16.mxu0 %v1475
    %1635 = vmatpush2.bf16.msra.mxu0 %v1474
    %1636 = vmatprep.subr.bf16.mxu0 %v1471
    %1637 = vmatpush2.bf16.msra.mxu0 %v1470
    %1638 = vmatprep.subr.bf16.mxu0 %v1467
    %1639 = vmatpush2.bf16.msra.mxu0 %v1466
    %1640 = vmatprep.subr.bf16.mxu0 %v1463
    %1641 = vmatpush2.bf16.msra.mxu0 %v1462
    %1642 = vmatprep.subr.bf16.mxu0 %v1459
    %1643 = vmatpush2.bf16.msra.mxu0 %v1458
    %1644 = vmatprep.subr.bf16.mxu0 %v1455
    %1645 = vmatpush2.bf16.msra.mxu0 %v1454
    %1646 = vmatprep.mubr.bf16.mxu0 %v219
    %1647 = vmatmul.mubr.bf16.gmra.mxu0 %v218
    %v1648 = vpop.f32.mrf.mxu0
    %v1649 = vadd.f32 %v1117, %v1648
    %v1650 = vpop.f32.mrf.mxu0
    %v1651 = vadd.f32 %v1121, %v1650
    %v1652 = vpop.f32.mrf.mxu0
    %v1653 = vadd.f32 %v1117, %v1652
    %v1654 = vpop.f32.mrf.mxu0
    %v1655 = vadd.f32 %v1121, %v1654
    %1656 = vdwg.mxu0
    %1657 = vmatprep.subr.bf16.mxu0 %v1515
    %1658 = vmatpush1.bf16.msra.mxu0 %v1514
    %1659 = vmatprep.subr.bf16.mxu0 %v1511
    %1660 = vmatpush1.bf16.msra.mxu0 %v1510
    %1661 = vmatprep.subr.bf16.mxu0 %v1507
    %1662 = vmatpush1.bf16.msra.mxu0 %v1506
    %1663 = vmatprep.subr.bf16.mxu0 %v1503
    %1664 = vmatpush1.bf16.msra.mxu0 %v1502
    %1665 = vmatprep.subr.bf16.mxu0 %v1499
    %1666 = vmatpush1.bf16.msra.mxu0 %v1498
    %1667 = vmatprep.subr.bf16.mxu0 %v1495
    %1668 = vmatpush1.bf16.msra.mxu0 %v1494
    %1669 = vmatprep.subr.bf16.mxu0 %v1491
    %1670 = vmatpush1.bf16.msra.mxu0 %v1490
    %1671 = vmatprep.subr.bf16.mxu0 %v1487
    %1672 = vmatpush1.bf16.msra.mxu0 %v1486
    %1673 = vmatprep.subr.bf16.mxu0 0
    %1674 = vmatpush2.bf16.msra.mxu0 0
    %1675 = vmatprep.subr.bf16.mxu0 0
    %1676 = vmatpush2.bf16.msra.mxu0 0
    %1677 = vmatprep.subr.bf16.mxu0 0
    %1678 = vmatpush2.bf16.msra.mxu0 0
    %1679 = vmatprep.subr.bf16.mxu0 0
    %1680 = vmatpush2.bf16.msra.mxu0 0
    %1681 = vmatprep.subr.bf16.mxu0 0
    %1682 = vmatpush2.bf16.msra.mxu0 0
    %1683 = vmatprep.subr.bf16.mxu0 0
    %1684 = vmatpush2.bf16.msra.mxu0 0
    %1685 = vmatprep.subr.bf16.mxu0 0
    %1686 = vmatpush2.bf16.msra.mxu0 0
    %1687 = vmatprep.subr.bf16.mxu0 0
    %1688 = vmatpush2.bf16.msra.mxu0 0
    %1689 = vmatprep.mubr.bf16.mxu0 0
    %1690 = vmatmul.mubr.bf16.gmra.mxu0 %v220
    %v1691 = vpop.f32.mrf.mxu0
    %v1692 = vadd.f32 %v1649, %v1691
    %v1693 = vpop.f32.mrf.mxu0
    %v1694 = vadd.f32 %v1651, %v1693
    %v1695 = vpop.f32.mrf.mxu0
    %v1696 = vadd.f32 %v1653, %v1695
    %v1697 = vpop.f32.mrf.mxu0
    %v1698 = vadd.f32 %v1655, %v1697
    %1699 = vdwg.mxu0
    %1700 = vmatprep.subr.bf16.mxu0 %v1453
    %1701 = vmatpush1.bf16.msra.mxu0 %v1452
    %1702 = vmatprep.subr.bf16.mxu0 %v1449
    %1703 = vmatpush1.bf16.msra.mxu0 %v1448
    %1704 = vmatprep.subr.bf16.mxu0 %v1445
    %1705 = vmatpush1.bf16.msra.mxu0 %v1444
    %1706 = vmatprep.subr.bf16.mxu0 %v1441
    %1707 = vmatpush1.bf16.msra.mxu0 %v1440
    %1708 = vmatprep.subr.bf16.mxu0 %v1437
    %1709 = vmatpush1.bf16.msra.mxu0 %v1436
    %1710 = vmatprep.subr.bf16.mxu0 %v1433
    %1711 = vmatpush1.bf16.msra.mxu0 %v1432
    %1712 = vmatprep.subr.bf16.mxu0 %v1429
    %1713 = vmatpush1.bf16.msra.mxu0 %v1428
    %1714 = vmatprep.subr.bf16.mxu0 %v1425
    %1715 = vmatpush1.bf16.msra.mxu0 %v1424
    %1716 = vmatprep.subr.bf16.mxu0 %v1485
    %1717 = vmatpush2.bf16.msra.mxu0 %v1484
    %1718 = vmatprep.subr.bf16.mxu0 %v1481
    %1719 = vmatpush2.bf16.msra.mxu0 %v1480
    %1720 = vmatprep.subr.bf16.mxu0 %v1477
    %1721 = vmatpush2.bf16.msra.mxu0 %v1476
    %1722 = vmatprep.subr.bf16.mxu0 %v1473
    %1723 = vmatpush2.bf16.msra.mxu0 %v1472
    %1724 = vmatprep.subr.bf16.mxu0 %v1469
    %1725 = vmatpush2.bf16.msra.mxu0 %v1468
    %1726 = vmatprep.subr.bf16.mxu0 %v1465
    %1727 = vmatpush2.bf16.msra.mxu0 %v1464
    %1728 = vmatprep.subr.bf16.mxu0 %v1461
    %1729 = vmatpush2.bf16.msra.mxu0 %v1460
    %1730 = vmatprep.subr.bf16.mxu0 %v1457
    %1731 = vmatpush2.bf16.msra.mxu0 %v1456
    %1732 = vmatprep.mubr.bf16.mxu0 %v219
    %1733 = vmatmul.mubr.bf16.gmra.mxu0 %v218
    %v1734 = vpop.f32.mrf.mxu0
    %v1735 = vadd.f32 %v1125, %v1734
    %v1736 = vpop.f32.mrf.mxu0
    %v1737 = vadd.f32 %v1129, %v1736
    %v1738 = vpop.f32.mrf.mxu0
    %v1739 = vadd.f32 %v1125, %v1738
    %v1740 = vpop.f32.mrf.mxu0
    %v1741 = vadd.f32 %v1129, %v1740
    %1742 = vdwg.mxu0
    %1743 = vmatprep.subr.bf16.mxu0 %v1517
    %1744 = vmatpush1.bf16.msra.mxu0 %v1516
    %1745 = vmatprep.subr.bf16.mxu0 %v1513
    %1746 = vmatpush1.bf16.msra.mxu0 %v1512
    %1747 = vmatprep.subr.bf16.mxu0 %v1509
    %1748 = vmatpush1.bf16.msra.mxu0 %v1508
    %1749 = vmatprep.subr.bf16.mxu0 %v1505
    %1750 = vmatpush1.bf16.msra.mxu0 %v1504
    %1751 = vmatprep.subr.bf16.mxu0 %v1501
    %1752 = vmatpush1.bf16.msra.mxu0 %v1500
    %1753 = vmatprep.subr.bf16.mxu0 %v1497
    %1754 = vmatpush1.bf16.msra.mxu0 %v1496
    %1755 = vmatprep.subr.bf16.mxu0 %v1493
    %1756 = vmatpush1.bf16.msra.mxu0 %v1492
    %1757 = vmatprep.subr.bf16.mxu0 %v1489
    %1758 = vmatpush1.bf16.msra.mxu0 %v1488
    %1759 = vmatprep.subr.bf16.mxu0 0
    %1760 = vmatpush2.bf16.msra.mxu0 0
    %1761 = vmatprep.subr.bf16.mxu0 0
    %1762 = vmatpush2.bf16.msra.mxu0 0
    %1763 = vmatprep.subr.bf16.mxu0 0
    %1764 = vmatpush2.bf16.msra.mxu0 0
    %1765 = vmatprep.subr.bf16.mxu0 0
    %1766 = vmatpush2.bf16.msra.mxu0 0
    %1767 = vmatprep.subr.bf16.mxu0 0
    %1768 = vmatpush2.bf16.msra.mxu0 0
    %1769 = vmatprep.subr.bf16.mxu0 0
    %1770 = vmatpush2.bf16.msra.mxu0 0
    %1771 = vmatprep.subr.bf16.mxu0 0
    %1772 = vmatpush2.bf16.msra.mxu0 0
    %1773 = vmatprep.subr.bf16.mxu0 0
    %1774 = vmatpush2.bf16.msra.mxu0 0
    %1775 = vmatprep.mubr.bf16.mxu0 0
    %1776 = vmatmul.mubr.bf16.gmra.mxu0 %v220
    %v1777 = vpop.f32.mrf.mxu0
    %v1778 = vadd.f32 %v1735, %v1777
    %v1779 = vpop.f32.mrf.mxu0
    %v1780 = vadd.f32 %v1737, %v1779
    %v1781 = vpop.f32.mrf.mxu0
    %v1782 = vadd.f32 %v1739, %v1781
    %v1783 = vpop.f32.mrf.mxu0
    %v1784 = vadd.f32 %v1741, %v1783
    %1785 = vdwg.mxu0
    %v1786 = vmax.f32 %v1692, 0.0
    %v1787 = vmax.f32 %v1694, 0.0
    %v1788 = vmax.f32 %v1778, 0.0
    %v1789 = vmax.f32 %v1780, 0.0
    %v1790 = vmax.f32 %v1696, 0.0
    %v1791 = vmax.f32 %v1698, 0.0
    %v1792 = vmax.f32 %v1782, 0.0
    %v1793 = vmax.f32 %v1784, 0.0
    %v1794 = vpack.c.bf16 %v1790, %v1786
    %v1795 = vpack.c.bf16 %v1791, %v1787
    %v1796 = vpack.c.bf16 %v1792, %v1788
    %v1797 = vpack.c.bf16 %v1793, %v1789
    %v1798 = vld [vmem:[#allocation8 + $0x300] sm:$0xff]
    %v1799 = vld [vmem:[#allocation8 + $0x308] sm:$0xf]
    %v1800 = vld [vmem:[#allocation8 + $0x30c] sm:$0xff]
    %v1801 = vld [vmem:[#allocation8 + $0x314] sm:$0xf]
    %v1802 = vld [vmem:[#allocation8 + $0x318] sm:$0xff]
    %v1803 = vld [vmem:[#allocation8 + $0x320] sm:$0xf]
    %v1804 = vld [vmem:[#allocation8 + $0x324] sm:$0xff]
    %v1805 = vld [vmem:[#allocation8 + $0x32c] sm:$0xf]
    %v1806 = vld [vmem:[#allocation8 + $0x330] sm:$0xff]
    %v1807 = vld [vmem:[#allocation8 + $0x338] sm:$0xf]
    %v1808 = vld [vmem:[#allocation8 + $0x33c] sm:$0xff]
    %v1809 = vld [vmem:[#allocation8 + $0x344] sm:$0xf]
    %v1810 = vld [vmem:[#allocation8 + $0x348] sm:$0xff]
    %v1811 = vld [vmem:[#allocation8 + $0x350] sm:$0xf]
    %v1812 = vld [vmem:[#allocation8 + $0x354] sm:$0xff]
    %v1813 = vld [vmem:[#allocation8 + $0x35c] sm:$0xf]
    %v1814 = vld [vmem:[#allocation8 + $0x360] sm:$0xff]
    %v1815 = vld [vmem:[#allocation8 + $0x368] sm:$0xf]
    %v1816 = vld [vmem:[#allocation8 + $0x36c] sm:$0xff]
    %v1817 = vld [vmem:[#allocation8 + $0x374] sm:$0xf]
    %v1818 = vld [vmem:[#allocation8 + $0x378] sm:$0xff]
    %v1819 = vld [vmem:[#allocation8 + $0x380] sm:$0xf]
    %v1820 = vld [vmem:[#allocation8 + $0x384] sm:$0xff]
    %v1821 = vld [vmem:[#allocation8 + $0x38c] sm:$0xf]
    %v1822 = vld [vmem:[#allocation8 + $0x390] sm:$0xff]
    %v1823 = vld [vmem:[#allocation8 + $0x398] sm:$0xf]
    %v1824 = vld [vmem:[#allocation8 + $0x39c] sm:$0xff]
    %v1825 = vld [vmem:[#allocation8 + $0x3a4] sm:$0xf]
    %v1826 = vld [vmem:[#allocation8 + $0x3a8] sm:$0xff]
    %v1827 = vld [vmem:[#allocation8 + $0x3b0] sm:$0xf]
    %v1828 = vld [vmem:[#allocation8 + $0x3b4] sm:$0xff]
    %v1829 = vld [vmem:[#allocation8 + $0x3bc] sm:$0xf]
    %v1830 = vld [vmem:[#allocation8 + $0x3c0] sm:$0xff]
    %v1831 = vld [vmem:[#allocation8 + $0x3c8] sm:$0xf]
    %v1832 = vld [vmem:[#allocation8 + $0x3cc] sm:$0xff]
    %v1833 = vld [vmem:[#allocation8 + $0x3d4] sm:$0xf]
    %v1834 = vld [vmem:[#allocation8 + $0x3d8] sm:$0xff]
    %v1835 = vld [vmem:[#allocation8 + $0x3e0] sm:$0xf]
    %v1836 = vld [vmem:[#allocation8 + $0x3e4] sm:$0xff]
    %v1837 = vld [vmem:[#allocation8 + $0x3ec] sm:$0xf]
    %v1838 = vld [vmem:[#allocation8 + $0x3f0] sm:$0xff]
    %v1839 = vld [vmem:[#allocation8 + $0x3f8] sm:$0xf]
    %v1840 = vld [vmem:[#allocation8 + $0x3fc] sm:$0xff]
    %v1841 = vld [vmem:[#allocation8 + $0x404] sm:$0xf]
    %v1842 = vld [vmem:[#allocation8 + $0x408] sm:$0xff]
    %v1843 = vld [vmem:[#allocation8 + $0x410] sm:$0xf]
    %v1844 = vld [vmem:[#allocation8 + $0x414] sm:$0xff]
    %v1845 = vld [vmem:[#allocation8 + $0x41c] sm:$0xf]
    %v1846 = vld [vmem:[#allocation8 + $0x420] sm:$0xff]
    %v1847 = vld [vmem:[#allocation8 + $0x428] sm:$0xf]
    %v1848 = vld [vmem:[#allocation8 + $0x42c] sm:$0xff]
    %v1849 = vld [vmem:[#allocation8 + $0x434] sm:$0xf]
    %v1850 = vld [vmem:[#allocation8 + $0x438] sm:$0xff]
    %v1851 = vld [vmem:[#allocation8 + $0x440] sm:$0xf]
    %v1852 = vld [vmem:[#allocation8 + $0x444] sm:$0xff]
    %v1853 = vld [vmem:[#allocation8 + $0x44c] sm:$0xf]
    %v1854 = vld [vmem:[#allocation8 + $0x450] sm:$0xff]
    %v1855 = vld [vmem:[#allocation8 + $0x458] sm:$0xf]
    %v1856 = vld [vmem:[#allocation8 + $0x45c] sm:$0xff]
    %v1857 = vld [vmem:[#allocation8 + $0x464] sm:$0xf]
    %v1858 = vld [vmem:[#allocation8 + $0x468] sm:$0xff]
    %v1859 = vld [vmem:[#allocation8 + $0x470] sm:$0xf]
    %v1860 = vld [vmem:[#allocation8 + $0x474] sm:$0xff]
    %v1861 = vld [vmem:[#allocation8 + $0x47c] sm:$0xf]
    %v1862 = vld [vmem:[#allocation8 + $0x480] sm:$0xff]
    %v1863 = vld [vmem:[#allocation8 + $0x488] sm:$0xf]
    %v1864 = vld [vmem:[#allocation8 + $0x48c] sm:$0xff]
    %v1865 = vld [vmem:[#allocation8 + $0x494] sm:$0xf]
    %v1866 = vld [vmem:[#allocation8 + $0x498] sm:$0xff]
    %v1867 = vld [vmem:[#allocation8 + $0x4a0] sm:$0xf]
    %v1868 = vld [vmem:[#allocation8 + $0x4a4] sm:$0xff]
    %v1869 = vld [vmem:[#allocation8 + $0x4ac] sm:$0xf]
    %v1870 = vld [vmem:[#allocation8 + $0x4b0] sm:$0xff]
    %v1871 = vld [vmem:[#allocation8 + $0x4b8] sm:$0xf]
    %v1872 = vld [vmem:[#allocation8 + $0x4bc] sm:$0xff]
    %v1873 = vld [vmem:[#allocation8 + $0x4c4] sm:$0xf]
    %v1874 = vld [vmem:[#allocation8 + $0x4c8] sm:$0xff]
    %v1875 = vld [vmem:[#allocation8 + $0x4d0] sm:$0xf]
    %v1876 = vld [vmem:[#allocation8 + $0x4d4] sm:$0xff]
    %v1877 = vld [vmem:[#allocation8 + $0x4dc] sm:$0xf]
    %v1878 = vld [vmem:[#allocation8 + $0x4e0] sm:$0xff]
    %v1879 = vld [vmem:[#allocation8 + $0x4e8] sm:$0xf]
    %v1880 = vld [vmem:[#allocation8 + $0x4ec] sm:$0xff]
    %v1881 = vld [vmem:[#allocation8 + $0x4f4] sm:$0xf]
    %v1882 = vld [vmem:[#allocation8 + $0x4f8] sm:$0xff]
    %v1883 = vld [vmem:[#allocation8 + $0x500] sm:$0xf]
    %v1884 = vld [vmem:[#allocation8 + $0x504] sm:$0xff]
    %v1885 = vld [vmem:[#allocation8 + $0x50c] sm:$0xf]
    %v1886 = vld [vmem:[#allocation8 + $0x510] sm:$0xff]
    %v1887 = vld [vmem:[#allocation8 + $0x518] sm:$0xf]
    %v1888 = vld [vmem:[#allocation8 + $0x51c] sm:$0xff]
    %v1889 = vld [vmem:[#allocation8 + $0x524] sm:$0xf]
    %v1890 = vld [vmem:[#allocation8 + $0x528] sm:$0xff]
    %v1891 = vld [vmem:[#allocation8 + $0x530] sm:$0xf]
    %v1892 = vld [vmem:[#allocation8 + $0x534] sm:$0xff]
    %v1893 = vld [vmem:[#allocation8 + $0x53c] sm:$0xf]
    %v1894 = vld [vmem:[#allocation8 + $0x540] sm:$0xff]
    %v1895 = vld [vmem:[#allocation8 + $0x548] sm:$0xf]
    %v1896 = vld [vmem:[#allocation8 + $0x54c] sm:$0xff]
    %v1897 = vld [vmem:[#allocation8 + $0x554] sm:$0xf]
    %v1898 = vld [vmem:[#allocation8 + $0x558] sm:$0xff]
    %v1899 = vld [vmem:[#allocation8 + $0x560] sm:$0xf]
    %v1900 = vld [vmem:[#allocation8 + $0x564] sm:$0xff]
    %v1901 = vld [vmem:[#allocation8 + $0x56c] sm:$0xf]
    %v1902 = vld [vmem:[#allocation8 + $0x570] sm:$0xff]
    %v1903 = vld [vmem:[#allocation8 + $0x578] sm:$0xf]
    %v1904 = vld [vmem:[#allocation8 + $0x57c] sm:$0xff]
    %v1905 = vld [vmem:[#allocation8 + $0x584] sm:$0xf]
    %v1906 = vld [vmem:[#allocation8 + $0x588] sm:$0xff]
    %v1907 = vld [vmem:[#allocation8 + $0x590] sm:$0xf]
    %v1908 = vld [vmem:[#allocation8 + $0x594] sm:$0xff]
    %v1909 = vld [vmem:[#allocation8 + $0x59c] sm:$0xf]
    %v1910 = vld [vmem:[#allocation8 + $0x5a0] sm:$0xff]
    %v1911 = vld [vmem:[#allocation8 + $0x5a8] sm:$0xf]
    %v1912 = vld [vmem:[#allocation8 + $0x5ac] sm:$0xff]
    %v1913 = vld [vmem:[#allocation8 + $0x5b4] sm:$0xf]
    %v1914 = vld [vmem:[#allocation8 + $0x5b8] sm:$0xff]
    %v1915 = vld [vmem:[#allocation8 + $0x5c0] sm:$0xf]
    %v1916 = vld [vmem:[#allocation8 + $0x5c4] sm:$0xff]
    %v1917 = vld [vmem:[#allocation8 + $0x5cc] sm:$0xf]
    %v1918 = vld [vmem:[#allocation8 + $0x5d0] sm:$0xff]
    %v1919 = vld [vmem:[#allocation8 + $0x5d8] sm:$0xf]
    %v1920 = vld [vmem:[#allocation8 + $0x5dc] sm:$0xff]
    %v1921 = vld [vmem:[#allocation8 + $0x5e4] sm:$0xf]
    %v1922 = vld [vmem:[#allocation8 + $0x5e8] sm:$0xff]
    %v1923 = vld [vmem:[#allocation8 + $0x5f0] sm:$0xf]
    %v1924 = vld [vmem:[#allocation8 + $0x5f4] sm:$0xff]
    %v1925 = vld [vmem:[#allocation8 + $0x5fc] sm:$0xf]
    %v2054 = vunpack.c.l.b16 %v1798
    %v2055 = vunpack.c.h.b16 %v1798
    %v2056 = vunpack.c.l.b16 %v1799
    %v2057 = vunpack.c.l.b16 %v1800
    %v2058 = vunpack.c.h.b16 %v1800
    %v2059 = vunpack.c.l.b16 %v1801
    %v2060 = vunpack.c.l.b16 %v1802
    %v2061 = vunpack.c.h.b16 %v1802
    %v2062 = vunpack.c.l.b16 %v1803
    %v2063 = vunpack.c.l.b16 %v1804
    %v2064 = vunpack.c.h.b16 %v1804
    %v2065 = vunpack.c.l.b16 %v1805
    %v2066 = vunpack.c.l.b16 %v1806
    %v2067 = vunpack.c.h.b16 %v1806
    %v2068 = vunpack.c.l.b16 %v1807
    %v2069 = vunpack.c.l.b16 %v1808
    %v2070 = vunpack.c.h.b16 %v1808
    %v2071 = vunpack.c.l.b16 %v1809
    %v2072 = vunpack.c.l.b16 %v1810
    %v2073 = vunpack.c.h.b16 %v1810
    %v2074 = vunpack.c.l.b16 %v1811
    %v2075 = vunpack.c.l.b16 %v1812
    %v2076 = vunpack.c.h.b16 %v1812
    %v2077 = vunpack.c.l.b16 %v1813
    %v2078 = vunpack.c.l.b16 %v1814
    %v2079 = vunpack.c.h.b16 %v1814
    %v2080 = vunpack.c.l.b16 %v1815
    %v2081 = vunpack.c.l.b16 %v1816
    %v2082 = vunpack.c.h.b16 %v1816
    %v2083 = vunpack.c.l.b16 %v1817
    %v2084 = vunpack.c.l.b16 %v1818
    %v2085 = vunpack.c.h.b16 %v1818
    %v2086 = vunpack.c.l.b16 %v1819
    %v2087 = vunpack.c.l.b16 %v1820
    %v2088 = vunpack.c.h.b16 %v1820
    %v2089 = vunpack.c.l.b16 %v1821
    %v2090 = vunpack.c.l.b16 %v1822
    %v2091 = vunpack.c.h.b16 %v1822
    %v2092 = vunpack.c.l.b16 %v1823
    %v2093 = vunpack.c.l.b16 %v1824
    %v2094 = vunpack.c.h.b16 %v1824
    %v2095 = vunpack.c.l.b16 %v1825
    %v2096 = vunpack.c.l.b16 %v1826
    %v2097 = vunpack.c.h.b16 %v1826
    %v2098 = vunpack.c.l.b16 %v1827
    %v2099 = vunpack.c.l.b16 %v1828
    %v2100 = vunpack.c.h.b16 %v1828
    %v2101 = vunpack.c.l.b16 %v1829
    %v2102 = vunpack.c.l.b16 %v1830
    %v2103 = vunpack.c.h.b16 %v1830
    %v2104 = vunpack.c.l.b16 %v1831
    %v2105 = vunpack.c.l.b16 %v1832
    %v2106 = vunpack.c.h.b16 %v1832
    %v2107 = vunpack.c.l.b16 %v1833
    %v2108 = vunpack.c.l.b16 %v1834
    %v2109 = vunpack.c.h.b16 %v1834
    %v2110 = vunpack.c.l.b16 %v1835
    %v2111 = vunpack.c.l.b16 %v1836
    %v2112 = vunpack.c.h.b16 %v1836
    %v2113 = vunpack.c.l.b16 %v1837
    %v2114 = vunpack.c.l.b16 %v1838
    %v2115 = vunpack.c.h.b16 %v1838
    %v2116 = vunpack.c.l.b16 %v1839
    %v2117 = vunpack.c.l.b16 %v1840
    %v2118 = vunpack.c.h.b16 %v1840
    %v2119 = vunpack.c.l.b16 %v1841
    %v2120 = vunpack.c.l.b16 %v1842
    %v2121 = vunpack.c.h.b16 %v1842
    %v2122 = vunpack.c.l.b16 %v1843
    %v2123 = vunpack.c.l.b16 %v1844
    %v2124 = vunpack.c.h.b16 %v1844
    %v2125 = vunpack.c.l.b16 %v1845
    %v2126 = vunpack.c.l.b16 %v1846
    %v2127 = vunpack.c.h.b16 %v1846
    %v2128 = vunpack.c.l.b16 %v1847
    %v2129 = vunpack.c.l.b16 %v1848
    %v2130 = vunpack.c.h.b16 %v1848
    %v2131 = vunpack.c.l.b16 %v1849
    %v2132 = vunpack.c.l.b16 %v1850
    %v2133 = vunpack.c.h.b16 %v1850
    %v2134 = vunpack.c.l.b16 %v1851
    %v2135 = vunpack.c.l.b16 %v1852
    %v2136 = vunpack.c.h.b16 %v1852
    %v2137 = vunpack.c.l.b16 %v1853
    %v2138 = vunpack.c.l.b16 %v1854
    %v2139 = vunpack.c.h.b16 %v1854
    %v2140 = vunpack.c.l.b16 %v1855
    %v2141 = vunpack.c.l.b16 %v1856
    %v2142 = vunpack.c.h.b16 %v1856
    %v2143 = vunpack.c.l.b16 %v1857
    %v2144 = vunpack.c.l.b16 %v1858
    %v2145 = vunpack.c.h.b16 %v1858
    %v2146 = vunpack.c.l.b16 %v1859
    %v2147 = vunpack.c.l.b16 %v1860
    %v2148 = vunpack.c.h.b16 %v1860
    %v2149 = vunpack.c.l.b16 %v1861
    %v2150 = vunpack.c.l.b16 %v1862
    %v2151 = vunpack.c.h.b16 %v1862
    %v2152 = vunpack.c.l.b16 %v1863
    %v2153 = vunpack.c.l.b16 %v1864
    %v2154 = vunpack.c.h.b16 %v1864
    %v2155 = vunpack.c.l.b16 %v1865
    %v2156 = vunpack.c.l.b16 %v1866
    %v2157 = vunpack.c.h.b16 %v1866
    %v2158 = vunpack.c.l.b16 %v1867
    %v2159 = vunpack.c.l.b16 %v1868
    %v2160 = vunpack.c.h.b16 %v1868
    %v2161 = vunpack.c.l.b16 %v1869
    %v2162 = vunpack.c.l.b16 %v1870
    %v2163 = vunpack.c.h.b16 %v1870
    %v2164 = vunpack.c.l.b16 %v1871
    %v2165 = vunpack.c.l.b16 %v1872
    %v2166 = vunpack.c.h.b16 %v1872
    %v2167 = vunpack.c.l.b16 %v1873
    %v2168 = vunpack.c.l.b16 %v1874
    %v2169 = vunpack.c.h.b16 %v1874
    %v2170 = vunpack.c.l.b16 %v1875
    %v2171 = vunpack.c.l.b16 %v1876
    %v2172 = vunpack.c.h.b16 %v1876
    %v2173 = vunpack.c.l.b16 %v1877
    %v2174 = vunpack.c.l.b16 %v1878
    %v2175 = vunpack.c.h.b16 %v1878
    %v2176 = vunpack.c.l.b16 %v1879
    %v2177 = vunpack.c.l.b16 %v1880
    %v2178 = vunpack.c.h.b16 %v1880
    %v2179 = vunpack.c.l.b16 %v1881
    %v2180 = vunpack.c.l.b16 %v1882
    %v2181 = vunpack.c.h.b16 %v1882
    %v2182 = vunpack.c.l.b16 %v1883
    %v2183 = vunpack.c.l.b16 %v1884
    %v2184 = vunpack.c.h.b16 %v1884
    %v2185 = vunpack.c.l.b16 %v1885
    %v2186 = vunpack.c.l.b16 %v1886
    %v2187 = vunpack.c.h.b16 %v1886
    %v2188 = vunpack.c.l.b16 %v1887
    %v2189 = vunpack.c.l.b16 %v1888
    %v2190 = vunpack.c.h.b16 %v1888
    %v2191 = vunpack.c.l.b16 %v1889
    %v2192 = vunpack.c.l.b16 %v1890
    %v2193 = vunpack.c.h.b16 %v1890
    %v2194 = vunpack.c.l.b16 %v1891
    %v2195 = vunpack.c.l.b16 %v1892
    %v2196 = vunpack.c.h.b16 %v1892
    %v2197 = vunpack.c.l.b16 %v1893
    %v2198 = vunpack.c.l.b16 %v1894
    %v2199 = vunpack.c.h.b16 %v1894
    %v2200 = vunpack.c.l.b16 %v1895
    %v2201 = vunpack.c.l.b16 %v1896
    %v2202 = vunpack.c.h.b16 %v1896
    %v2203 = vunpack.c.l.b16 %v1897
    %v2204 = vunpack.c.l.b16 %v1898
    %v2205 = vunpack.c.h.b16 %v1898
    %v2206 = vunpack.c.l.b16 %v1899
    %v2207 = vunpack.c.l.b16 %v1900
    %v2208 = vunpack.c.h.b16 %v1900
    %v2209 = vunpack.c.l.b16 %v1901
    %v2210 = vunpack.c.l.b16 %v1902
    %v2211 = vunpack.c.h.b16 %v1902
    %v2212 = vunpack.c.l.b16 %v1903
    %v2213 = vunpack.c.l.b16 %v1904
    %v2214 = vunpack.c.h.b16 %v1904
    %v2215 = vunpack.c.l.b16 %v1905
    %v2216 = vunpack.c.l.b16 %v1906
    %v2217 = vunpack.c.h.b16 %v1906
    %v2218 = vunpack.c.l.b16 %v1907
    %v2219 = vunpack.c.l.b16 %v1908
    %v2220 = vunpack.c.h.b16 %v1908
    %v2221 = vunpack.c.l.b16 %v1909
    %v2222 = vunpack.c.l.b16 %v1910
    %v2223 = vunpack.c.h.b16 %v1910
    %v2224 = vunpack.c.l.b16 %v1911
    %v2225 = vunpack.c.l.b16 %v1912
    %v2226 = vunpack.c.h.b16 %v1912
    %v2227 = vunpack.c.l.b16 %v1913
    %v2228 = vunpack.c.l.b16 %v1914
    %v2229 = vunpack.c.h.b16 %v1914
    %v2230 = vunpack.c.l.b16 %v1915
    %v2231 = vunpack.c.l.b16 %v1916
    %v2232 = vunpack.c.h.b16 %v1916
    %v2233 = vunpack.c.l.b16 %v1917
    %v2234 = vunpack.c.l.b16 %v1918
    %v2235 = vunpack.c.h.b16 %v1918
    %v2236 = vunpack.c.l.b16 %v1919
    %v2237 = vunpack.c.l.b16 %v1920
    %v2238 = vunpack.c.h.b16 %v1920
    %v2239 = vunpack.c.l.b16 %v1921
    %v2240 = vunpack.c.l.b16 %v1922
    %v2241 = vunpack.c.h.b16 %v1922
    %v2242 = vunpack.c.l.b16 %v1923
    %v2243 = vunpack.c.l.b16 %v1924
    %v2244 = vunpack.c.h.b16 %v1924
    %v2245 = vunpack.c.l.b16 %v1925
    %v2246 = vpack.c.b16 %v2057, %v2054
    %v2247 = vpack.c.b16 %v2058, %v2055
    %v2248 = vpack.c.b16 %v2059, %v2056
    %v2249 = vpack.c.b16 %v2063, %v2060
    %v2250 = vpack.c.b16 %v2064, %v2061
    %v2251 = vpack.c.b16 %v2065, %v2062
    %v2252 = vpack.c.b16 %v2069, %v2066
    %v2253 = vpack.c.b16 %v2070, %v2067
    %v2254 = vpack.c.b16 %v2071, %v2068
    %v2255 = vpack.c.b16 %v2075, %v2072
    %v2256 = vpack.c.b16 %v2076, %v2073
    %v2257 = vpack.c.b16 %v2077, %v2074
    %v2258 = vpack.c.b16 %v2081, %v2078
    %v2259 = vpack.c.b16 %v2082, %v2079
    %v2260 = vpack.c.b16 %v2083, %v2080
    %v2261 = vpack.c.b16 %v2087, %v2084
    %v2262 = vpack.c.b16 %v2088, %v2085
    %v2263 = vpack.c.b16 %v2089, %v2086
    %v2264 = vpack.c.b16 %v2093, %v2090
    %v2265 = vpack.c.b16 %v2094, %v2091
    %v2266 = vpack.c.b16 %v2095, %v2092
    %v2267 = vpack.c.b16 %v2099, %v2096
    %v2268 = vpack.c.b16 %v2100, %v2097
    %v2269 = vpack.c.b16 %v2101, %v2098
    %v2270 = vpack.c.b16 %v2105, %v2102
    %v2271 = vpack.c.b16 %v2106, %v2103
    %v2272 = vpack.c.b16 %v2107, %v2104
    %v2273 = vpack.c.b16 %v2111, %v2108
    %v2274 = vpack.c.b16 %v2112, %v2109
    %v2275 = vpack.c.b16 %v2113, %v2110
    %v2276 = vpack.c.b16 %v2117, %v2114
    %v2277 = vpack.c.b16 %v2118, %v2115
    %v2278 = vpack.c.b16 %v2119, %v2116
    %v2279 = vpack.c.b16 %v2123, %v2120
    %v2280 = vpack.c.b16 %v2124, %v2121
    %v2281 = vpack.c.b16 %v2125, %v2122
    %v2282 = vpack.c.b16 %v2129, %v2126
    %v2283 = vpack.c.b16 %v2130, %v2127
    %v2284 = vpack.c.b16 %v2131, %v2128
    %v2285 = vpack.c.b16 %v2135, %v2132
    %v2286 = vpack.c.b16 %v2136, %v2133
    %v2287 = vpack.c.b16 %v2137, %v2134
    %v2288 = vpack.c.b16 %v2141, %v2138
    %v2289 = vpack.c.b16 %v2142, %v2139
    %v2290 = vpack.c.b16 %v2143, %v2140
    %v2291 = vpack.c.b16 %v2147, %v2144
    %v2292 = vpack.c.b16 %v2148, %v2145
    %v2293 = vpack.c.b16 %v2149, %v2146
    %v2294 = vpack.c.b16 %v2153, %v2150
    %v2295 = vpack.c.b16 %v2154, %v2151
    %v2296 = vpack.c.b16 %v2155, %v2152
    %v2297 = vpack.c.b16 %v2159, %v2156
    %v2298 = vpack.c.b16 %v2160, %v2157
    %v2299 = vpack.c.b16 %v2161, %v2158
    %v2300 = vpack.c.b16 %v2165, %v2162
    %v2301 = vpack.c.b16 %v2166, %v2163
    %v2302 = vpack.c.b16 %v2167, %v2164
    %v2303 = vpack.c.b16 %v2171, %v2168
    %v2304 = vpack.c.b16 %v2172, %v2169
    %v2305 = vpack.c.b16 %v2173, %v2170
    %v2306 = vpack.c.b16 %v2177, %v2174
    %v2307 = vpack.c.b16 %v2178, %v2175
    %v2308 = vpack.c.b16 %v2179, %v2176
    %v2309 = vpack.c.b16 %v2183, %v2180
    %v2310 = vpack.c.b16 %v2184, %v2181
    %v2311 = vpack.c.b16 %v2185, %v2182
    %v2312 = vpack.c.b16 %v2189, %v2186
    %v2313 = vpack.c.b16 %v2190, %v2187
    %v2314 = vpack.c.b16 %v2191, %v2188
    %v2315 = vpack.c.b16 %v2195, %v2192
    %v2316 = vpack.c.b16 %v2196, %v2193
    %v2317 = vpack.c.b16 %v2197, %v2194
    %v2318 = vpack.c.b16 %v2201, %v2198
    %v2319 = vpack.c.b16 %v2202, %v2199
    %v2320 = vpack.c.b16 %v2203, %v2200
    %v2321 = vpack.c.b16 %v2207, %v2204
    %v2322 = vpack.c.b16 %v2208, %v2205
    %v2323 = vpack.c.b16 %v2209, %v2206
    %v2324 = vpack.c.b16 %v2213, %v2210
    %v2325 = vpack.c.b16 %v2214, %v2211
    %v2326 = vpack.c.b16 %v2215, %v2212
    %v2327 = vpack.c.b16 %v2219, %v2216
    %v2328 = vpack.c.b16 %v2220, %v2217
    %v2329 = vpack.c.b16 %v2221, %v2218
    %v2330 = vpack.c.b16 %v2225, %v2222
    %v2331 = vpack.c.b16 %v2226, %v2223
    %v2332 = vpack.c.b16 %v2227, %v2224
    %v2333 = vpack.c.b16 %v2231, %v2228
    %v2334 = vpack.c.b16 %v2232, %v2229
    %v2335 = vpack.c.b16 %v2233, %v2230
    %v2336 = vpack.c.b16 %v2237, %v2234
    %v2337 = vpack.c.b16 %v2238, %v2235
    %v2338 = vpack.c.b16 %v2239, %v2236
    %v2339 = vpack.c.b16 %v2243, %v2240
    %v2340 = vpack.c.b16 %v2244, %v2241
    %v2341 = vpack.c.b16 %v2245, %v2242
    %2438 = vmatprep.subr.bf16.mxu0 %v2268
    %2439 = vmatpush1.bf16.msra.mxu0 %v2267
    %2440 = vmatprep.subr.bf16.mxu0 %v2265
    %2441 = vmatpush1.bf16.msra.mxu0 %v2264
    %2442 = vmatprep.subr.bf16.mxu0 %v2262
    %2443 = vmatpush1.bf16.msra.mxu0 %v2261
    %2444 = vmatprep.subr.bf16.mxu0 %v2259
    %2445 = vmatpush1.bf16.msra.mxu0 %v2258
    %2446 = vmatprep.subr.bf16.mxu0 %v2256
    %2447 = vmatpush1.bf16.msra.mxu0 %v2255
    %2448 = vmatprep.subr.bf16.mxu0 %v2253
    %2449 = vmatpush1.bf16.msra.mxu0 %v2252
    %2450 = vmatprep.subr.bf16.mxu0 %v2250
    %2451 = vmatpush1.bf16.msra.mxu0 %v2249
    %2452 = vmatprep.subr.bf16.mxu0 %v2247
    %2453 = vmatpush1.bf16.msra.mxu0 %v2246
    %2454 = vmatprep.subr.bf16.mxu0 %v2292
    %2455 = vmatpush2.bf16.msra.mxu0 %v2291
    %2456 = vmatprep.subr.bf16.mxu0 %v2289
    %2457 = vmatpush2.bf16.msra.mxu0 %v2288
    %2458 = vmatprep.subr.bf16.mxu0 %v2286
    %2459 = vmatpush2.bf16.msra.mxu0 %v2285
    %2460 = vmatprep.subr.bf16.mxu0 %v2283
    %2461 = vmatpush2.bf16.msra.mxu0 %v2282
    %2462 = vmatprep.subr.bf16.mxu0 %v2280
    %2463 = vmatpush2.bf16.msra.mxu0 %v2279
    %2464 = vmatprep.subr.bf16.mxu0 %v2277
    %2465 = vmatpush2.bf16.msra.mxu0 %v2276
    %2466 = vmatprep.subr.bf16.mxu0 %v2274
    %2467 = vmatpush2.bf16.msra.mxu0 %v2273
    %2468 = vmatprep.subr.bf16.mxu0 %v2271
    %2469 = vmatpush2.bf16.msra.mxu0 %v2270
    %2470 = vmatprep.mubr.bf16.mxu0 %v1795
    %2471 = vmatmul.mubr.bf16.gmra.mxu0 %v1794
    %v2472 = vpop.f32.mrf.mxu0
    %v2473 = vadd.f32 0.0, %v2472
    %v2474 = vpop.f32.mrf.mxu0
    %v2475 = vadd.f32 0.0, %v2474
    %v2476 = vpop.f32.mrf.mxu0
    %v2477 = vadd.f32 0.0, %v2476
    %v2478 = vpop.f32.mrf.mxu0
    %v2479 = vadd.f32 0.0, %v2478
    %2480 = vdwg.mxu0
    %2481 = vmatprep.subr.bf16.mxu0 %v2316
    %2482 = vmatpush1.bf16.msra.mxu0 %v2315
    %2483 = vmatprep.subr.bf16.mxu0 %v2313
    %2484 = vmatpush1.bf16.msra.mxu0 %v2312
    %2485 = vmatprep.subr.bf16.mxu0 %v2310
    %2486 = vmatpush1.bf16.msra.mxu0 %v2309
    %2487 = vmatprep.subr.bf16.mxu0 %v2307
    %2488 = vmatpush1.bf16.msra.mxu0 %v2306
    %2489 = vmatprep.subr.bf16.mxu0 %v2304
    %2490 = vmatpush1.bf16.msra.mxu0 %v2303
    %2491 = vmatprep.subr.bf16.mxu0 %v2301
    %2492 = vmatpush1.bf16.msra.mxu0 %v2300
    %2493 = vmatprep.subr.bf16.mxu0 %v2298
    %2494 = vmatpush1.bf16.msra.mxu0 %v2297
    %2495 = vmatprep.subr.bf16.mxu0 %v2295
    %2496 = vmatpush1.bf16.msra.mxu0 %v2294
    %2497 = vmatprep.subr.bf16.mxu0 %v2340
    %2498 = vmatpush2.bf16.msra.mxu0 %v2339
    %2499 = vmatprep.subr.bf16.mxu0 %v2337
    %2500 = vmatpush2.bf16.msra.mxu0 %v2336
    %2501 = vmatprep.subr.bf16.mxu0 %v2334
    %2502 = vmatpush2.bf16.msra.mxu0 %v2333
    %2503 = vmatprep.subr.bf16.mxu0 %v2331
    %2504 = vmatpush2.bf16.msra.mxu0 %v2330
    %2505 = vmatprep.subr.bf16.mxu0 %v2328
    %2506 = vmatpush2.bf16.msra.mxu0 %v2327
    %2507 = vmatprep.subr.bf16.mxu0 %v2325
    %2508 = vmatpush2.bf16.msra.mxu0 %v2324
    %2509 = vmatprep.subr.bf16.mxu0 %v2322
    %2510 = vmatpush2.bf16.msra.mxu0 %v2321
    %2511 = vmatprep.subr.bf16.mxu0 %v2319
    %2512 = vmatpush2.bf16.msra.mxu0 %v2318
    %2513 = vmatprep.mubr.bf16.mxu0 %v1797
    %2514 = vmatmul.mubr.bf16.gmra.mxu0 %v1796
    %v2515 = vpop.f32.mrf.mxu0
    %v2516 = vadd.f32 %v2473, %v2515
    %v2517 = vpop.f32.mrf.mxu0
    %v2518 = vadd.f32 %v2475, %v2517
    %v2519 = vpop.f32.mrf.mxu0
    %v2520 = vadd.f32 %v2477, %v2519
    %v2521 = vpop.f32.mrf.mxu0
    %v2522 = vadd.f32 %v2479, %v2521
    %2523 = vdwg.mxu0
    %2524 = vmatprep.subr.bf16.mxu0 0
    %2525 = vmatpush1.bf16.msra.mxu0 %v2269
    %2526 = vmatprep.subr.bf16.mxu0 0
    %2527 = vmatpush1.bf16.msra.mxu0 %v2266
    %2528 = vmatprep.subr.bf16.mxu0 0
    %2529 = vmatpush1.bf16.msra.mxu0 %v2263
    %2530 = vmatprep.subr.bf16.mxu0 0
    %2531 = vmatpush1.bf16.msra.mxu0 %v2260
    %2532 = vmatprep.subr.bf16.mxu0 0
    %2533 = vmatpush1.bf16.msra.mxu0 %v2257
    %2534 = vmatprep.subr.bf16.mxu0 0
    %2535 = vmatpush1.bf16.msra.mxu0 %v2254
    %2536 = vmatprep.subr.bf16.mxu0 0
    %2537 = vmatpush1.bf16.msra.mxu0 %v2251
    %2538 = vmatprep.subr.bf16.mxu0 0
    %2539 = vmatpush1.bf16.msra.mxu0 %v2248
    %2540 = vmatprep.subr.bf16.mxu0 0
    %2541 = vmatpush2.bf16.msra.mxu0 %v2293
    %2542 = vmatprep.subr.bf16.mxu0 0
    %2543 = vmatpush2.bf16.msra.mxu0 %v2290
    %2544 = vmatprep.subr.bf16.mxu0 0
    %2545 = vmatpush2.bf16.msra.mxu0 %v2287
    %2546 = vmatprep.subr.bf16.mxu0 0
    %2547 = vmatpush2.bf16.msra.mxu0 %v2284
    %2548 = vmatprep.subr.bf16.mxu0 0
    %2549 = vmatpush2.bf16.msra.mxu0 %v2281
    %2550 = vmatprep.subr.bf16.mxu0 0
    %2551 = vmatpush2.bf16.msra.mxu0 %v2278
    %2552 = vmatprep.subr.bf16.mxu0 0
    %2553 = vmatpush2.bf16.msra.mxu0 %v2275
    %2554 = vmatprep.subr.bf16.mxu0 0
    %2555 = vmatpush2.bf16.msra.mxu0 %v2272
    %2556 = vmatprep.mubr.bf16.mxu0 %v1795
    %2557 = vmatmul.mubr.bf16.gmra.mxu0 %v1794
    %v2558 = vpop.f32.mrf.mxu0
    %v2559 = vadd.f32 0.0, %v2558
    %v2560 = vpop.f32.mrf.mxu0
    %v2561 = vpop.f32.mrf.mxu0
    %v2562 = vadd.f32 0.0, %v2561
    %v2563 = vpop.f32.mrf.mxu0
    %2564 = vdwg.mxu0
    %2565 = vmatprep.subr.bf16.mxu0 0
    %2566 = vmatpush1.bf16.msra.mxu0 %v2317
    %2567 = vmatprep.subr.bf16.mxu0 0
    %2568 = vmatpush1.bf16.msra.mxu0 %v2314
    %2569 = vmatprep.subr.bf16.mxu0 0
    %2570 = vmatpush1.bf16.msra.mxu0 %v2311
    %2571 = vmatprep.subr.bf16.mxu0 0
    %2572 = vmatpush1.bf16.msra.mxu0 %v2308
    %2573 = vmatprep.subr.bf16.mxu0 0
    %2574 = vmatpush1.bf16.msra.mxu0 %v2305
    %2575 = vmatprep.subr.bf16.mxu0 0
    %2576 = vmatpush1.bf16.msra.mxu0 %v2302
    %2577 = vmatprep.subr.bf16.mxu0 0
    %2578 = vmatpush1.bf16.msra.mxu0 %v2299
    %2579 = vmatprep.subr.bf16.mxu0 0
    %2580 = vmatpush1.bf16.msra.mxu0 %v2296
    %2581 = vmatprep.subr.bf16.mxu0 0
    %2582 = vmatpush2.bf16.msra.mxu0 %v2341
    %2583 = vmatprep.subr.bf16.mxu0 0
    %2584 = vmatpush2.bf16.msra.mxu0 %v2338
    %2585 = vmatprep.subr.bf16.mxu0 0
    %2586 = vmatpush2.bf16.msra.mxu0 %v2335
    %2587 = vmatprep.subr.bf16.mxu0 0
    %2588 = vmatpush2.bf16.msra.mxu0 %v2332
    %2589 = vmatprep.subr.bf16.mxu0 0
    %2590 = vmatpush2.bf16.msra.mxu0 %v2329
    %2591 = vmatprep.subr.bf16.mxu0 0
    %2592 = vmatpush2.bf16.msra.mxu0 %v2326
    %2593 = vmatprep.subr.bf16.mxu0 0
    %2594 = vmatpush2.bf16.msra.mxu0 %v2323
    %2595 = vmatprep.subr.bf16.mxu0 0
    %2596 = vmatpush2.bf16.msra.mxu0 %v2320
    %2597 = vmatprep.mubr.bf16.mxu0 %v1797
    %2598 = vmatmul.mubr.bf16.gmra.mxu0 %v1796
    %v2599 = vpop.f32.mrf.mxu0
    %v2600 = vadd.f32 %v2559, %v2599
    %v2601 = vpop.f32.mrf.mxu0
    %v2602 = vpop.f32.mrf.mxu0
    %v2603 = vadd.f32 %v2562, %v2602
    %v2604 = vpop.f32.mrf.mxu0
    %2605 = vdwg.mxu0
    %v2734 = vunpack.c.l.b16 %v888
    %v2735 = vunpack.c.h.b16 %v888
    %v2736 = vunpack.c.l.b16 %v889
    %v2737 = vunpack.c.l.b16 %v890
    %v2738 = vunpack.c.h.b16 %v890
    %v2739 = vunpack.c.l.b16 %v891
    %v2740 = vunpack.c.l.b16 %v892
    %v2741 = vunpack.c.h.b16 %v892
    %v2742 = vunpack.c.l.b16 %v893
    %v2743 = vunpack.c.l.b16 %v894
    %v2744 = vunpack.c.h.b16 %v894
    %v2745 = vunpack.c.l.b16 %v895
    %v2746 = vunpack.c.l.b16 %v896
    %v2747 = vunpack.c.h.b16 %v896
    %v2748 = vunpack.c.l.b16 %v897
    %v2749 = vunpack.c.l.b16 %v898
    %v2750 = vunpack.c.h.b16 %v898
    %v2751 = vunpack.c.l.b16 %v899
    %v2752 = vunpack.c.l.b16 %v900
    %v2753 = vunpack.c.h.b16 %v900
    %v2754 = vunpack.c.l.b16 %v901
    %v2755 = vunpack.c.l.b16 %v902
    %v2756 = vunpack.c.h.b16 %v902
    %v2757 = vunpack.c.l.b16 %v903
    %v2758 = vunpack.c.l.b16 %v904
    %v2759 = vunpack.c.h.b16 %v904
    %v2760 = vunpack.c.l.b16 %v905
    %v2761 = vunpack.c.l.b16 %v906
    %v2762 = vunpack.c.h.b16 %v906
    %v2763 = vunpack.c.l.b16 %v907
    %v2764 = vunpack.c.l.b16 %v908
    %v2765 = vunpack.c.h.b16 %v908
    %v2766 = vunpack.c.l.b16 %v909
    %v2767 = vunpack.c.l.b16 %v910
    %v2768 = vunpack.c.h.b16 %v910
    %v2769 = vunpack.c.l.b16 %v911
    %v2770 = vunpack.c.l.b16 %v912
    %v2771 = vunpack.c.h.b16 %v912
    %v2772 = vunpack.c.l.b16 %v913
    %v2773 = vunpack.c.l.b16 %v914
    %v2774 = vunpack.c.h.b16 %v914
    %v2775 = vunpack.c.l.b16 %v915
    %v2776 = vunpack.c.l.b16 %v916
    %v2777 = vunpack.c.h.b16 %v916
    %v2778 = vunpack.c.l.b16 %v917
    %v2779 = vunpack.c.l.b16 %v918
    %v2780 = vunpack.c.h.b16 %v918
    %v2781 = vunpack.c.l.b16 %v919
    %v2782 = vunpack.c.l.b16 %v920
    %v2783 = vunpack.c.h.b16 %v920
    %v2784 = vunpack.c.l.b16 %v921
    %v2785 = vunpack.c.l.b16 %v922
    %v2786 = vunpack.c.h.b16 %v922
    %v2787 = vunpack.c.l.b16 %v923
    %v2788 = vunpack.c.l.b16 %v924
    %v2789 = vunpack.c.h.b16 %v924
    %v2790 = vunpack.c.l.b16 %v925
    %v2791 = vunpack.c.l.b16 %v926
    %v2792 = vunpack.c.h.b16 %v926
    %v2793 = vunpack.c.l.b16 %v927
    %v2794 = vunpack.c.l.b16 %v928
    %v2795 = vunpack.c.h.b16 %v928
    %v2796 = vunpack.c.l.b16 %v929
    %v2797 = vunpack.c.l.b16 %v930
    %v2798 = vunpack.c.h.b16 %v930
    %v2799 = vunpack.c.l.b16 %v931
    %v2800 = vunpack.c.l.b16 %v932
    %v2801 = vunpack.c.h.b16 %v932
    %v2802 = vunpack.c.l.b16 %v933
    %v2803 = vunpack.c.l.b16 %v934
    %v2804 = vunpack.c.h.b16 %v934
    %v2805 = vunpack.c.l.b16 %v935
    %v2806 = vunpack.c.l.b16 %v936
    %v2807 = vunpack.c.h.b16 %v936
    %v2808 = vunpack.c.l.b16 %v937
    %v2809 = vunpack.c.l.b16 %v938
    %v2810 = vunpack.c.h.b16 %v938
    %v2811 = vunpack.c.l.b16 %v939
    %v2812 = vunpack.c.l.b16 %v940
    %v2813 = vunpack.c.h.b16 %v940
    %v2814 = vunpack.c.l.b16 %v941
    %v2815 = vunpack.c.l.b16 %v942
    %v2816 = vunpack.c.h.b16 %v942
    %v2817 = vunpack.c.l.b16 %v943
    %v2818 = vunpack.c.l.b16 %v944
    %v2819 = vunpack.c.h.b16 %v944
    %v2820 = vunpack.c.l.b16 %v945
    %v2821 = vunpack.c.l.b16 %v946
    %v2822 = vunpack.c.h.b16 %v946
    %v2823 = vunpack.c.l.b16 %v947
    %v2824 = vunpack.c.l.b16 %v948
    %v2825 = vunpack.c.h.b16 %v948
    %v2826 = vunpack.c.l.b16 %v949
    %v2827 = vunpack.c.l.b16 %v950
    %v2828 = vunpack.c.h.b16 %v950
    %v2829 = vunpack.c.l.b16 %v951
    %v2830 = vunpack.c.l.b16 %v952
    %v2831 = vunpack.c.h.b16 %v952
    %v2832 = vunpack.c.l.b16 %v953
    %v2833 = vunpack.c.l.b16 %v954
    %v2834 = vunpack.c.h.b16 %v954
    %v2835 = vunpack.c.l.b16 %v955
    %v2836 = vunpack.c.l.b16 %v956
    %v2837 = vunpack.c.h.b16 %v956
    %v2838 = vunpack.c.l.b16 %v957
    %v2839 = vunpack.c.l.b16 %v958
    %v2840 = vunpack.c.h.b16 %v958
    %v2841 = vunpack.c.l.b16 %v959
    %v2842 = vunpack.c.l.b16 %v960
    %v2843 = vunpack.c.h.b16 %v960
    %v2844 = vunpack.c.l.b16 %v961
    %v2845 = vunpack.c.l.b16 %v962
    %v2846 = vunpack.c.h.b16 %v962
    %v2847 = vunpack.c.l.b16 %v963
    %v2848 = vunpack.c.l.b16 %v964
    %v2849 = vunpack.c.h.b16 %v964
    %v2850 = vunpack.c.l.b16 %v965
    %v2851 = vunpack.c.l.b16 %v966
    %v2852 = vunpack.c.h.b16 %v966
    %v2853 = vunpack.c.l.b16 %v967
    %v2854 = vunpack.c.l.b16 %v968
    %v2855 = vunpack.c.h.b16 %v968
    %v2856 = vunpack.c.l.b16 %v969
    %v2857 = vunpack.c.l.b16 %v970
    %v2858 = vunpack.c.h.b16 %v970
    %v2859 = vunpack.c.l.b16 %v971
    %v2860 = vunpack.c.l.b16 %v972
    %v2861 = vunpack.c.h.b16 %v972
    %v2862 = vunpack.c.l.b16 %v973
    %v2863 = vunpack.c.l.b16 %v974
    %v2864 = vunpack.c.h.b16 %v974
    %v2865 = vunpack.c.l.b16 %v975
    %v2866 = vunpack.c.l.b16 %v976
    %v2867 = vunpack.c.h.b16 %v976
    %v2868 = vunpack.c.l.b16 %v977
    %v2869 = vunpack.c.l.b16 %v978
    %v2870 = vunpack.c.h.b16 %v978
    %v2871 = vunpack.c.l.b16 %v979
    %v2872 = vunpack.c.l.b16 %v980
    %v2873 = vunpack.c.h.b16 %v980
    %v2874 = vunpack.c.l.b16 %v981
    %v2875 = vunpack.c.l.b16 %v982
    %v2876 = vunpack.c.h.b16 %v982
    %v2877 = vunpack.c.l.b16 %v983
    %v2878 = vunpack.c.l.b16 %v984
    %v2879 = vunpack.c.h.b16 %v984
    %v2880 = vunpack.c.l.b16 %v985
    %v2881 = vunpack.c.l.b16 %v986
    %v2882 = vunpack.c.h.b16 %v986
    %v2883 = vunpack.c.l.b16 %v987
    %v2884 = vunpack.c.l.b16 %v988
    %v2885 = vunpack.c.h.b16 %v988
    %v2886 = vunpack.c.l.b16 %v989
    %v2887 = vunpack.c.l.b16 %v990
    %v2888 = vunpack.c.h.b16 %v990
    %v2889 = vunpack.c.l.b16 %v991
    %v2890 = vunpack.c.l.b16 %v992
    %v2891 = vunpack.c.h.b16 %v992
    %v2892 = vunpack.c.l.b16 %v993
    %v2893 = vunpack.c.l.b16 %v994
    %v2894 = vunpack.c.h.b16 %v994
    %v2895 = vunpack.c.l.b16 %v995
    %v2896 = vunpack.c.l.b16 %v996
    %v2897 = vunpack.c.h.b16 %v996
    %v2898 = vunpack.c.l.b16 %v997
    %v2899 = vunpack.c.l.b16 %v998
    %v2900 = vunpack.c.h.b16 %v998
    %v2901 = vunpack.c.l.b16 %v999
    %v2902 = vunpack.c.l.b16 %v1000
    %v2903 = vunpack.c.h.b16 %v1000
    %v2904 = vunpack.c.l.b16 %v1001
    %v2905 = vunpack.c.l.b16 %v1002
    %v2906 = vunpack.c.h.b16 %v1002
    %v2907 = vunpack.c.l.b16 %v1003
    %v2908 = vunpack.c.l.b16 %v1004
    %v2909 = vunpack.c.h.b16 %v1004
    %v2910 = vunpack.c.l.b16 %v1005
    %v2911 = vunpack.c.l.b16 %v1006
    %v2912 = vunpack.c.h.b16 %v1006
    %v2913 = vunpack.c.l.b16 %v1007
    %v2914 = vunpack.c.l.b16 %v1008
    %v2915 = vunpack.c.h.b16 %v1008
    %v2916 = vunpack.c.l.b16 %v1009
    %v2917 = vunpack.c.l.b16 %v1010
    %v2918 = vunpack.c.h.b16 %v1010
    %v2919 = vunpack.c.l.b16 %v1011
    %v2920 = vunpack.c.l.b16 %v1012
    %v2921 = vunpack.c.h.b16 %v1012
    %v2922 = vunpack.c.l.b16 %v1013
    %v2923 = vunpack.c.l.b16 %v1014
    %v2924 = vunpack.c.h.b16 %v1014
    %v2925 = vunpack.c.l.b16 %v1015
    %v2926 = vpack.c.b16 %v2737, %v2734
    %v2927 = vpack.c.b16 %v2738, %v2735
    %v2928 = vpack.c.b16 %v2739, %v2736
    %v2929 = vpack.c.b16 %v2743, %v2740
    %v2930 = vpack.c.b16 %v2744, %v2741
    %v2931 = vpack.c.b16 %v2745, %v2742
    %v2932 = vpack.c.b16 %v2749, %v2746
    %v2933 = vpack.c.b16 %v2750, %v2747
    %v2934 = vpack.c.b16 %v2751, %v2748
    %v2935 = vpack.c.b16 %v2755, %v2752
    %v2936 = vpack.c.b16 %v2756, %v2753
    %v2937 = vpack.c.b16 %v2757, %v2754
    %v2938 = vpack.c.b16 %v2761, %v2758
    %v2939 = vpack.c.b16 %v2762, %v2759
    %v2940 = vpack.c.b16 %v2763, %v2760
    %v2941 = vpack.c.b16 %v2767, %v2764
    %v2942 = vpack.c.b16 %v2768, %v2765
    %v2943 = vpack.c.b16 %v2769, %v2766
    %v2944 = vpack.c.b16 %v2773, %v2770
    %v2945 = vpack.c.b16 %v2774, %v2771
    %v2946 = vpack.c.b16 %v2775, %v2772
    %v2947 = vpack.c.b16 %v2779, %v2776
    %v2948 = vpack.c.b16 %v2780, %v2777
    %v2949 = vpack.c.b16 %v2781, %v2778
    %v2950 = vpack.c.b16 %v2785, %v2782
    %v2951 = vpack.c.b16 %v2786, %v2783
    %v2952 = vpack.c.b16 %v2787, %v2784
    %v2953 = vpack.c.b16 %v2791, %v2788
    %v2954 = vpack.c.b16 %v2792, %v2789
    %v2955 = vpack.c.b16 %v2793, %v2790
    %v2956 = vpack.c.b16 %v2797, %v2794
    %v2957 = vpack.c.b16 %v2798, %v2795
    %v2958 = vpack.c.b16 %v2799, %v2796
    %v2959 = vpack.c.b16 %v2803, %v2800
    %v2960 = vpack.c.b16 %v2804, %v2801
    %v2961 = vpack.c.b16 %v2805, %v2802
    %v2962 = vpack.c.b16 %v2809, %v2806
    %v2963 = vpack.c.b16 %v2810, %v2807
    %v2964 = vpack.c.b16 %v2811, %v2808
    %v2965 = vpack.c.b16 %v2815, %v2812
    %v2966 = vpack.c.b16 %v2816, %v2813
    %v2967 = vpack.c.b16 %v2817, %v2814
    %v2968 = vpack.c.b16 %v2821, %v2818
    %v2969 = vpack.c.b16 %v2822, %v2819
    %v2970 = vpack.c.b16 %v2823, %v2820
    %v2971 = vpack.c.b16 %v2827, %v2824
    %v2972 = vpack.c.b16 %v2828, %v2825
    %v2973 = vpack.c.b16 %v2829, %v2826
    %v2974 = vpack.c.b16 %v2833, %v2830
    %v2975 = vpack.c.b16 %v2834, %v2831
    %v2976 = vpack.c.b16 %v2835, %v2832
    %v2977 = vpack.c.b16 %v2839, %v2836
    %v2978 = vpack.c.b16 %v2840, %v2837
    %v2979 = vpack.c.b16 %v2841, %v2838
    %v2980 = vpack.c.b16 %v2845, %v2842
    %v2981 = vpack.c.b16 %v2846, %v2843
    %v2982 = vpack.c.b16 %v2847, %v2844
    %v2983 = vpack.c.b16 %v2851, %v2848
    %v2984 = vpack.c.b16 %v2852, %v2849
    %v2985 = vpack.c.b16 %v2853, %v2850
    %v2986 = vpack.c.b16 %v2857, %v2854
    %v2987 = vpack.c.b16 %v2858, %v2855
    %v2988 = vpack.c.b16 %v2859, %v2856
    %v2989 = vpack.c.b16 %v2863, %v2860
    %v2990 = vpack.c.b16 %v2864, %v2861
    %v2991 = vpack.c.b16 %v2865, %v2862
    %v2992 = vpack.c.b16 %v2869, %v2866
    %v2993 = vpack.c.b16 %v2870, %v2867
    %v2994 = vpack.c.b16 %v2871, %v2868
    %v2995 = vpack.c.b16 %v2875, %v2872
    %v2996 = vpack.c.b16 %v2876, %v2873
    %v2997 = vpack.c.b16 %v2877, %v2874
    %v2998 = vpack.c.b16 %v2881, %v2878
    %v2999 = vpack.c.b16 %v2882, %v2879
    %v3000 = vpack.c.b16 %v2883, %v2880
    %v3001 = vpack.c.b16 %v2887, %v2884
    %v3002 = vpack.c.b16 %v2888, %v2885
    %v3003 = vpack.c.b16 %v2889, %v2886
    %v3004 = vpack.c.b16 %v2893, %v2890
    %v3005 = vpack.c.b16 %v2894, %v2891
    %v3006 = vpack.c.b16 %v2895, %v2892
    %v3007 = vpack.c.b16 %v2899, %v2896
    %v3008 = vpack.c.b16 %v2900, %v2897
    %v3009 = vpack.c.b16 %v2901, %v2898
    %v3010 = vpack.c.b16 %v2905, %v2902
    %v3011 = vpack.c.b16 %v2906, %v2903
    %v3012 = vpack.c.b16 %v2907, %v2904
    %v3013 = vpack.c.b16 %v2911, %v2908
    %v3014 = vpack.c.b16 %v2912, %v2909
    %v3015 = vpack.c.b16 %v2913, %v2910
    %v3016 = vpack.c.b16 %v2917, %v2914
    %v3017 = vpack.c.b16 %v2918, %v2915
    %v3018 = vpack.c.b16 %v2919, %v2916
    %v3019 = vpack.c.b16 %v2923, %v2920
    %v3020 = vpack.c.b16 %v2924, %v2921
    %v3021 = vpack.c.b16 %v2925, %v2922
    %3118 = vmatprep.subr.bf16.mxu0 %v2948
    %3119 = vmatpush1.bf16.msra.mxu0 %v2947
    %3120 = vmatprep.subr.bf16.mxu0 %v2945
    %3121 = vmatpush1.bf16.msra.mxu0 %v2944
    %3122 = vmatprep.subr.bf16.mxu0 %v2942
    %3123 = vmatpush1.bf16.msra.mxu0 %v2941
    %3124 = vmatprep.subr.bf16.mxu0 %v2939
    %3125 = vmatpush1.bf16.msra.mxu0 %v2938
    %3126 = vmatprep.subr.bf16.mxu0 %v2936
    %3127 = vmatpush1.bf16.msra.mxu0 %v2935
    %3128 = vmatprep.subr.bf16.mxu0 %v2933
    %3129 = vmatpush1.bf16.msra.mxu0 %v2932
    %3130 = vmatprep.subr.bf16.mxu0 %v2930
    %3131 = vmatpush1.bf16.msra.mxu0 %v2929
    %3132 = vmatprep.subr.bf16.mxu0 %v2927
    %3133 = vmatpush1.bf16.msra.mxu0 %v2926
    %3134 = vmatprep.subr.bf16.mxu0 %v2972
    %3135 = vmatpush2.bf16.msra.mxu0 %v2971
    %3136 = vmatprep.subr.bf16.mxu0 %v2969
    %3137 = vmatpush2.bf16.msra.mxu0 %v2968
    %3138 = vmatprep.subr.bf16.mxu0 %v2966
    %3139 = vmatpush2.bf16.msra.mxu0 %v2965
    %3140 = vmatprep.subr.bf16.mxu0 %v2963
    %3141 = vmatpush2.bf16.msra.mxu0 %v2962
    %3142 = vmatprep.subr.bf16.mxu0 %v2960
    %3143 = vmatpush2.bf16.msra.mxu0 %v2959
    %3144 = vmatprep.subr.bf16.mxu0 %v2957
    %3145 = vmatpush2.bf16.msra.mxu0 %v2956
    %3146 = vmatprep.subr.bf16.mxu0 %v2954
    %3147 = vmatpush2.bf16.msra.mxu0 %v2953
    %3148 = vmatprep.subr.bf16.mxu0 %v2951
    %3149 = vmatpush2.bf16.msra.mxu0 %v2950
    %3150 = vmatprep.mubr.bf16.mxu0 %v885
    %3151 = vmatmul.mubr.bf16.gmra.mxu0 %v884
    %v3152 = vpop.f32.mrf.mxu0
    %v3153 = vadd.f32 %v2516, %v3152
    %v3154 = vpop.f32.mrf.mxu0
    %v3155 = vadd.f32 %v2518, %v3154
    %v3156 = vpop.f32.mrf.mxu0
    %v3157 = vadd.f32 %v2520, %v3156
    %v3158 = vpop.f32.mrf.mxu0
    %v3159 = vadd.f32 %v2522, %v3158
    %3160 = vdwg.mxu0
    %3161 = vmatprep.subr.bf16.mxu0 %v2996
    %3162 = vmatpush1.bf16.msra.mxu0 %v2995
    %3163 = vmatprep.subr.bf16.mxu0 %v2993
    %3164 = vmatpush1.bf16.msra.mxu0 %v2992
    %3165 = vmatprep.subr.bf16.mxu0 %v2990
    %3166 = vmatpush1.bf16.msra.mxu0 %v2989
    %3167 = vmatprep.subr.bf16.mxu0 %v2987
    %3168 = vmatpush1.bf16.msra.mxu0 %v2986
    %3169 = vmatprep.subr.bf16.mxu0 %v2984
    %3170 = vmatpush1.bf16.msra.mxu0 %v2983
    %3171 = vmatprep.subr.bf16.mxu0 %v2981
    %3172 = vmatpush1.bf16.msra.mxu0 %v2980
    %3173 = vmatprep.subr.bf16.mxu0 %v2978
    %3174 = vmatpush1.bf16.msra.mxu0 %v2977
    %3175 = vmatprep.subr.bf16.mxu0 %v2975
    %3176 = vmatpush1.bf16.msra.mxu0 %v2974
    %3177 = vmatprep.subr.bf16.mxu0 %v3020
    %3178 = vmatpush2.bf16.msra.mxu0 %v3019
    %3179 = vmatprep.subr.bf16.mxu0 %v3017
    %3180 = vmatpush2.bf16.msra.mxu0 %v3016
    %3181 = vmatprep.subr.bf16.mxu0 %v3014
    %3182 = vmatpush2.bf16.msra.mxu0 %v3013
    %3183 = vmatprep.subr.bf16.mxu0 %v3011
    %3184 = vmatpush2.bf16.msra.mxu0 %v3010
    %3185 = vmatprep.subr.bf16.mxu0 %v3008
    %3186 = vmatpush2.bf16.msra.mxu0 %v3007
    %3187 = vmatprep.subr.bf16.mxu0 %v3005
    %3188 = vmatpush2.bf16.msra.mxu0 %v3004
    %3189 = vmatprep.subr.bf16.mxu0 %v3002
    %3190 = vmatpush2.bf16.msra.mxu0 %v3001
    %3191 = vmatprep.subr.bf16.mxu0 %v2999
    %3192 = vmatpush2.bf16.msra.mxu0 %v2998
    %3193 = vmatprep.mubr.bf16.mxu0 %v887
    %3194 = vmatmul.mubr.bf16.gmra.mxu0 %v886
    %v3195 = vpop.f32.mrf.mxu0
    %v3196 = vadd.f32 %v3153, %v3195
    %v3197 = vpop.f32.mrf.mxu0
    %v3198 = vadd.f32 %v3155, %v3197
    %v3199 = vpop.f32.mrf.mxu0
    %v3200 = vadd.f32 %v3157, %v3199
    %v3201 = vpop.f32.mrf.mxu0
    %v3202 = vadd.f32 %v3159, %v3201
    %3203 = vdwg.mxu0
    %3204 = vmatprep.subr.bf16.mxu0 0
    %3205 = vmatpush1.bf16.msra.mxu0 %v2949
    %3206 = vmatprep.subr.bf16.mxu0 0
    %3207 = vmatpush1.bf16.msra.mxu0 %v2946
    %3208 = vmatprep.subr.bf16.mxu0 0
    %3209 = vmatpush1.bf16.msra.mxu0 %v2943
    %3210 = vmatprep.subr.bf16.mxu0 0
    %3211 = vmatpush1.bf16.msra.mxu0 %v2940
    %3212 = vmatprep.subr.bf16.mxu0 0
    %3213 = vmatpush1.bf16.msra.mxu0 %v2937
    %3214 = vmatprep.subr.bf16.mxu0 0
    %3215 = vmatpush1.bf16.msra.mxu0 %v2934
    %3216 = vmatprep.subr.bf16.mxu0 0
    %3217 = vmatpush1.bf16.msra.mxu0 %v2931
    %3218 = vmatprep.subr.bf16.mxu0 0
    %3219 = vmatpush1.bf16.msra.mxu0 %v2928
    %3220 = vmatprep.subr.bf16.mxu0 0
    %3221 = vmatpush2.bf16.msra.mxu0 %v2973
    %3222 = vmatprep.subr.bf16.mxu0 0
    %3223 = vmatpush2.bf16.msra.mxu0 %v2970
    %3224 = vmatprep.subr.bf16.mxu0 0
    %3225 = vmatpush2.bf16.msra.mxu0 %v2967
    %3226 = vmatprep.subr.bf16.mxu0 0
    %3227 = vmatpush2.bf16.msra.mxu0 %v2964
    %3228 = vmatprep.subr.bf16.mxu0 0
    %3229 = vmatpush2.bf16.msra.mxu0 %v2961
    %3230 = vmatprep.subr.bf16.mxu0 0
    %3231 = vmatpush2.bf16.msra.mxu0 %v2958
    %3232 = vmatprep.subr.bf16.mxu0 0
    %3233 = vmatpush2.bf16.msra.mxu0 %v2955
    %3234 = vmatprep.subr.bf16.mxu0 0
    %3235 = vmatpush2.bf16.msra.mxu0 %v2952
    %3236 = vmatprep.mubr.bf16.mxu0 %v885
    %3237 = vmatmul.mubr.bf16.gmra.mxu0 %v884
    %v3238 = vpop.f32.mrf.mxu0
    %v3239 = vadd.f32 %v2600, %v3238
    %v3240 = vpop.f32.mrf.mxu0
    %v3241 = vpop.f32.mrf.mxu0
    %v3242 = vadd.f32 %v2603, %v3241
    %v3243 = vpop.f32.mrf.mxu0
    %3244 = vdwg.mxu0
    %3245 = vmatprep.subr.bf16.mxu0 0
    %3246 = vmatpush1.bf16.msra.mxu0 %v2997
    %3247 = vmatprep.subr.bf16.mxu0 0
    %3248 = vmatpush1.bf16.msra.mxu0 %v2994
    %3249 = vmatprep.subr.bf16.mxu0 0
    %3250 = vmatpush1.bf16.msra.mxu0 %v2991
    %3251 = vmatprep.subr.bf16.mxu0 0
    %3252 = vmatpush1.bf16.msra.mxu0 %v2988
    %3253 = vmatprep.subr.bf16.mxu0 0
    %3254 = vmatpush1.bf16.msra.mxu0 %v2985
    %3255 = vmatprep.subr.bf16.mxu0 0
    %3256 = vmatpush1.bf16.msra.mxu0 %v2982
    %3257 = vmatprep.subr.bf16.mxu0 0
    %3258 = vmatpush1.bf16.msra.mxu0 %v2979
    %3259 = vmatprep.subr.bf16.mxu0 0
    %3260 = vmatpush1.bf16.msra.mxu0 %v2976
    %3261 = vmatprep.subr.bf16.mxu0 0
    %3262 = vmatpush2.bf16.msra.mxu0 %v3021
    %3263 = vmatprep.subr.bf16.mxu0 0
    %3264 = vmatpush2.bf16.msra.mxu0 %v3018
    %3265 = vmatprep.subr.bf16.mxu0 0
    %3266 = vmatpush2.bf16.msra.mxu0 %v3015
    %3267 = vmatprep.subr.bf16.mxu0 0
    %3268 = vmatpush2.bf16.msra.mxu0 %v3012
    %3269 = vmatprep.subr.bf16.mxu0 0
    %3270 = vmatpush2.bf16.msra.mxu0 %v3009
    %3271 = vmatprep.subr.bf16.mxu0 0
    %3272 = vmatpush2.bf16.msra.mxu0 %v3006
    %3273 = vmatprep.subr.bf16.mxu0 0
    %3274 = vmatpush2.bf16.msra.mxu0 %v3003
    %3275 = vmatprep.subr.bf16.mxu0 0
    %3276 = vmatpush2.bf16.msra.mxu0 %v3000
    %3277 = vmatprep.mubr.bf16.mxu0 %v887
    %3278 = vmatmul.mubr.bf16.gmra.mxu0 %v886
    %v3279 = vpop.f32.mrf.mxu0
    %v3280 = vadd.f32 %v3239, %v3279
    %v3281 = vpop.f32.mrf.mxu0
    %v3282 = vpop.f32.mrf.mxu0
    %v3283 = vadd.f32 %v3242, %v3282
    %v3284 = vpop.f32.mrf.mxu0
    %3285 = vdwg.mxu0
    %v3286 = vld [vmem:[#allocation5 + $0x20] sm:$0xff]
    %v3287 = vld [vmem:[#allocation5 + $0x28] sm:$0xff]
    %v3288 = vld [vmem:[#allocation5 + $0x50] sm:$0xff]
    %v3289 = vld [vmem:[#allocation5 + $0x58] sm:$0xff]
    %v3290 = vld [vmem:[#allocation5 + $0x80] sm:$0xff]
    %v3291 = vld [vmem:[#allocation5 + $0x88] sm:$0xff]
    %v3292 = vld [vmem:[#allocation5 + $0xb0] sm:$0xff]
    %v3293 = vld [vmem:[#allocation5 + $0xb8] sm:$0xff]
    %v3294 = vld [vmem:[#allocation5 + $0xe0] sm:$0xff]
    %v3295 = vld [vmem:[#allocation5 + $0xe8] sm:$0xff]
    %v3296 = vld [vmem:[#allocation5 + $0x110] sm:$0xff]
    %v3297 = vld [vmem:[#allocation5 + $0x118] sm:$0xff]
    %v3298 = vld [vmem:[#allocation5 + $0x140] sm:$0xff]
    %v3299 = vld [vmem:[#allocation5 + $0x148] sm:$0xff]
    %v3300 = vld [vmem:[#allocation5 + $0x170] sm:$0xff]
    %v3301 = vld [vmem:[#allocation5 + $0x178] sm:$0xff]
    %v3302 = vld [vmem:[#allocation5 + $0x1a0] sm:$0xff]
    %v3303 = vld [vmem:[#allocation5 + $0x1a8] sm:$0xff]
    %v3304 = vld [vmem:[#allocation5 + $0x1d0] sm:$0xff]
    %v3305 = vld [vmem:[#allocation5 + $0x1d8] sm:$0xff]
    %v3306 = vld [vmem:[#allocation5 + $0x200] sm:$0xff]
    %v3307 = vld [vmem:[#allocation5 + $0x208] sm:$0xff]
    %v3308 = vld [vmem:[#allocation5 + $0x230] sm:$0xff]
    %v3309 = vld [vmem:[#allocation5 + $0x238] sm:$0xff]
    %v3310 = vld [vmem:[#allocation5 + $0x260] sm:$0xff]
    %v3311 = vld [vmem:[#allocation5 + $0x268] sm:$0xff]
    %v3312 = vld [vmem:[#allocation5 + $0x290] sm:$0xff]
    %v3313 = vld [vmem:[#allocation5 + $0x298] sm:$0xff]
    %v3314 = vld [vmem:[#allocation5 + $0x2c0] sm:$0xff]
    %v3315 = vld [vmem:[#allocation5 + $0x2c8] sm:$0xff]
    %v3316 = vld [vmem:[#allocation5 + $0x2f0] sm:$0xff]
    %v3317 = vld [vmem:[#allocation5 + $0x2f8] sm:$0xff]
    %v3318 = vld [vmem:[#allocation5 + $0x320] sm:$0xff]
    %v3319 = vld [vmem:[#allocation5 + $0x328] sm:$0xff]
    %v3320 = vld [vmem:[#allocation5 + $0x350] sm:$0xff]
    %v3321 = vld [vmem:[#allocation5 + $0x358] sm:$0xff]
    %v3322 = vld [vmem:[#allocation5 + $0x380] sm:$0xff]
    %v3323 = vld [vmem:[#allocation5 + $0x388] sm:$0xff]
    %v3324 = vld [vmem:[#allocation5 + $0x3b0] sm:$0xff]
    %v3325 = vld [vmem:[#allocation5 + $0x3b8] sm:$0xff]
    %v3326 = vld [vmem:[#allocation5 + $0x3e0] sm:$0xff]
    %v3327 = vld [vmem:[#allocation5 + $0x3e8] sm:$0xff]
    %v3328 = vld [vmem:[#allocation5 + $0x410] sm:$0xff]
    %v3329 = vld [vmem:[#allocation5 + $0x418] sm:$0xff]
    %v3330 = vld [vmem:[#allocation5 + $0x440] sm:$0xff]
    %v3331 = vld [vmem:[#allocation5 + $0x448] sm:$0xff]
    %v3332 = vld [vmem:[#allocation5 + $0x470] sm:$0xff]
    %v3333 = vld [vmem:[#allocation5 + $0x478] sm:$0xff]
    %v3334 = vld [vmem:[#allocation5 + $0x4a0] sm:$0xff]
    %v3335 = vld [vmem:[#allocation5 + $0x4a8] sm:$0xff]
    %v3336 = vld [vmem:[#allocation5 + $0x4d0] sm:$0xff]
    %v3337 = vld [vmem:[#allocation5 + $0x4d8] sm:$0xff]
    %v3338 = vld [vmem:[#allocation5 + $0x500] sm:$0xff]
    %v3339 = vld [vmem:[#allocation5 + $0x508] sm:$0xff]
    %v3340 = vld [vmem:[#allocation5 + $0x530] sm:$0xff]
    %v3341 = vld [vmem:[#allocation5 + $0x538] sm:$0xff]
    %v3342 = vld [vmem:[#allocation5 + $0x560] sm:$0xff]
    %v3343 = vld [vmem:[#allocation5 + $0x568] sm:$0xff]
    %v3344 = vld [vmem:[#allocation5 + $0x590] sm:$0xff]
    %v3345 = vld [vmem:[#allocation5 + $0x598] sm:$0xff]
    %v3346 = vld [vmem:[#allocation5 + $0x5c0] sm:$0xff]
    %v3347 = vld [vmem:[#allocation5 + $0x5c8] sm:$0xff]
    %v3348 = vld [vmem:[#allocation5 + $0x5f0] sm:$0xff]
    %v3349 = vld [vmem:[#allocation5 + $0x5f8] sm:$0xff]
    %v3350 = vld [vmem:[#allocation5 + $0x620] sm:$0xff]
    %v3351 = vld [vmem:[#allocation5 + $0x628] sm:$0xff]
    %v3352 = vld [vmem:[#allocation5 + $0x650] sm:$0xff]
    %v3353 = vld [vmem:[#allocation5 + $0x658] sm:$0xff]
    %v3354 = vld [vmem:[#allocation5 + $0x680] sm:$0xff]
    %v3355 = vld [vmem:[#allocation5 + $0x688] sm:$0xff]
    %v3356 = vld [vmem:[#allocation5 + $0x6b0] sm:$0xff]
    %v3357 = vld [vmem:[#allocation5 + $0x6b8] sm:$0xff]
    %v3358 = vld [vmem:[#allocation5 + $0x6e0] sm:$0xff]
    %v3359 = vld [vmem:[#allocation5 + $0x6e8] sm:$0xff]
    %v3360 = vld [vmem:[#allocation5 + $0x710] sm:$0xff]
    %v3361 = vld [vmem:[#allocation5 + $0x718] sm:$0xff]
    %v3362 = vld [vmem:[#allocation5 + $0x740] sm:$0xff]
    %v3363 = vld [vmem:[#allocation5 + $0x748] sm:$0xff]
    %v3364 = vld [vmem:[#allocation5 + $0x770] sm:$0xff]
    %v3365 = vld [vmem:[#allocation5 + $0x778] sm:$0xff]
    %v3366 = vld [vmem:[#allocation5 + $0x7a0] sm:$0xff]
    %v3367 = vld [vmem:[#allocation5 + $0x7a8] sm:$0xff]
    %v3368 = vld [vmem:[#allocation5 + $0x7d0] sm:$0xff]
    %v3369 = vld [vmem:[#allocation5 + $0x7d8] sm:$0xff]
    %v3370 = vld [vmem:[#allocation5 + $0x800] sm:$0xff]
    %v3371 = vld [vmem:[#allocation5 + $0x808] sm:$0xff]
    %v3372 = vld [vmem:[#allocation5 + $0x830] sm:$0xff]
    %v3373 = vld [vmem:[#allocation5 + $0x838] sm:$0xff]
    %v3374 = vld [vmem:[#allocation5 + $0x860] sm:$0xff]
    %v3375 = vld [vmem:[#allocation5 + $0x868] sm:$0xff]
    %v3376 = vld [vmem:[#allocation5 + $0x890] sm:$0xff]
    %v3377 = vld [vmem:[#allocation5 + $0x898] sm:$0xff]
    %v3378 = vld [vmem:[#allocation5 + $0x8c0] sm:$0xff]
    %v3379 = vld [vmem:[#allocation5 + $0x8c8] sm:$0xff]
    %v3380 = vld [vmem:[#allocation5 + $0x8f0] sm:$0xff]
    %v3381 = vld [vmem:[#allocation5 + $0x8f8] sm:$0xff]
    %v3382 = vld [vmem:[#allocation7 + $0x8] sm:$0xf]
    %v3384 = vlaneseq
    %v3385 = vshrl.u32 %v3384, 7
    %v3386 = vsub.s32 0, %v3385
    %v3387 = vrot.slane %v3382, %v3386
    %v3388 = vlaneseq
    %v3389 = vshrl.u32 %v3388, 7
    %v3390 = vsub.s32 1, %v3389
    %v3391 = vrot.slane %v3382, %v3390
    %v3392 = vlaneseq
    %v3393 = vshrl.u32 %v3392, 7
    %v3394 = vsub.s32 2, %v3393
    %v3395 = vrot.slane %v3382, %v3394
    %v3396 = vlaneseq
    %v3397 = vshrl.u32 %v3396, 7
    %v3398 = vsub.s32 3, %v3397
    %v3399 = vrot.slane %v3382, %v3398
    %v3500 = vunpack.c.l.b16 %v3286
    %v3501 = vunpack.c.h.b16 %v3286
    %v3502 = vunpack.c.l.b16 %v3287
    %v3503 = vunpack.c.h.b16 %v3287
    %v3504 = vunpack.c.l.b16 %v3288
    %v3505 = vunpack.c.h.b16 %v3288
    %v3506 = vunpack.c.l.b16 %v3289
    %v3507 = vunpack.c.h.b16 %v3289
    %v3508 = vunpack.c.l.b16 %v3290
    %v3509 = vunpack.c.h.b16 %v3290
    %v3510 = vunpack.c.l.b16 %v3291
    %v3511 = vunpack.c.h.b16 %v3291
    %v3512 = vunpack.c.l.b16 %v3292
    %v3513 = vunpack.c.h.b16 %v3292
    %v3514 = vunpack.c.l.b16 %v3293
    %v3515 = vunpack.c.h.b16 %v3293
    %v3516 = vunpack.c.l.b16 %v3294
    %v3517 = vunpack.c.h.b16 %v3294
    %v3518 = vunpack.c.l.b16 %v3295
    %v3519 = vunpack.c.h.b16 %v3295
    %v3520 = vunpack.c.l.b16 %v3296
    %v3521 = vunpack.c.h.b16 %v3296
    %v3522 = vunpack.c.l.b16 %v3297
    %v3523 = vunpack.c.h.b16 %v3297
    %v3524 = vunpack.c.l.b16 %v3298
    %v3525 = vunpack.c.h.b16 %v3298
    %v3526 = vunpack.c.l.b16 %v3299
    %v3527 = vunpack.c.h.b16 %v3299
    %v3528 = vunpack.c.l.b16 %v3300
    %v3529 = vunpack.c.h.b16 %v3300
    %v3530 = vunpack.c.l.b16 %v3301
    %v3531 = vunpack.c.h.b16 %v3301
    %v3532 = vunpack.c.l.b16 %v3302
    %v3533 = vunpack.c.h.b16 %v3302
    %v3534 = vunpack.c.l.b16 %v3303
    %v3535 = vunpack.c.h.b16 %v3303
    %v3536 = vunpack.c.l.b16 %v3304
    %v3537 = vunpack.c.h.b16 %v3304
    %v3538 = vunpack.c.l.b16 %v3305
    %v3539 = vunpack.c.h.b16 %v3305
    %v3540 = vunpack.c.l.b16 %v3306
    %v3541 = vunpack.c.h.b16 %v3306
    %v3542 = vunpack.c.l.b16 %v3307
    %v3543 = vunpack.c.h.b16 %v3307
    %v3544 = vunpack.c.l.b16 %v3308
    %v3545 = vunpack.c.h.b16 %v3308
    %v3546 = vunpack.c.l.b16 %v3309
    %v3547 = vunpack.c.h.b16 %v3309
    %v3548 = vunpack.c.l.b16 %v3310
    %v3549 = vunpack.c.h.b16 %v3310
    %v3550 = vunpack.c.l.b16 %v3311
    %v3551 = vunpack.c.h.b16 %v3311
    %v3552 = vunpack.c.l.b16 %v3312
    %v3553 = vunpack.c.h.b16 %v3312
    %v3554 = vunpack.c.l.b16 %v3313
    %v3555 = vunpack.c.h.b16 %v3313
    %v3556 = vunpack.c.l.b16 %v3314
    %v3557 = vunpack.c.h.b16 %v3314
    %v3558 = vunpack.c.l.b16 %v3315
    %v3559 = vunpack.c.h.b16 %v3315
    %v3560 = vunpack.c.l.b16 %v3316
    %v3561 = vunpack.c.h.b16 %v3316
    %v3562 = vunpack.c.l.b16 %v3317
    %v3563 = vunpack.c.h.b16 %v3317
    %v3564 = vunpack.c.l.b16 %v3318
    %v3565 = vunpack.c.h.b16 %v3318
    %v3566 = vunpack.c.l.b16 %v3319
    %v3567 = vunpack.c.h.b16 %v3319
    %v3568 = vunpack.c.l.b16 %v3320
    %v3569 = vunpack.c.h.b16 %v3320
    %v3570 = vunpack.c.l.b16 %v3321
    %v3571 = vunpack.c.h.b16 %v3321
    %v3572 = vunpack.c.l.b16 %v3322
    %v3573 = vunpack.c.h.b16 %v3322
    %v3574 = vunpack.c.l.b16 %v3323
    %v3575 = vunpack.c.h.b16 %v3323
    %v3576 = vunpack.c.l.b16 %v3324
    %v3577 = vunpack.c.h.b16 %v3324
    %v3578 = vunpack.c.l.b16 %v3325
    %v3579 = vunpack.c.h.b16 %v3325
    %v3580 = vunpack.c.l.b16 %v3326
    %v3581 = vunpack.c.h.b16 %v3326
    %v3582 = vunpack.c.l.b16 %v3327
    %v3583 = vunpack.c.h.b16 %v3327
    %v3584 = vunpack.c.l.b16 %v3328
    %v3585 = vunpack.c.h.b16 %v3328
    %v3586 = vunpack.c.l.b16 %v3329
    %v3587 = vunpack.c.h.b16 %v3329
    %v3588 = vunpack.c.l.b16 %v3330
    %v3589 = vunpack.c.h.b16 %v3330
    %v3590 = vunpack.c.l.b16 %v3331
    %v3591 = vunpack.c.h.b16 %v3331
    %v3592 = vunpack.c.l.b16 %v3332
    %v3593 = vunpack.c.h.b16 %v3332
    %v3594 = vunpack.c.l.b16 %v3333
    %v3595 = vunpack.c.h.b16 %v3333
    %v3596 = vunpack.c.l.b16 %v3334
    %v3597 = vunpack.c.h.b16 %v3334
    %v3598 = vunpack.c.l.b16 %v3335
    %v3599 = vunpack.c.h.b16 %v3335
    %v3600 = vunpack.c.l.b16 %v3336
    %v3601 = vunpack.c.h.b16 %v3336
    %v3602 = vunpack.c.l.b16 %v3337
    %v3603 = vunpack.c.h.b16 %v3337
    %v3604 = vunpack.c.l.b16 %v3338
    %v3605 = vunpack.c.h.b16 %v3338
    %v3606 = vunpack.c.l.b16 %v3339
    %v3607 = vunpack.c.h.b16 %v3339
    %v3608 = vunpack.c.l.b16 %v3340
    %v3609 = vunpack.c.h.b16 %v3340
    %v3610 = vunpack.c.l.b16 %v3341
    %v3611 = vunpack.c.h.b16 %v3341
    %v3612 = vunpack.c.l.b16 %v3342
    %v3613 = vunpack.c.h.b16 %v3342
    %v3614 = vunpack.c.l.b16 %v3343
    %v3615 = vunpack.c.h.b16 %v3343
    %v3616 = vunpack.c.l.b16 %v3344
    %v3617 = vunpack.c.h.b16 %v3344
    %v3618 = vunpack.c.l.b16 %v3345
    %v3619 = vunpack.c.h.b16 %v3345
    %v3620 = vunpack.c.l.b16 %v3346
    %v3621 = vunpack.c.h.b16 %v3346
    %v3622 = vunpack.c.l.b16 %v3347
    %v3623 = vunpack.c.h.b16 %v3347
    %v3624 = vunpack.c.l.b16 %v3348
    %v3625 = vunpack.c.h.b16 %v3348
    %v3626 = vunpack.c.l.b16 %v3349
    %v3627 = vunpack.c.h.b16 %v3349
    %v3628 = vunpack.c.l.b16 %v3350
    %v3629 = vunpack.c.h.b16 %v3350
    %v3630 = vunpack.c.l.b16 %v3351
    %v3631 = vunpack.c.h.b16 %v3351
    %v3632 = vunpack.c.l.b16 %v3352
    %v3633 = vunpack.c.h.b16 %v3352
    %v3634 = vunpack.c.l.b16 %v3353
    %v3635 = vunpack.c.h.b16 %v3353
    %v3636 = vunpack.c.l.b16 %v3354
    %v3637 = vunpack.c.h.b16 %v3354
    %v3638 = vunpack.c.l.b16 %v3355
    %v3639 = vunpack.c.h.b16 %v3355
    %v3640 = vunpack.c.l.b16 %v3356
    %v3641 = vunpack.c.h.b16 %v3356
    %v3642 = vunpack.c.l.b16 %v3357
    %v3643 = vunpack.c.h.b16 %v3357
    %v3644 = vunpack.c.l.b16 %v3358
    %v3645 = vunpack.c.h.b16 %v3358
    %v3646 = vunpack.c.l.b16 %v3359
    %v3647 = vunpack.c.h.b16 %v3359
    %v3648 = vunpack.c.l.b16 %v3360
    %v3649 = vunpack.c.h.b16 %v3360
    %v3650 = vunpack.c.l.b16 %v3361
    %v3651 = vunpack.c.h.b16 %v3361
    %v3652 = vunpack.c.l.b16 %v3362
    %v3653 = vunpack.c.h.b16 %v3362
    %v3654 = vunpack.c.l.b16 %v3363
    %v3655 = vunpack.c.h.b16 %v3363
    %v3656 = vunpack.c.l.b16 %v3364
    %v3657 = vunpack.c.h.b16 %v3364
    %v3658 = vunpack.c.l.b16 %v3365
    %v3659 = vunpack.c.h.b16 %v3365
    %v3660 = vunpack.c.l.b16 %v3366
    %v3661 = vunpack.c.h.b16 %v3366
    %v3662 = vunpack.c.l.b16 %v3367
    %v3663 = vunpack.c.h.b16 %v3367
    %v3664 = vunpack.c.l.b16 %v3368
    %v3665 = vunpack.c.h.b16 %v3368
    %v3666 = vunpack.c.l.b16 %v3369
    %v3667 = vunpack.c.h.b16 %v3369
    %v3668 = vunpack.c.l.b16 %v3370
    %v3669 = vunpack.c.h.b16 %v3370
    %v3670 = vunpack.c.l.b16 %v3371
    %v3671 = vunpack.c.h.b16 %v3371
    %v3672 = vunpack.c.l.b16 %v3372
    %v3673 = vunpack.c.h.b16 %v3372
    %v3674 = vunpack.c.l.b16 %v3373
    %v3675 = vunpack.c.h.b16 %v3373
    %v3676 = vunpack.c.l.b16 %v3374
    %v3677 = vunpack.c.h.b16 %v3374
    %v3678 = vunpack.c.l.b16 %v3375
    %v3679 = vunpack.c.h.b16 %v3375
    %v3680 = vunpack.c.l.b16 %v3376
    %v3681 = vunpack.c.h.b16 %v3376
    %v3682 = vunpack.c.l.b16 %v3377
    %v3683 = vunpack.c.h.b16 %v3377
    %v3684 = vunpack.c.l.b16 %v3378
    %v3685 = vunpack.c.h.b16 %v3378
    %v3686 = vunpack.c.l.b16 %v3379
    %v3687 = vunpack.c.h.b16 %v3379
    %v3688 = vunpack.c.l.b16 %v3380
    %v3689 = vunpack.c.h.b16 %v3380
    %v3690 = vunpack.c.l.b16 %v3381
    %v3691 = vunpack.c.h.b16 %v3381
    %v3692 = vpack.c.b16 %v3504, %v3500
    %v3693 = vpack.c.b16 %v3505, %v3501
    %v3694 = vpack.c.b16 %v3506, %v3502
    %v3695 = vpack.c.b16 %v3507, %v3503
    %v3696 = vpack.c.b16 %v3512, %v3508
    %v3697 = vpack.c.b16 %v3513, %v3509
    %v3698 = vpack.c.b16 %v3514, %v3510
    %v3699 = vpack.c.b16 %v3515, %v3511
    %v3700 = vpack.c.b16 %v3520, %v3516
    %v3701 = vpack.c.b16 %v3521, %v3517
    %v3702 = vpack.c.b16 %v3522, %v3518
    %v3703 = vpack.c.b16 %v3523, %v3519
    %v3704 = vpack.c.b16 %v3528, %v3524
    %v3705 = vpack.c.b16 %v3529, %v3525
    %v3706 = vpack.c.b16 %v3530, %v3526
    %v3707 = vpack.c.b16 %v3531, %v3527
    %v3708 = vpack.c.b16 %v3536, %v3532
    %v3709 = vpack.c.b16 %v3537, %v3533
    %v3710 = vpack.c.b16 %v3538, %v3534
    %v3711 = vpack.c.b16 %v3539, %v3535
    %v3712 = vpack.c.b16 %v3544, %v3540
    %v3713 = vpack.c.b16 %v3545, %v3541
    %v3714 = vpack.c.b16 %v3546, %v3542
    %v3715 = vpack.c.b16 %v3547, %v3543
    %v3716 = vpack.c.b16 %v3552, %v3548
    %v3717 = vpack.c.b16 %v3553, %v3549
    %v3718 = vpack.c.b16 %v3554, %v3550
    %v3719 = vpack.c.b16 %v3555, %v3551
    %v3720 = vpack.c.b16 %v3560, %v3556
    %v3721 = vpack.c.b16 %v3561, %v3557
    %v3722 = vpack.c.b16 %v3562, %v3558
    %v3723 = vpack.c.b16 %v3563, %v3559
    %v3724 = vpack.c.b16 %v3568, %v3564
    %v3725 = vpack.c.b16 %v3569, %v3565
    %v3726 = vpack.c.b16 %v3570, %v3566
    %v3727 = vpack.c.b16 %v3571, %v3567
    %v3728 = vpack.c.b16 %v3576, %v3572
    %v3729 = vpack.c.b16 %v3577, %v3573
    %v3730 = vpack.c.b16 %v3578, %v3574
    %v3731 = vpack.c.b16 %v3579, %v3575
    %v3732 = vpack.c.b16 %v3584, %v3580
    %v3733 = vpack.c.b16 %v3585, %v3581
    %v3734 = vpack.c.b16 %v3586, %v3582
    %v3735 = vpack.c.b16 %v3587, %v3583
    %v3736 = vpack.c.b16 %v3592, %v3588
    %v3737 = vpack.c.b16 %v3593, %v3589
    %v3738 = vpack.c.b16 %v3594, %v3590
    %v3739 = vpack.c.b16 %v3595, %v3591
    %v3740 = vpack.c.b16 %v3600, %v3596
    %v3741 = vpack.c.b16 %v3601, %v3597
    %v3742 = vpack.c.b16 %v3602, %v3598
    %v3743 = vpack.c.b16 %v3603, %v3599
    %v3744 = vpack.c.b16 %v3608, %v3604
    %v3745 = vpack.c.b16 %v3609, %v3605
    %v3746 = vpack.c.b16 %v3610, %v3606
    %v3747 = vpack.c.b16 %v3611, %v3607
    %v3748 = vpack.c.b16 %v3616, %v3612
    %v3749 = vpack.c.b16 %v3617, %v3613
    %v3750 = vpack.c.b16 %v3618, %v3614
    %v3751 = vpack.c.b16 %v3619, %v3615
    %v3752 = vpack.c.b16 %v3624, %v3620
    %v3753 = vpack.c.b16 %v3625, %v3621
    %v3754 = vpack.c.b16 %v3626, %v3622
    %v3755 = vpack.c.b16 %v3627, %v3623
    %v3756 = vpack.c.b16 %v3632, %v3628
    %v3757 = vpack.c.b16 %v3633, %v3629
    %v3758 = vpack.c.b16 %v3634, %v3630
    %v3759 = vpack.c.b16 %v3635, %v3631
    %v3760 = vpack.c.b16 %v3640, %v3636
    %v3761 = vpack.c.b16 %v3641, %v3637
    %v3762 = vpack.c.b16 %v3642, %v3638
    %v3763 = vpack.c.b16 %v3643, %v3639
    %v3764 = vpack.c.b16 %v3648, %v3644
    %v3765 = vpack.c.b16 %v3649, %v3645
    %v3766 = vpack.c.b16 %v3650, %v3646
    %v3767 = vpack.c.b16 %v3651, %v3647
    %v3768 = vpack.c.b16 %v3656, %v3652
    %v3769 = vpack.c.b16 %v3657, %v3653
    %v3770 = vpack.c.b16 %v3658, %v3654
    %v3771 = vpack.c.b16 %v3659, %v3655
    %v3772 = vpack.c.b16 %v3664, %v3660
    %v3773 = vpack.c.b16 %v3665, %v3661
    %v3774 = vpack.c.b16 %v3666, %v3662
    %v3775 = vpack.c.b16 %v3667, %v3663
    %v3776 = vpack.c.b16 %v3672, %v3668
    %v3777 = vpack.c.b16 %v3673, %v3669
    %v3778 = vpack.c.b16 %v3674, %v3670
    %v3779 = vpack.c.b16 %v3675, %v3671
    %v3780 = vpack.c.b16 %v3680, %v3676
    %v3781 = vpack.c.b16 %v3681, %v3677
    %v3782 = vpack.c.b16 %v3682, %v3678
    %v3783 = vpack.c.b16 %v3683, %v3679
    %v3784 = vpack.c.b16 %v3688, %v3684
    %v3785 = vpack.c.b16 %v3689, %v3685
    %v3786 = vpack.c.b16 %v3690, %v3686
    %v3787 = vpack.c.b16 %v3691, %v3687
    %3884 = vmatprep.subr.bf16.mxu0 %v3721
    %3885 = vmatpush1.bf16.msra.mxu0 %v3720
    %3886 = vmatprep.subr.bf16.mxu0 %v3717
    %3887 = vmatpush1.bf16.msra.mxu0 %v3716
    %3888 = vmatprep.subr.bf16.mxu0 %v3713
    %3889 = vmatpush1.bf16.msra.mxu0 %v3712
    %3890 = vmatprep.subr.bf16.mxu0 %v3709
    %3891 = vmatpush1.bf16.msra.mxu0 %v3708
    %3892 = vmatprep.subr.bf16.mxu0 %v3705
    %3893 = vmatpush1.bf16.msra.mxu0 %v3704
    %3894 = vmatprep.subr.bf16.mxu0 %v3701
    %3895 = vmatpush1.bf16.msra.mxu0 %v3700
    %3896 = vmatprep.subr.bf16.mxu0 %v3697
    %3897 = vmatpush1.bf16.msra.mxu0 %v3696
    %3898 = vmatprep.subr.bf16.mxu0 %v3693
    %3899 = vmatpush1.bf16.msra.mxu0 %v3692
    %3900 = vmatprep.subr.bf16.mxu0 %v3753
    %3901 = vmatpush2.bf16.msra.mxu0 %v3752
    %3902 = vmatprep.subr.bf16.mxu0 %v3749
    %3903 = vmatpush2.bf16.msra.mxu0 %v3748
    %3904 = vmatprep.subr.bf16.mxu0 %v3745
    %3905 = vmatpush2.bf16.msra.mxu0 %v3744
    %3906 = vmatprep.subr.bf16.mxu0 %v3741
    %3907 = vmatpush2.bf16.msra.mxu0 %v3740
    %3908 = vmatprep.subr.bf16.mxu0 %v3737
    %3909 = vmatpush2.bf16.msra.mxu0 %v3736
    %3910 = vmatprep.subr.bf16.mxu0 %v3733
    %3911 = vmatpush2.bf16.msra.mxu0 %v3732
    %3912 = vmatprep.subr.bf16.mxu0 %v3729
    %3913 = vmatpush2.bf16.msra.mxu0 %v3728
    %3914 = vmatprep.subr.bf16.mxu0 %v3725
    %3915 = vmatpush2.bf16.msra.mxu0 %v3724
    %3916 = vmatprep.mubr.bf16.mxu0 %v219
    %3917 = vmatmul.mubr.bf16.gmra.mxu0 %v218
    %v3918 = vpop.f32.mrf.mxu0
    %v3919 = vadd.f32 %v3387, %v3918
    %v3920 = vpop.f32.mrf.mxu0
    %v3921 = vadd.f32 %v3391, %v3920
    %v3922 = vpop.f32.mrf.mxu0
    %v3923 = vadd.f32 %v3387, %v3922
    %v3924 = vpop.f32.mrf.mxu0
    %v3925 = vadd.f32 %v3391, %v3924
    %3926 = vdwg.mxu0
    %3927 = vmatprep.subr.bf16.mxu0 %v3785
    %3928 = vmatpush1.bf16.msra.mxu0 %v3784
    %3929 = vmatprep.subr.bf16.mxu0 %v3781
    %3930 = vmatpush1.bf16.msra.mxu0 %v3780
    %3931 = vmatprep.subr.bf16.mxu0 %v3777
    %3932 = vmatpush1.bf16.msra.mxu0 %v3776
    %3933 = vmatprep.subr.bf16.mxu0 %v3773
    %3934 = vmatpush1.bf16.msra.mxu0 %v3772
    %3935 = vmatprep.subr.bf16.mxu0 %v3769
    %3936 = vmatpush1.bf16.msra.mxu0 %v3768
    %3937 = vmatprep.subr.bf16.mxu0 %v3765
    %3938 = vmatpush1.bf16.msra.mxu0 %v3764
    %3939 = vmatprep.subr.bf16.mxu0 %v3761
    %3940 = vmatpush1.bf16.msra.mxu0 %v3760
    %3941 = vmatprep.subr.bf16.mxu0 %v3757
    %3942 = vmatpush1.bf16.msra.mxu0 %v3756
    %3943 = vmatprep.subr.bf16.mxu0 0
    %3944 = vmatpush2.bf16.msra.mxu0 0
    %3945 = vmatprep.subr.bf16.mxu0 0
    %3946 = vmatpush2.bf16.msra.mxu0 0
    %3947 = vmatprep.subr.bf16.mxu0 0
    %3948 = vmatpush2.bf16.msra.mxu0 0
    %3949 = vmatprep.subr.bf16.mxu0 0
    %3950 = vmatpush2.bf16.msra.mxu0 0
    %3951 = vmatprep.subr.bf16.mxu0 0
    %3952 = vmatpush2.bf16.msra.mxu0 0
    %3953 = vmatprep.subr.bf16.mxu0 0
    %3954 = vmatpush2.bf16.msra.mxu0 0
    %3955 = vmatprep.subr.bf16.mxu0 0
    %3956 = vmatpush2.bf16.msra.mxu0 0
    %3957 = vmatprep.subr.bf16.mxu0 0
    %3958 = vmatpush2.bf16.msra.mxu0 0
    %3959 = vmatprep.mubr.bf16.mxu0 0
    %3960 = vmatmul.mubr.bf16.gmra.mxu0 %v220
    %v3961 = vpop.f32.mrf.mxu0
    %v3962 = vadd.f32 %v3919, %v3961
    %v3963 = vpop.f32.mrf.mxu0
    %v3964 = vadd.f32 %v3921, %v3963
    %v3965 = vpop.f32.mrf.mxu0
    %v3966 = vadd.f32 %v3923, %v3965
    %v3967 = vpop.f32.mrf.mxu0
    %v3968 = vadd.f32 %v3925, %v3967
    %3969 = vdwg.mxu0
    %3970 = vmatprep.subr.bf16.mxu0 %v3723
    %3971 = vmatpush1.bf16.msra.mxu0 %v3722
    %3972 = vmatprep.subr.bf16.mxu0 %v3719
    %3973 = vmatpush1.bf16.msra.mxu0 %v3718
    %3974 = vmatprep.subr.bf16.mxu0 %v3715
    %3975 = vmatpush1.bf16.msra.mxu0 %v3714
    %3976 = vmatprep.subr.bf16.mxu0 %v3711
    %3977 = vmatpush1.bf16.msra.mxu0 %v3710
    %3978 = vmatprep.subr.bf16.mxu0 %v3707
    %3979 = vmatpush1.bf16.msra.mxu0 %v3706
    %3980 = vmatprep.subr.bf16.mxu0 %v3703
    %3981 = vmatpush1.bf16.msra.mxu0 %v3702
    %3982 = vmatprep.subr.bf16.mxu0 %v3699
    %3983 = vmatpush1.bf16.msra.mxu0 %v3698
    %3984 = vmatprep.subr.bf16.mxu0 %v3695
    %3985 = vmatpush1.bf16.msra.mxu0 %v3694
    %3986 = vmatprep.subr.bf16.mxu0 %v3755
    %3987 = vmatpush2.bf16.msra.mxu0 %v3754
    %3988 = vmatprep.subr.bf16.mxu0 %v3751
    %3989 = vmatpush2.bf16.msra.mxu0 %v3750
    %3990 = vmatprep.subr.bf16.mxu0 %v3747
    %3991 = vmatpush2.bf16.msra.mxu0 %v3746
    %3992 = vmatprep.subr.bf16.mxu0 %v3743
    %3993 = vmatpush2.bf16.msra.mxu0 %v3742
    %3994 = vmatprep.subr.bf16.mxu0 %v3739
    %3995 = vmatpush2.bf16.msra.mxu0 %v3738
    %3996 = vmatprep.subr.bf16.mxu0 %v3735
    %3997 = vmatpush2.bf16.msra.mxu0 %v3734
    %3998 = vmatprep.subr.bf16.mxu0 %v3731
    %3999 = vmatpush2.bf16.msra.mxu0 %v3730
    %4000 = vmatprep.subr.bf16.mxu0 %v3727
    %4001 = vmatpush2.bf16.msra.mxu0 %v3726
    %4002 = vmatprep.mubr.bf16.mxu0 %v219
    %4003 = vmatmul.mubr.bf16.gmra.mxu0 %v218
    %v4004 = vpop.f32.mrf.mxu0
    %v4005 = vadd.f32 %v3395, %v4004
    %v4006 = vpop.f32.mrf.mxu0
    %v4007 = vadd.f32 %v3399, %v4006
    %v4008 = vpop.f32.mrf.mxu0
    %v4009 = vadd.f32 %v3395, %v4008
    %v4010 = vpop.f32.mrf.mxu0
    %v4011 = vadd.f32 %v3399, %v4010
    %4012 = vdwg.mxu0
    %4013 = vmatprep.subr.bf16.mxu0 %v3787
    %4014 = vmatpush1.bf16.msra.mxu0 %v3786
    %4015 = vmatprep.subr.bf16.mxu0 %v3783
    %4016 = vmatpush1.bf16.msra.mxu0 %v3782
    %4017 = vmatprep.subr.bf16.mxu0 %v3779
    %4018 = vmatpush1.bf16.msra.mxu0 %v3778
    %4019 = vmatprep.subr.bf16.mxu0 %v3775
    %4020 = vmatpush1.bf16.msra.mxu0 %v3774
    %4021 = vmatprep.subr.bf16.mxu0 %v3771
    %4022 = vmatpush1.bf16.msra.mxu0 %v3770
    %4023 = vmatprep.subr.bf16.mxu0 %v3767
    %4024 = vmatpush1.bf16.msra.mxu0 %v3766
    %4025 = vmatprep.subr.bf16.mxu0 %v3763
    %4026 = vmatpush1.bf16.msra.mxu0 %v3762
    %4027 = vmatprep.subr.bf16.mxu0 %v3759
    %4028 = vmatpush1.bf16.msra.mxu0 %v3758
    %4029 = vmatprep.subr.bf16.mxu0 0
    %4030 = vmatpush2.bf16.msra.mxu0 0
    %4031 = vmatprep.subr.bf16.mxu0 0
    %4032 = vmatpush2.bf16.msra.mxu0 0
    %4033 = vmatprep.subr.bf16.mxu0 0
    %4034 = vmatpush2.bf16.msra.mxu0 0
    %4035 = vmatprep.subr.bf16.mxu0 0
    %4036 = vmatpush2.bf16.msra.mxu0 0
    %4037 = vmatprep.subr.bf16.mxu0 0
    %4038 = vmatpush2.bf16.msra.mxu0 0
    %4039 = vmatprep.subr.bf16.mxu0 0
    %4040 = vmatpush2.bf16.msra.mxu0 0
    %4041 = vmatprep.subr.bf16.mxu0 0
    %4042 = vmatpush2.bf16.msra.mxu0 0
    %4043 = vmatprep.subr.bf16.mxu0 0
    %4044 = vmatpush2.bf16.msra.mxu0 0
    %4045 = vmatprep.mubr.bf16.mxu0 0
    %4046 = vmatmul.mubr.bf16.gmra.mxu0 %v220
    %v4047 = vpop.f32.mrf.mxu0
    %v4048 = vadd.f32 %v4005, %v4047
    %v4049 = vpop.f32.mrf.mxu0
    %v4050 = vadd.f32 %v4007, %v4049
    %v4051 = vpop.f32.mrf.mxu0
    %v4052 = vadd.f32 %v4009, %v4051
    %v4053 = vpop.f32.mrf.mxu0
    %v4054 = vadd.f32 %v4011, %v4053
    %4055 = vdwg.mxu0
    %v4056 = vmax.f32 %v3962, 0.0
    %v4057 = vmax.f32 %v3964, 0.0
    %v4058 = vmax.f32 %v4048, 0.0
    %v4059 = vmax.f32 %v4050, 0.0
    %v4060 = vmax.f32 %v3966, 0.0
    %v4061 = vmax.f32 %v3968, 0.0
    %v4062 = vmax.f32 %v4052, 0.0
    %v4063 = vmax.f32 %v4054, 0.0
    %v4064 = vpack.c.bf16 %v4060, %v4056
    %v4065 = vpack.c.bf16 %v4061, %v4057
    %v4066 = vpack.c.bf16 %v4062, %v4058
    %v4067 = vpack.c.bf16 %v4063, %v4059
    %v4068 = vld [vmem:[#allocation8 + $0x600] sm:$0xff]
    %v4069 = vld [vmem:[#allocation8 + $0x608] sm:$0xf]
    %v4070 = vld [vmem:[#allocation8 + $0x60c] sm:$0xff]
    %v4071 = vld [vmem:[#allocation8 + $0x614] sm:$0xf]
    %v4072 = vld [vmem:[#allocation8 + $0x618] sm:$0xff]
    %v4073 = vld [vmem:[#allocation8 + $0x620] sm:$0xf]
    %v4074 = vld [vmem:[#allocation8 + $0x624] sm:$0xff]
    %v4075 = vld [vmem:[#allocation8 + $0x62c] sm:$0xf]
    %v4076 = vld [vmem:[#allocation8 + $0x630] sm:$0xff]
    %v4077 = vld [vmem:[#allocation8 + $0x638] sm:$0xf]
    %v4078 = vld [vmem:[#allocation8 + $0x63c] sm:$0xff]
    %v4079 = vld [vmem:[#allocation8 + $0x644] sm:$0xf]
    %v4080 = vld [vmem:[#allocation8 + $0x648] sm:$0xff]
    %v4081 = vld [vmem:[#allocation8 + $0x650] sm:$0xf]
    %v4082 = vld [vmem:[#allocation8 + $0x654] sm:$0xff]
    %v4083 = vld [vmem:[#allocation8 + $0x65c] sm:$0xf]
    %v4084 = vld [vmem:[#allocation8 + $0x660] sm:$0xff]
    %v4085 = vld [vmem:[#allocation8 + $0x668] sm:$0xf]
    %v4086 = vld [vmem:[#allocation8 + $0x66c] sm:$0xff]
    %v4087 = vld [vmem:[#allocation8 + $0x674] sm:$0xf]
    %v4088 = vld [vmem:[#allocation8 + $0x678] sm:$0xff]
    %v4089 = vld [vmem:[#allocation8 + $0x680] sm:$0xf]
    %v4090 = vld [vmem:[#allocation8 + $0x684] sm:$0xff]
    %v4091 = vld [vmem:[#allocation8 + $0x68c] sm:$0xf]
    %v4092 = vld [vmem:[#allocation8 + $0x690] sm:$0xff]
    %v4093 = vld [vmem:[#allocation8 + $0x698] sm:$0xf]
    %v4094 = vld [vmem:[#allocation8 + $0x69c] sm:$0xff]
    %v4095 = vld [vmem:[#allocation8 + $0x6a4] sm:$0xf]
    %v4096 = vld [vmem:[#allocation8 + $0x6a8] sm:$0xff]
    %v4097 = vld [vmem:[#allocation8 + $0x6b0] sm:$0xf]
    %v4098 = vld [vmem:[#allocation8 + $0x6b4] sm:$0xff]
    %v4099 = vld [vmem:[#allocation8 + $0x6bc] sm:$0xf]
    %v4100 = vld [vmem:[#allocation8 + $0x6c0] sm:$0xff]
    %v4101 = vld [vmem:[#allocation8 + $0x6c8] sm:$0xf]
    %v4102 = vld [vmem:[#allocation8 + $0x6cc] sm:$0xff]
    %v4103 = vld [vmem:[#allocation8 + $0x6d4] sm:$0xf]
    %v4104 = vld [vmem:[#allocation8 + $0x6d8] sm:$0xff]
    %v4105 = vld [vmem:[#allocation8 + $0x6e0] sm:$0xf]
    %v4106 = vld [vmem:[#allocation8 + $0x6e4] sm:$0xff]
    %v4107 = vld [vmem:[#allocation8 + $0x6ec] sm:$0xf]
    %v4108 = vld [vmem:[#allocation8 + $0x6f0] sm:$0xff]
    %v4109 = vld [vmem:[#allocation8 + $0x6f8] sm:$0xf]
    %v4110 = vld [vmem:[#allocation8 + $0x6fc] sm:$0xff]
    %v4111 = vld [vmem:[#allocation8 + $0x704] sm:$0xf]
    %v4112 = vld [vmem:[#allocation8 + $0x708] sm:$0xff]
    %v4113 = vld [vmem:[#allocation8 + $0x710] sm:$0xf]
    %v4114 = vld [vmem:[#allocation8 + $0x714] sm:$0xff]
    %v4115 = vld [vmem:[#allocation8 + $0x71c] sm:$0xf]
    %v4116 = vld [vmem:[#allocation8 + $0x720] sm:$0xff]
    %v4117 = vld [vmem:[#allocation8 + $0x728] sm:$0xf]
    %v4118 = vld [vmem:[#allocation8 + $0x72c] sm:$0xff]
    %v4119 = vld [vmem:[#allocation8 + $0x734] sm:$0xf]
    %v4120 = vld [vmem:[#allocation8 + $0x738] sm:$0xff]
    %v4121 = vld [vmem:[#allocation8 + $0x740] sm:$0xf]
    %v4122 = vld [vmem:[#allocation8 + $0x744] sm:$0xff]
    %v4123 = vld [vmem:[#allocation8 + $0x74c] sm:$0xf]
    %v4124 = vld [vmem:[#allocation8 + $0x750] sm:$0xff]
    %v4125 = vld [vmem:[#allocation8 + $0x758] sm:$0xf]
    %v4126 = vld [vmem:[#allocation8 + $0x75c] sm:$0xff]
    %v4127 = vld [vmem:[#allocation8 + $0x764] sm:$0xf]
    %v4128 = vld [vmem:[#allocation8 + $0x768] sm:$0xff]
    %v4129 = vld [vmem:[#allocation8 + $0x770] sm:$0xf]
    %v4130 = vld [vmem:[#allocation8 + $0x774] sm:$0xff]
    %v4131 = vld [vmem:[#allocation8 + $0x77c] sm:$0xf]
    %v4132 = vld [vmem:[#allocation8 + $0x780] sm:$0xff]
    %v4133 = vld [vmem:[#allocation8 + $0x788] sm:$0xf]
    %v4134 = vld [vmem:[#allocation8 + $0x78c] sm:$0xff]
    %v4135 = vld [vmem:[#allocation8 + $0x794] sm:$0xf]
    %v4136 = vld [vmem:[#allocation8 + $0x798] sm:$0xff]
    %v4137 = vld [vmem:[#allocation8 + $0x7a0] sm:$0xf]
    %v4138 = vld [vmem:[#allocation8 + $0x7a4] sm:$0xff]
    %v4139 = vld [vmem:[#allocation8 + $0x7ac] sm:$0xf]
    %v4140 = vld [vmem:[#allocation8 + $0x7b0] sm:$0xff]
    %v4141 = vld [vmem:[#allocation8 + $0x7b8] sm:$0xf]
    %v4142 = vld [vmem:[#allocation8 + $0x7bc] sm:$0xff]
    %v4143 = vld [vmem:[#allocation8 + $0x7c4] sm:$0xf]
    %v4144 = vld [vmem:[#allocation8 + $0x7c8] sm:$0xff]
    %v4145 = vld [vmem:[#allocation8 + $0x7d0] sm:$0xf]
    %v4146 = vld [vmem:[#allocation8 + $0x7d4] sm:$0xff]
    %v4147 = vld [vmem:[#allocation8 + $0x7dc] sm:$0xf]
    %v4148 = vld [vmem:[#allocation8 + $0x7e0] sm:$0xff]
    %v4149 = vld [vmem:[#allocation8 + $0x7e8] sm:$0xf]
    %v4150 = vld [vmem:[#allocation8 + $0x7ec] sm:$0xff]
    %v4151 = vld [vmem:[#allocation8 + $0x7f4] sm:$0xf]
    %v4152 = vld [vmem:[#allocation8 + $0x7f8] sm:$0xff]
    %v4153 = vld [vmem:[#allocation8 + $0x800] sm:$0xf]
    %v4154 = vld [vmem:[#allocation8 + $0x804] sm:$0xff]
    %v4155 = vld [vmem:[#allocation8 + $0x80c] sm:$0xf]
    %v4156 = vld [vmem:[#allocation8 + $0x810] sm:$0xff]
    %v4157 = vld [vmem:[#allocation8 + $0x818] sm:$0xf]
    %v4158 = vld [vmem:[#allocation8 + $0x81c] sm:$0xff]
    %v4159 = vld [vmem:[#allocation8 + $0x824] sm:$0xf]
    %v4160 = vld [vmem:[#allocation8 + $0x828] sm:$0xff]
    %v4161 = vld [vmem:[#allocation8 + $0x830] sm:$0xf]
    %v4162 = vld [vmem:[#allocation8 + $0x834] sm:$0xff]
    %v4163 = vld [vmem:[#allocation8 + $0x83c] sm:$0xf]
    %v4164 = vld [vmem:[#allocation8 + $0x840] sm:$0xff]
    %v4165 = vld [vmem:[#allocation8 + $0x848] sm:$0xf]
    %v4166 = vld [vmem:[#allocation8 + $0x84c] sm:$0xff]
    %v4167 = vld [vmem:[#allocation8 + $0x854] sm:$0xf]
    %v4168 = vld [vmem:[#allocation8 + $0x858] sm:$0xff]
    %v4169 = vld [vmem:[#allocation8 + $0x860] sm:$0xf]
    %v4170 = vld [vmem:[#allocation8 + $0x864] sm:$0xff]
    %v4171 = vld [vmem:[#allocation8 + $0x86c] sm:$0xf]
    %v4172 = vld [vmem:[#allocation8 + $0x870] sm:$0xff]
    %v4173 = vld [vmem:[#allocation8 + $0x878] sm:$0xf]
    %v4174 = vld [vmem:[#allocation8 + $0x87c] sm:$0xff]
    %v4175 = vld [vmem:[#allocation8 + $0x884] sm:$0xf]
    %v4176 = vld [vmem:[#allocation8 + $0x888] sm:$0xff]
    %v4177 = vld [vmem:[#allocation8 + $0x890] sm:$0xf]
    %v4178 = vld [vmem:[#allocation8 + $0x894] sm:$0xff]
    %v4179 = vld [vmem:[#allocation8 + $0x89c] sm:$0xf]
    %v4180 = vld [vmem:[#allocation8 + $0x8a0] sm:$0xff]
    %v4181 = vld [vmem:[#allocation8 + $0x8a8] sm:$0xf]
    %v4182 = vld [vmem:[#allocation8 + $0x8ac] sm:$0xff]
    %v4183 = vld [vmem:[#allocation8 + $0x8b4] sm:$0xf]
    %v4184 = vld [vmem:[#allocation8 + $0x8b8] sm:$0xff]
    %v4185 = vld [vmem:[#allocation8 + $0x8c0] sm:$0xf]
    %v4186 = vld [vmem:[#allocation8 + $0x8c4] sm:$0xff]
    %v4187 = vld [vmem:[#allocation8 + $0x8cc] sm:$0xf]
    %v4188 = vld [vmem:[#allocation8 + $0x8d0] sm:$0xff]
    %v4189 = vld [vmem:[#allocation8 + $0x8d8] sm:$0xf]
    %v4190 = vld [vmem:[#allocation8 + $0x8dc] sm:$0xff]
    %v4191 = vld [vmem:[#allocation8 + $0x8e4] sm:$0xf]
    %v4192 = vld [vmem:[#allocation8 + $0x8e8] sm:$0xff]
    %v4193 = vld [vmem:[#allocation8 + $0x8f0] sm:$0xf]
    %v4194 = vld [vmem:[#allocation8 + $0x8f4] sm:$0xff]
    %v4195 = vld [vmem:[#allocation8 + $0x8fc] sm:$0xf]
    %v4324 = vunpack.c.l.b16 %v4068
    %v4325 = vunpack.c.h.b16 %v4068
    %v4326 = vunpack.c.l.b16 %v4069
    %v4327 = vunpack.c.l.b16 %v4070
    %v4328 = vunpack.c.h.b16 %v4070
    %v4329 = vunpack.c.l.b16 %v4071
    %v4330 = vunpack.c.l.b16 %v4072
    %v4331 = vunpack.c.h.b16 %v4072
    %v4332 = vunpack.c.l.b16 %v4073
    %v4333 = vunpack.c.l.b16 %v4074
    %v4334 = vunpack.c.h.b16 %v4074
    %v4335 = vunpack.c.l.b16 %v4075
    %v4336 = vunpack.c.l.b16 %v4076
    %v4337 = vunpack.c.h.b16 %v4076
    %v4338 = vunpack.c.l.b16 %v4077
    %v4339 = vunpack.c.l.b16 %v4078
    %v4340 = vunpack.c.h.b16 %v4078
    %v4341 = vunpack.c.l.b16 %v4079
    %v4342 = vunpack.c.l.b16 %v4080
    %v4343 = vunpack.c.h.b16 %v4080
    %v4344 = vunpack.c.l.b16 %v4081
    %v4345 = vunpack.c.l.b16 %v4082
    %v4346 = vunpack.c.h.b16 %v4082
    %v4347 = vunpack.c.l.b16 %v4083
    %v4348 = vunpack.c.l.b16 %v4084
    %v4349 = vunpack.c.h.b16 %v4084
    %v4350 = vunpack.c.l.b16 %v4085
    %v4351 = vunpack.c.l.b16 %v4086
    %v4352 = vunpack.c.h.b16 %v4086
    %v4353 = vunpack.c.l.b16 %v4087
    %v4354 = vunpack.c.l.b16 %v4088
    %v4355 = vunpack.c.h.b16 %v4088
    %v4356 = vunpack.c.l.b16 %v4089
    %v4357 = vunpack.c.l.b16 %v4090
    %v4358 = vunpack.c.h.b16 %v4090
    %v4359 = vunpack.c.l.b16 %v4091
    %v4360 = vunpack.c.l.b16 %v4092
    %v4361 = vunpack.c.h.b16 %v4092
    %v4362 = vunpack.c.l.b16 %v4093
    %v4363 = vunpack.c.l.b16 %v4094
    %v4364 = vunpack.c.h.b16 %v4094
    %v4365 = vunpack.c.l.b16 %v4095
    %v4366 = vunpack.c.l.b16 %v4096
    %v4367 = vunpack.c.h.b16 %v4096
    %v4368 = vunpack.c.l.b16 %v4097
    %v4369 = vunpack.c.l.b16 %v4098
    %v4370 = vunpack.c.h.b16 %v4098
    %v4371 = vunpack.c.l.b16 %v4099
    %v4372 = vunpack.c.l.b16 %v4100
    %v4373 = vunpack.c.h.b16 %v4100
    %v4374 = vunpack.c.l.b16 %v4101
    %v4375 = vunpack.c.l.b16 %v4102
    %v4376 = vunpack.c.h.b16 %v4102
    %v4377 = vunpack.c.l.b16 %v4103
    %v4378 = vunpack.c.l.b16 %v4104
    %v4379 = vunpack.c.h.b16 %v4104
    %v4380 = vunpack.c.l.b16 %v4105
    %v4381 = vunpack.c.l.b16 %v4106
    %v4382 = vunpack.c.h.b16 %v4106
    %v4383 = vunpack.c.l.b16 %v4107
    %v4384 = vunpack.c.l.b16 %v4108
    %v4385 = vunpack.c.h.b16 %v4108
    %v4386 = vunpack.c.l.b16 %v4109
    %v4387 = vunpack.c.l.b16 %v4110
    %v4388 = vunpack.c.h.b16 %v4110
    %v4389 = vunpack.c.l.b16 %v4111
    %v4390 = vunpack.c.l.b16 %v4112
    %v4391 = vunpack.c.h.b16 %v4112
    %v4392 = vunpack.c.l.b16 %v4113
    %v4393 = vunpack.c.l.b16 %v4114
    %v4394 = vunpack.c.h.b16 %v4114
    %v4395 = vunpack.c.l.b16 %v4115
    %v4396 = vunpack.c.l.b16 %v4116
    %v4397 = vunpack.c.h.b16 %v4116
    %v4398 = vunpack.c.l.b16 %v4117
    %v4399 = vunpack.c.l.b16 %v4118
    %v4400 = vunpack.c.h.b16 %v4118
    %v4401 = vunpack.c.l.b16 %v4119
    %v4402 = vunpack.c.l.b16 %v4120
    %v4403 = vunpack.c.h.b16 %v4120
    %v4404 = vunpack.c.l.b16 %v4121
    %v4405 = vunpack.c.l.b16 %v4122
    %v4406 = vunpack.c.h.b16 %v4122
    %v4407 = vunpack.c.l.b16 %v4123
    %v4408 = vunpack.c.l.b16 %v4124
    %v4409 = vunpack.c.h.b16 %v4124
    %v4410 = vunpack.c.l.b16 %v4125
    %v4411 = vunpack.c.l.b16 %v4126
    %v4412 = vunpack.c.h.b16 %v4126
    %v4413 = vunpack.c.l.b16 %v4127
    %v4414 = vunpack.c.l.b16 %v4128
    %v4415 = vunpack.c.h.b16 %v4128
    %v4416 = vunpack.c.l.b16 %v4129
    %v4417 = vunpack.c.l.b16 %v4130
    %v4418 = vunpack.c.h.b16 %v4130
    %v4419 = vunpack.c.l.b16 %v4131
    %v4420 = vunpack.c.l.b16 %v4132
    %v4421 = vunpack.c.h.b16 %v4132
    %v4422 = vunpack.c.l.b16 %v4133
    %v4423 = vunpack.c.l.b16 %v4134
    %v4424 = vunpack.c.h.b16 %v4134
    %v4425 = vunpack.c.l.b16 %v4135
    %v4426 = vunpack.c.l.b16 %v4136
    %v4427 = vunpack.c.h.b16 %v4136
    %v4428 = vunpack.c.l.b16 %v4137
    %v4429 = vunpack.c.l.b16 %v4138
    %v4430 = vunpack.c.h.b16 %v4138
    %v4431 = vunpack.c.l.b16 %v4139
    %v4432 = vunpack.c.l.b16 %v4140
    %v4433 = vunpack.c.h.b16 %v4140
    %v4434 = vunpack.c.l.b16 %v4141
    %v4435 = vunpack.c.l.b16 %v4142
    %v4436 = vunpack.c.h.b16 %v4142
    %v4437 = vunpack.c.l.b16 %v4143
    %v4438 = vunpack.c.l.b16 %v4144
    %v4439 = vunpack.c.h.b16 %v4144
    %v4440 = vunpack.c.l.b16 %v4145
    %v4441 = vunpack.c.l.b16 %v4146
    %v4442 = vunpack.c.h.b16 %v4146
    %v4443 = vunpack.c.l.b16 %v4147
    %v4444 = vunpack.c.l.b16 %v4148
    %v4445 = vunpack.c.h.b16 %v4148
    %v4446 = vunpack.c.l.b16 %v4149
    %v4447 = vunpack.c.l.b16 %v4150
    %v4448 = vunpack.c.h.b16 %v4150
    %v4449 = vunpack.c.l.b16 %v4151
    %v4450 = vunpack.c.l.b16 %v4152
    %v4451 = vunpack.c.h.b16 %v4152
    %v4452 = vunpack.c.l.b16 %v4153
    %v4453 = vunpack.c.l.b16 %v4154
    %v4454 = vunpack.c.h.b16 %v4154
    %v4455 = vunpack.c.l.b16 %v4155
    %v4456 = vunpack.c.l.b16 %v4156
    %v4457 = vunpack.c.h.b16 %v4156
    %v4458 = vunpack.c.l.b16 %v4157
    %v4459 = vunpack.c.l.b16 %v4158
    %v4460 = vunpack.c.h.b16 %v4158
    %v4461 = vunpack.c.l.b16 %v4159
    %v4462 = vunpack.c.l.b16 %v4160
    %v4463 = vunpack.c.h.b16 %v4160
    %v4464 = vunpack.c.l.b16 %v4161
    %v4465 = vunpack.c.l.b16 %v4162
    %v4466 = vunpack.c.h.b16 %v4162
    %v4467 = vunpack.c.l.b16 %v4163
    %v4468 = vunpack.c.l.b16 %v4164
    %v4469 = vunpack.c.h.b16 %v4164
    %v4470 = vunpack.c.l.b16 %v4165
    %v4471 = vunpack.c.l.b16 %v4166
    %v4472 = vunpack.c.h.b16 %v4166
    %v4473 = vunpack.c.l.b16 %v4167
    %v4474 = vunpack.c.l.b16 %v4168
    %v4475 = vunpack.c.h.b16 %v4168
    %v4476 = vunpack.c.l.b16 %v4169
    %v4477 = vunpack.c.l.b16 %v4170
    %v4478 = vunpack.c.h.b16 %v4170
    %v4479 = vunpack.c.l.b16 %v4171
    %v4480 = vunpack.c.l.b16 %v4172
    %v4481 = vunpack.c.h.b16 %v4172
    %v4482 = vunpack.c.l.b16 %v4173
    %v4483 = vunpack.c.l.b16 %v4174
    %v4484 = vunpack.c.h.b16 %v4174
    %v4485 = vunpack.c.l.b16 %v4175
    %v4486 = vunpack.c.l.b16 %v4176
    %v4487 = vunpack.c.h.b16 %v4176
    %v4488 = vunpack.c.l.b16 %v4177
    %v4489 = vunpack.c.l.b16 %v4178
    %v4490 = vunpack.c.h.b16 %v4178
    %v4491 = vunpack.c.l.b16 %v4179
    %v4492 = vunpack.c.l.b16 %v4180
    %v4493 = vunpack.c.h.b16 %v4180
    %v4494 = vunpack.c.l.b16 %v4181
    %v4495 = vunpack.c.l.b16 %v4182
    %v4496 = vunpack.c.h.b16 %v4182
    %v4497 = vunpack.c.l.b16 %v4183
    %v4498 = vunpack.c.l.b16 %v4184
    %v4499 = vunpack.c.h.b16 %v4184
    %v4500 = vunpack.c.l.b16 %v4185
    %v4501 = vunpack.c.l.b16 %v4186
    %v4502 = vunpack.c.h.b16 %v4186
    %v4503 = vunpack.c.l.b16 %v4187
    %v4504 = vunpack.c.l.b16 %v4188
    %v4505 = vunpack.c.h.b16 %v4188
    %v4506 = vunpack.c.l.b16 %v4189
    %v4507 = vunpack.c.l.b16 %v4190
    %v4508 = vunpack.c.h.b16 %v4190
    %v4509 = vunpack.c.l.b16 %v4191
    %v4510 = vunpack.c.l.b16 %v4192
    %v4511 = vunpack.c.h.b16 %v4192
    %v4512 = vunpack.c.l.b16 %v4193
    %v4513 = vunpack.c.l.b16 %v4194
    %v4514 = vunpack.c.h.b16 %v4194
    %v4515 = vunpack.c.l.b16 %v4195
    %v4516 = vpack.c.b16 %v4327, %v4324
    %v4517 = vpack.c.b16 %v4328, %v4325
    %v4518 = vpack.c.b16 %v4329, %v4326
    %v4519 = vpack.c.b16 %v4333, %v4330
    %v4520 = vpack.c.b16 %v4334, %v4331
    %v4521 = vpack.c.b16 %v4335, %v4332
    %v4522 = vpack.c.b16 %v4339, %v4336
    %v4523 = vpack.c.b16 %v4340, %v4337
    %v4524 = vpack.c.b16 %v4341, %v4338
    %v4525 = vpack.c.b16 %v4345, %v4342
    %v4526 = vpack.c.b16 %v4346, %v4343
    %v4527 = vpack.c.b16 %v4347, %v4344
    %v4528 = vpack.c.b16 %v4351, %v4348
    %v4529 = vpack.c.b16 %v4352, %v4349
    %v4530 = vpack.c.b16 %v4353, %v4350
    %v4531 = vpack.c.b16 %v4357, %v4354
    %v4532 = vpack.c.b16 %v4358, %v4355
    %v4533 = vpack.c.b16 %v4359, %v4356
    %v4534 = vpack.c.b16 %v4363, %v4360
    %v4535 = vpack.c.b16 %v4364, %v4361
    %v4536 = vpack.c.b16 %v4365, %v4362
    %v4537 = vpack.c.b16 %v4369, %v4366
    %v4538 = vpack.c.b16 %v4370, %v4367
    %v4539 = vpack.c.b16 %v4371, %v4368
    %v4540 = vpack.c.b16 %v4375, %v4372
    %v4541 = vpack.c.b16 %v4376, %v4373
    %v4542 = vpack.c.b16 %v4377, %v4374
    %v4543 = vpack.c.b16 %v4381, %v4378
    %v4544 = vpack.c.b16 %v4382, %v4379
    %v4545 = vpack.c.b16 %v4383, %v4380
    %v4546 = vpack.c.b16 %v4387, %v4384
    %v4547 = vpack.c.b16 %v4388, %v4385
    %v4548 = vpack.c.b16 %v4389, %v4386
    %v4549 = vpack.c.b16 %v4393, %v4390
    %v4550 = vpack.c.b16 %v4394, %v4391
    %v4551 = vpack.c.b16 %v4395, %v4392
    %v4552 = vpack.c.b16 %v4399, %v4396
    %v4553 = vpack.c.b16 %v4400, %v4397
    %v4554 = vpack.c.b16 %v4401, %v4398
    %v4555 = vpack.c.b16 %v4405, %v4402
    %v4556 = vpack.c.b16 %v4406, %v4403
    %v4557 = vpack.c.b16 %v4407, %v4404
    %v4558 = vpack.c.b16 %v4411, %v4408
    %v4559 = vpack.c.b16 %v4412, %v4409
    %v4560 = vpack.c.b16 %v4413, %v4410
    %v4561 = vpack.c.b16 %v4417, %v4414
    %v4562 = vpack.c.b16 %v4418, %v4415
    %v4563 = vpack.c.b16 %v4419, %v4416
    %v4564 = vpack.c.b16 %v4423, %v4420
    %v4565 = vpack.c.b16 %v4424, %v4421
    %v4566 = vpack.c.b16 %v4425, %v4422
    %v4567 = vpack.c.b16 %v4429, %v4426
    %v4568 = vpack.c.b16 %v4430, %v4427
    %v4569 = vpack.c.b16 %v4431, %v4428
    %v4570 = vpack.c.b16 %v4435, %v4432
    %v4571 = vpack.c.b16 %v4436, %v4433
    %v4572 = vpack.c.b16 %v4437, %v4434
    %v4573 = vpack.c.b16 %v4441, %v4438
    %v4574 = vpack.c.b16 %v4442, %v4439
    %v4575 = vpack.c.b16 %v4443, %v4440
    %v4576 = vpack.c.b16 %v4447, %v4444
    %v4577 = vpack.c.b16 %v4448, %v4445
    %v4578 = vpack.c.b16 %v4449, %v4446
    %v4579 = vpack.c.b16 %v4453, %v4450
    %v4580 = vpack.c.b16 %v4454, %v4451
    %v4581 = vpack.c.b16 %v4455, %v4452
    %v4582 = vpack.c.b16 %v4459, %v4456
    %v4583 = vpack.c.b16 %v4460, %v4457
    %v4584 = vpack.c.b16 %v4461, %v4458
    %v4585 = vpack.c.b16 %v4465, %v4462
    %v4586 = vpack.c.b16 %v4466, %v4463
    %v4587 = vpack.c.b16 %v4467, %v4464
    %v4588 = vpack.c.b16 %v4471, %v4468
    %v4589 = vpack.c.b16 %v4472, %v4469
    %v4590 = vpack.c.b16 %v4473, %v4470
    %v4591 = vpack.c.b16 %v4477, %v4474
    %v4592 = vpack.c.b16 %v4478, %v4475
    %v4593 = vpack.c.b16 %v4479, %v4476
    %v4594 = vpack.c.b16 %v4483, %v4480
    %v4595 = vpack.c.b16 %v4484, %v4481
    %v4596 = vpack.c.b16 %v4485, %v4482
    %v4597 = vpack.c.b16 %v4489, %v4486
    %v4598 = vpack.c.b16 %v4490, %v4487
    %v4599 = vpack.c.b16 %v4491, %v4488
    %v4600 = vpack.c.b16 %v4495, %v4492
    %v4601 = vpack.c.b16 %v4496, %v4493
    %v4602 = vpack.c.b16 %v4497, %v4494
    %v4603 = vpack.c.b16 %v4501, %v4498
    %v4604 = vpack.c.b16 %v4502, %v4499
    %v4605 = vpack.c.b16 %v4503, %v4500
    %v4606 = vpack.c.b16 %v4507, %v4504
    %v4607 = vpack.c.b16 %v4508, %v4505
    %v4608 = vpack.c.b16 %v4509, %v4506
    %v4609 = vpack.c.b16 %v4513, %v4510
    %v4610 = vpack.c.b16 %v4514, %v4511
    %v4611 = vpack.c.b16 %v4515, %v4512
    %4708 = vmatprep.subr.bf16.mxu0 %v4538
    %4709 = vmatpush1.bf16.msra.mxu0 %v4537
    %4710 = vmatprep.subr.bf16.mxu0 %v4535
    %4711 = vmatpush1.bf16.msra.mxu0 %v4534
    %4712 = vmatprep.subr.bf16.mxu0 %v4532
    %4713 = vmatpush1.bf16.msra.mxu0 %v4531
    %4714 = vmatprep.subr.bf16.mxu0 %v4529
    %4715 = vmatpush1.bf16.msra.mxu0 %v4528
    %4716 = vmatprep.subr.bf16.mxu0 %v4526
    %4717 = vmatpush1.bf16.msra.mxu0 %v4525
    %4718 = vmatprep.subr.bf16.mxu0 %v4523
    %4719 = vmatpush1.bf16.msra.mxu0 %v4522
    %4720 = vmatprep.subr.bf16.mxu0 %v4520
    %4721 = vmatpush1.bf16.msra.mxu0 %v4519
    %4722 = vmatprep.subr.bf16.mxu0 %v4517
    %4723 = vmatpush1.bf16.msra.mxu0 %v4516
    %4724 = vmatprep.subr.bf16.mxu0 %v4562
    %4725 = vmatpush2.bf16.msra.mxu0 %v4561
    %4726 = vmatprep.subr.bf16.mxu0 %v4559
    %4727 = vmatpush2.bf16.msra.mxu0 %v4558
    %4728 = vmatprep.subr.bf16.mxu0 %v4556
    %4729 = vmatpush2.bf16.msra.mxu0 %v4555
    %4730 = vmatprep.subr.bf16.mxu0 %v4553
    %4731 = vmatpush2.bf16.msra.mxu0 %v4552
    %4732 = vmatprep.subr.bf16.mxu0 %v4550
    %4733 = vmatpush2.bf16.msra.mxu0 %v4549
    %4734 = vmatprep.subr.bf16.mxu0 %v4547
    %4735 = vmatpush2.bf16.msra.mxu0 %v4546
    %4736 = vmatprep.subr.bf16.mxu0 %v4544
    %4737 = vmatpush2.bf16.msra.mxu0 %v4543
    %4738 = vmatprep.subr.bf16.mxu0 %v4541
    %4739 = vmatpush2.bf16.msra.mxu0 %v4540
    %4740 = vmatprep.mubr.bf16.mxu0 %v4065
    %4741 = vmatmul.mubr.bf16.gmra.mxu0 %v4064
    %v4742 = vpop.f32.mrf.mxu0
    %v4743 = vadd.f32 0.0, %v4742
    %v4744 = vpop.f32.mrf.mxu0
    %v4745 = vadd.f32 0.0, %v4744
    %v4746 = vpop.f32.mrf.mxu0
    %v4747 = vadd.f32 0.0, %v4746
    %v4748 = vpop.f32.mrf.mxu0
    %v4749 = vadd.f32 0.0, %v4748
    %4750 = vdwg.mxu0
    %4751 = vmatprep.subr.bf16.mxu0 %v4586
    %4752 = vmatpush1.bf16.msra.mxu0 %v4585
    %4753 = vmatprep.subr.bf16.mxu0 %v4583
    %4754 = vmatpush1.bf16.msra.mxu0 %v4582
    %4755 = vmatprep.subr.bf16.mxu0 %v4580
    %4756 = vmatpush1.bf16.msra.mxu0 %v4579
    %4757 = vmatprep.subr.bf16.mxu0 %v4577
    %4758 = vmatpush1.bf16.msra.mxu0 %v4576
    %4759 = vmatprep.subr.bf16.mxu0 %v4574
    %4760 = vmatpush1.bf16.msra.mxu0 %v4573
    %4761 = vmatprep.subr.bf16.mxu0 %v4571
    %4762 = vmatpush1.bf16.msra.mxu0 %v4570
    %4763 = vmatprep.subr.bf16.mxu0 %v4568
    %4764 = vmatpush1.bf16.msra.mxu0 %v4567
    %4765 = vmatprep.subr.bf16.mxu0 %v4565
    %4766 = vmatpush1.bf16.msra.mxu0 %v4564
    %4767 = vmatprep.subr.bf16.mxu0 %v4610
    %4768 = vmatpush2.bf16.msra.mxu0 %v4609
    %4769 = vmatprep.subr.bf16.mxu0 %v4607
    %4770 = vmatpush2.bf16.msra.mxu0 %v4606
    %4771 = vmatprep.subr.bf16.mxu0 %v4604
    %4772 = vmatpush2.bf16.msra.mxu0 %v4603
    %4773 = vmatprep.subr.bf16.mxu0 %v4601
    %4774 = vmatpush2.bf16.msra.mxu0 %v4600
    %4775 = vmatprep.subr.bf16.mxu0 %v4598
    %4776 = vmatpush2.bf16.msra.mxu0 %v4597
    %4777 = vmatprep.subr.bf16.mxu0 %v4595
    %4778 = vmatpush2.bf16.msra.mxu0 %v4594
    %4779 = vmatprep.subr.bf16.mxu0 %v4592
    %4780 = vmatpush2.bf16.msra.mxu0 %v4591
    %4781 = vmatprep.subr.bf16.mxu0 %v4589
    %4782 = vmatpush2.bf16.msra.mxu0 %v4588
    %4783 = vmatprep.mubr.bf16.mxu0 %v4067
    %4784 = vmatmul.mubr.bf16.gmra.mxu0 %v4066
    %v4785 = vpop.f32.mrf.mxu0
    %v4786 = vadd.f32 %v4743, %v4785
    %v4787 = vpop.f32.mrf.mxu0
    %v4788 = vadd.f32 %v4745, %v4787
    %v4789 = vpop.f32.mrf.mxu0
    %v4790 = vadd.f32 %v4747, %v4789
    %v4791 = vpop.f32.mrf.mxu0
    %v4792 = vadd.f32 %v4749, %v4791
    %4793 = vdwg.mxu0
    %4794 = vmatprep.subr.bf16.mxu0 0
    %4795 = vmatpush1.bf16.msra.mxu0 %v4539
    %4796 = vmatprep.subr.bf16.mxu0 0
    %4797 = vmatpush1.bf16.msra.mxu0 %v4536
    %4798 = vmatprep.subr.bf16.mxu0 0
    %4799 = vmatpush1.bf16.msra.mxu0 %v4533
    %4800 = vmatprep.subr.bf16.mxu0 0
    %4801 = vmatpush1.bf16.msra.mxu0 %v4530
    %4802 = vmatprep.subr.bf16.mxu0 0
    %4803 = vmatpush1.bf16.msra.mxu0 %v4527
    %4804 = vmatprep.subr.bf16.mxu0 0
    %4805 = vmatpush1.bf16.msra.mxu0 %v4524
    %4806 = vmatprep.subr.bf16.mxu0 0
    %4807 = vmatpush1.bf16.msra.mxu0 %v4521
    %4808 = vmatprep.subr.bf16.mxu0 0
    %4809 = vmatpush1.bf16.msra.mxu0 %v4518
    %4810 = vmatprep.subr.bf16.mxu0 0
    %4811 = vmatpush2.bf16.msra.mxu0 %v4563
    %4812 = vmatprep.subr.bf16.mxu0 0
    %4813 = vmatpush2.bf16.msra.mxu0 %v4560
    %4814 = vmatprep.subr.bf16.mxu0 0
    %4815 = vmatpush2.bf16.msra.mxu0 %v4557
    %4816 = vmatprep.subr.bf16.mxu0 0
    %4817 = vmatpush2.bf16.msra.mxu0 %v4554
    %4818 = vmatprep.subr.bf16.mxu0 0
    %4819 = vmatpush2.bf16.msra.mxu0 %v4551
    %4820 = vmatprep.subr.bf16.mxu0 0
    %4821 = vmatpush2.bf16.msra.mxu0 %v4548
    %4822 = vmatprep.subr.bf16.mxu0 0
    %4823 = vmatpush2.bf16.msra.mxu0 %v4545
    %4824 = vmatprep.subr.bf16.mxu0 0
    %4825 = vmatpush2.bf16.msra.mxu0 %v4542
    %4826 = vmatprep.mubr.bf16.mxu0 %v4065
    %4827 = vmatmul.mubr.bf16.gmra.mxu0 %v4064
    %v4828 = vpop.f32.mrf.mxu0
    %v4829 = vadd.f32 0.0, %v4828
    %v4830 = vpop.f32.mrf.mxu0
    %v4831 = vpop.f32.mrf.mxu0
    %v4832 = vadd.f32 0.0, %v4831
    %v4833 = vpop.f32.mrf.mxu0
    %4834 = vdwg.mxu0
    %4835 = vmatprep.subr.bf16.mxu0 0
    %4836 = vmatpush1.bf16.msra.mxu0 %v4587
    %4837 = vmatprep.subr.bf16.mxu0 0
    %4838 = vmatpush1.bf16.msra.mxu0 %v4584
    %4839 = vmatprep.subr.bf16.mxu0 0
    %4840 = vmatpush1.bf16.msra.mxu0 %v4581
    %4841 = vmatprep.subr.bf16.mxu0 0
    %4842 = vmatpush1.bf16.msra.mxu0 %v4578
    %4843 = vmatprep.subr.bf16.mxu0 0
    %4844 = vmatpush1.bf16.msra.mxu0 %v4575
    %4845 = vmatprep.subr.bf16.mxu0 0
    %4846 = vmatpush1.bf16.msra.mxu0 %v4572
    %4847 = vmatprep.subr.bf16.mxu0 0
    %4848 = vmatpush1.bf16.msra.mxu0 %v4569
    %4849 = vmatprep.subr.bf16.mxu0 0
    %4850 = vmatpush1.bf16.msra.mxu0 %v4566
    %4851 = vmatprep.subr.bf16.mxu0 0
    %4852 = vmatpush2.bf16.msra.mxu0 %v4611
    %4853 = vmatprep.subr.bf16.mxu0 0
    %4854 = vmatpush2.bf16.msra.mxu0 %v4608
    %4855 = vmatprep.subr.bf16.mxu0 0
    %4856 = vmatpush2.bf16.msra.mxu0 %v4605
    %4857 = vmatprep.subr.bf16.mxu0 0
    %4858 = vmatpush2.bf16.msra.mxu0 %v4602
    %4859 = vmatprep.subr.bf16.mxu0 0
    %4860 = vmatpush2.bf16.msra.mxu0 %v4599
    %4861 = vmatprep.subr.bf16.mxu0 0
    %4862 = vmatpush2.bf16.msra.mxu0 %v4596
    %4863 = vmatprep.subr.bf16.mxu0 0
    %4864 = vmatpush2.bf16.msra.mxu0 %v4593
    %4865 = vmatprep.subr.bf16.mxu0 0
    %4866 = vmatpush2.bf16.msra.mxu0 %v4590
    %4867 = vmatprep.mubr.bf16.mxu0 %v4067
    %4868 = vmatmul.mubr.bf16.gmra.mxu0 %v4066
    %v4869 = vpop.f32.mrf.mxu0
    %v4870 = vadd.f32 %v4829, %v4869
    %v4871 = vpop.f32.mrf.mxu0
    %v4872 = vpop.f32.mrf.mxu0
    %v4873 = vadd.f32 %v4832, %v4872
    %v4874 = vpop.f32.mrf.mxu0
    %4875 = vdwg.mxu0
    %v4876 = vadd.f32 %v3196, %v4786
    %v4877 = vadd.f32 %v3198, %v4788
    %v4878 = vadd.f32 %v3280, %v4870
    %v4879 = vadd.f32 %v3200, %v4790
    %v4880 = vadd.f32 %v3202, %v4792
    %v4881 = vadd.f32 %v3283, %v4873
    %v4882 = vld [vmem:[#allocation10] sm:$0x7]
    %v4884 = vlaneseq
    %v4885 = vshrl.u32 %v4884, 7
    %v4886 = vsub.s32 0, %v4885
    %v4887 = vrot.slane %v4882, %v4886
    %v4888 = vlaneseq
    %v4889 = vshrl.u32 %v4888, 7
    %v4890 = vsub.s32 1, %v4889
    %v4891 = vrot.slane %v4882, %v4890
    %v4892 = vlaneseq
    %v4893 = vshrl.u32 %v4892, 7
    %v4894 = vsub.s32 2, %v4893
    %v4895 = vrot.slane %v4882, %v4894
    %v4899 = vadd.f32 %v4876, %v4887
    %v4900 = vadd.f32 %v4877, %v4891
    %v4901 = vadd.f32 %v4878, %v4895
    %v4902 = vadd.f32 %v4879, %v4887
    %v4903 = vadd.f32 %v4880, %v4891
    %v4904 = vadd.f32 %v4881, %v4895
    %4905 = vst [vmem:[#allocation11] sm:$0xff] %v4899
    %4906 = vst [vmem:[#allocation11 + $0x8] sm:$0xff] %v4900
    %4907 = vst [vmem:[#allocation11 + $0x10] sm:$0xff] %v4901
    %4908 = vst [vmem:[#allocation11 + $0x18] sm:$0xff] %v4902
    %4909 = vst [vmem:[#allocation11 + $0x20] sm:$0xff] %v4903
    %4910 = vst [vmem:[#allocation11 + $0x28] sm:$0xff] %v4904
    // Predicated region
    $region42: #{tpu_custom_call.1} parent=1 // pred_check
      _
    $region43: #{tpu_custom_call.1} parent=1 // pred_check_branch
      %4912 = sbr.rel (0) target = $region45
    $region44: #{tpu_custom_call.1} parent=1 // pred_region
      %s4914 = ssub.s32 768, 768
      %4915 = vsyncadd [#allocation4], %s4914
      %s4916 = sshll.u32 [#allocation11], 4
      %s4917 = int_to_ptr.vmem [resolvable:$true] %s4916
      %4922 = dma.vmem_to_hbm [thread:$0]  %s4917, 768, %s5, [#allocation4], 384, 384, 24
    $region45: #{tpu_custom_call.1} parent=1 // pred_fallthru
      _
    // Predicated region
    $region46: #{tpu_custom_call.1} parent=1 // pred_check
      _
    $region47: #{tpu_custom_call.1} parent=1 // pred_check_branch
      %4924 = sbr.rel (0) target = $region49
    $region48: #{tpu_custom_call.1} parent=1 // pred_region
      %4925 = dma.done [#allocation4], 768
    $region49: #{tpu_custom_call.1} parent=1 // pred_fallthru
      _
    %4926 = vsyncpa [#allocation3], 1
    %4927 = vsyncpa [#allocation6], 1
    %4928 = vsyncpa [#allocation9], 1
    %4929 = vsyncpa [#allocation4], 1

</llo_original>
